<compile_context>
chip_gen: v7x
topology: tpu7x:2x2x1
jax: 0.10.0
libtpu: 0.0.40
codegen_flags: <defaults>
</compile_context>

<pallas_src>
import functools

import jax
import jax.numpy as jnp
from jax import lax
from jax.experimental import pallas as pl
from jax.experimental.pallas import tpu as pltpu

F32 = jnp.float32
BF16 = jnp.bfloat16
EDGE_BLOCK = 8            # per-layer row block in the hoisted edge-attention matrix


def _round_up(x, m):
    return ((x + m - 1) // m) * m


# ------------------------------ shared math ---------------------------------
# The exact same math runs inside the Pallas kernel (on values loaded from the
# refs) and in the pure-JAX reference, so the correctness check is tight.

def _build_masks(src_row, dst_row, dst_col, n_pad, e_pad):
    """0/1 gather/scatter masks (bf16) built from int32 index vectors."""
    node_iota_ne = lax.broadcasted_iota(jnp.int32, (n_pad, e_pad), 0)
    node_iota_en = lax.broadcasted_iota(jnp.int32, (e_pad, n_pad), 1)
    as_mask = lambda eq: jnp.where(eq, 1.0, 0.0).astype(BF16)
    src_ne = as_mask(node_iota_ne == src_row)     # [NP, E]: n == src[e]  (gather)
    dst_ne = as_mask(node_iota_ne == dst_row)     # [NP, E]: n == dst[e]  (gather)
    dst_en = as_mask(node_iota_en == dst_col)     # [E, NP]: n == dst[e]  (seg-sum)
    return src_ne, dst_ne, dst_en


def _dot(a, b):
    """MXU matmul: bf16 operands, f32 accumulation."""
    return jnp.dot(a.astype(BF16), b.astype(BF16), preferred_element_type=F32)


def _net_forward_math(cfg, src_row, dst_row, dst_col, x_t,
                      t_row, ef_t, time_w, time_b, wf_t, wt_t, edge_b,
                      a_edge_all_t, *layer_flat):
    n_pad, e_pad = cfg["n_pad"], cfg["e_pad"]
    src_ne, dst_ne, dst_en = _build_masks(src_row, dst_row, dst_col, n_pad, e_pad)

    # --- TimeEncoder + edge_mlp + hoisted edge-attention projection ---------
    # TimeEncoder Linear(1, hidden) is an outer product -> VPU broadcast + cos.
    t_emb_t = jnp.cos(time_w * t_row + time_b)                 # [hidden, E] f32
    edge_msg_t = _dot(wf_t, ef_t) + _dot(wt_t, t_emb_t) + edge_b   # [hidden, E]
    edge_att_t = _dot(a_edge_all_t, edge_msg_t)                # [L*8, E]  f32

    h_t = x_t                                                   # [din, NP]
    idx = 0
    for l, (heads, ch) in enumerate(cfg["layers"]):
        wg_t, bg, ws_t, bs, a_src_t, a_dst_t, gat_b = layer_flat[idx:idx + 7]
        idx += 7

        # BN(eval, folded) + skip / GAT node projections, node axis lane-dense.
        xw_t = _dot(wg_t, h_t) + bg                             # [hc, NP]
        skip_t = _dot(ws_t, h_t) + bs                           # [hc, NP]

        # Gather source-node features per edge (mask matmul on the MXU).
        x_src_t = _dot(xw_t, src_ne)                            # [hc, E]

        # Attention logits: heads on sublanes, edges on lanes.
        node_dst_t = _dot(a_dst_t, xw_t)                        # [h, NP]
        logits = (_dot(a_src_t, x_src_t)
                  + _dot(node_dst_t, dst_ne)
                  + edge_att_t[EDGE_BLOCK * l:EDGE_BLOCK * l + heads, :])  # [h, E]
        logits = jnp.where(logits >= 0.0, logits, 0.2 * logits)  # LeakyReLU(0.2)

        # Segment softmax over incoming edges of each destination node.
        logits = logits - jnp.max(logits, axis=1, keepdims=True)  # per-head shift
        e = jnp.exp(logits)                                     # [h, E]  f32
        denom = _dot(e, dst_en)                                 # [h, NP]
        inv_denom = jnp.where(denom > 0.0, 1.0 / denom, 0.0)    # exact, tiny
        alpha = e * _dot(inv_denom, dst_ne)                     # [h, E] normalized

        # Head->channel expansion as a VPU lane-broadcast (no MXU rep matmul),
        # then one segment-sum matmul aggregates all heads at once.
        weighted = jnp.concatenate(
            [x_src_t[hd * ch:(hd + 1) * ch, :] * alpha[hd:hd + 1, :]
             for hd in range(heads)], axis=0)                   # [hc, E] f32
        agg = _dot(weighted, dst_en)                            # [hc, NP]

        h_t = jnp.maximum(agg + gat_b + skip_t, 0.0)            # ReLU, f32
    return h_t                                                  # [hc_last, NP]


# -------------------------------- kernel ------------------------------------

def _make_kernel(cfg, n_inputs):
    def kernel(*refs):
        vals = [r[...] for r in refs[:n_inputs]]
        refs[n_inputs][...] = _net_forward_math(cfg, *vals)
    return kernel


# ------------------------------- parameters ---------------------------------

def _pad_rows(a, rows):
    return jnp.pad(a, ((0, rows - a.shape[0]), (0, 0)))


def _att_rows(att, c_pad):
    """att [h, c_true] -> [h, h*c_pad]: row hd holds att[hd] at its channel block."""
    h, c_true = att.shape
    out = jnp.zeros((h, h * c_pad), F32)
    for hd in range(h):
        out = out.at[hd, hd * c_pad:hd * c_pad + c_true].set(att[hd])
    return out


def init_params(key, in_feat, hidden, heads, edge_feat_dim, layer_num,
                ch_pad_last=128):
    """Builds kernel operands (transposed / BN-folded / padded / bf16)."""
    ks = iter(jax.random.split(key, 64))
    nrm = lambda *s: 0.1 * jax.random.normal(next(ks), s, F32)
    eps = 1e-5

    layer_cfg = [
        (in_feat, heads, hidden, hidden),           # (din, heads, c_true, c_pad)
        (hidden * heads, heads, hidden, hidden),
        (hidden * heads, 1, 2, ch_pad_last),
    ][:layer_num]

    # TimeEncoder: Linear(1, hidden) -> cos.  edge_mlp: Linear(EF + hidden, hidden).
    time_w = nrm(1, hidden)
    edge_w = nrm(edge_feat_dim + hidden, hidden)
    params = {
        "time_w_col": time_w.T,                                  # [hidden, 1] f32
        "time_b_col": jnp.zeros((hidden, 1), F32),
        "wf_t": edge_w[:edge_feat_dim].T.astype(BF16),           # [hidden, EF]
        "wt_t": edge_w[edge_feat_dim:].T.astype(BF16),           # [hidden, hidden]
        "edge_b_col": jnp.zeros((hidden, 1), F32),
        "layers": [],
    }

    a_edge_rows = []
    for (din, h, c_true, c_pad) in layer_cfg:
        assert h <= EDGE_BLOCK
        hc_true, hc_pad = h * c_true, h * c_pad
        # Raw module parameters (fresh BatchNorm1d, eval mode).
        bn_gamma, bn_beta = jnp.ones((din,), F32), jnp.zeros((din,), F32)
        bn_mean, bn_var = jnp.zeros((din,), F32), jnp.ones((din,), F32)
        skip_w, skip_b = nrm(din, hc_true), jnp.zeros((hc_true,), F32)
        gat_w = nrm(din, hc_true)                 # GAT node projection (no bias)
        gat_we = nrm(hidden, hc_true)             # GAT edge projection (no bias)
        att_src, att_dst, att_edge = nrm(h, c_true), nrm(h, c_true), nrm(h, c_true)
        gat_bias = jnp.zeros((hc_true,), F32)

        # Eval BN is a per-feature affine -> fold into both projections.
        scale = bn_gamma * lax.rsqrt(bn_var + eps)               # [din]
        shift = bn_beta - bn_mean * scale                        # [din]

        def fold_t(w, b):
            w_t = (w * scale[:, None]).T                         # [hc_true, din]
            b_c = (b + shift @ w)[:, None]                       # [hc_true, 1]
            return _pad_rows(w_t, hc_pad).astype(BF16), _pad_rows(b_c, hc_pad)

        wg_t, bg = fold_t(gat_w, jnp.zeros((hc_true,), F32))
        ws_t, bs = fold_t(skip_w, skip_b)

        params["layers"].append({
            "wg_t": wg_t, "bg": bg, "ws_t": ws_t, "bs": bs,
            "a_src_t": _att_rows(att_src, c_pad).astype(BF16),   # [h, hc_pad]
            "a_dst_t": _att_rows(att_dst, c_pad).astype(BF16),   # [h, hc_pad]
            "gat_bias": _pad_rows(gat_bias[:, None], hc_pad),    # [hc_pad, 1]
        })
        # Edge embedding only feeds attention -> fold gat_we with att_edge,
        # padded to an 8-row block so per-layer slices stay sublane-aligned.
        eff = jnp.stack([gat_we[:, hd * c_true:(hd + 1) * c_true] @ att_edge[hd]
                         for hd in range(h)], axis=0)            # [h, hidden]
        a_edge_rows.append(_pad_rows(eff, EDGE_BLOCK))
    params["a_edge_all_t"] = jnp.concatenate(a_edge_rows, axis=0).astype(BF16)
    return params


# --------------------------------- forward ----------------------------------

def _prepare_inputs(params, x, edge_index, edge_attr):
    n = x.shape[0]
    e = edge_index.shape[1]
    n_pad = _round_up(n, 128)      # nodes live on the lane axis -> pad to 128
    e_pad = _round_up(e, 128)      # edges live on the lane axis -> pad to 128

    src = jnp.pad(edge_index[0].astype(jnp.int32), (0, e_pad - e), constant_values=-1)
    dst = jnp.pad(edge_index[1].astype(jnp.int32), (0, e_pad - e), constant_values=-1)

    x_t = jnp.pad(x, ((0, n_pad - n), (0, 0))).T.astype(BF16)          # [din, NP]
    t_row = jnp.pad(edge_attr[:, 0], (0, e_pad - e))[None, :]          # [1, EP] f32
    ef_t = jnp.pad(edge_attr[:, 1:], ((0, e_pad - e), (0, 0))).T.astype(BF16)

    inputs = [src[None, :], dst[None, :], dst[:, None],
              x_t, t_row, ef_t,
              params["time_w_col"], params["time_b_col"],
              params["wf_t"], params["wt_t"], params["edge_b_col"],
              params["a_edge_all_t"]]
    layer_dims = []
    for lp in params["layers"]:
        inputs += [lp["wg_t"], lp["bg"], lp["ws_t"], lp["bs"],
                   lp["a_src_t"], lp["a_dst_t"], lp["gat_bias"]]
        h = lp["a_src_t"].shape[0]
        layer_dims.append((h, lp["a_src_t"].shape[1] // h))
    cfg = {"n_pad": n_pad, "e_pad": e_pad, "layers": tuple(layer_dims)}
    return cfg, inputs, n


def net_forward(params, x, edge_index, edge_attr, out_dim=2):
    cfg, inputs, n = _prepare_inputs(params, x, edge_index, edge_attr)
    h_last, ch_last = cfg["layers"][-1]
    out_t = pl.pallas_call(
        _make_kernel(cfg, len(inputs)),
        out_shape=jax.ShapeDtypeStruct((h_last * ch_last, cfg["n_pad"]), F32),
        in_specs=[pl.BlockSpec(memory_space=pltpu.MemorySpace.VMEM)] * len(inputs),
        out_specs=pl.BlockSpec(memory_space=pltpu.MemorySpace.VMEM),
    )(*inputs)
    # Lane-dense [hc_pad, NP] slab -> module output [N, out_dim] on the host.
    return out_t[:out_dim, :n].T


def net_forward_ref(params, x, edge_index, edge_attr, out_dim=2):
    """Pure-JAX reference running the identical math through XLA."""
    cfg, inputs, n = _prepare_inputs(params, x, edge_index, edge_attr)
    out_t = _net_forward_math(cfg, *inputs)
    return out_t[:out_dim, :n].T


# ----------------------------------- main ------------------------------------

if __name__ == "__main__":
    N = 64            # nodes
    E_RAND = 64       # random edges (self-loops appended -> E = 128)
    IN_FEAT = 24      # data.x.size(1) after feature engineering (synthetic)
    HIDDEN = 16       # hidden_size
    HEADS = 4
    EDGE_FEAT = 4     # edge_attr = [timestamp | 4 features]
    LAYER_NUM = 3

    key = jax.random.PRNGKey(0)
    kx, ks, kd, kt, kf, kp = jax.random.split(key, 6)

    x = jax.random.normal(kx, (N, IN_FEAT), F32)
    src = jnp.concatenate([jax.random.randint(ks, (E_RAND,), 0, N), jnp.arange(N)])
    dst = jnp.concatenate([jax.random.randint(kd, (E_RAND,), 0, N), jnp.arange(N)])
    edge_index = jnp.stack([src, dst]).astype(jnp.int32)                 # [2, E]
    E = edge_index.shape[1]
    t = jax.random.uniform(kt, (E, 1), F32, 0.0, 10.0)
    ef = jax.random.normal(kf, (E, EDGE_FEAT), F32)
    edge_attr = jnp.concatenate([t, ef], axis=1)                         # [E, 5]

    params = init_params(kp, IN_FEAT, HIDDEN, HEADS, EDGE_FEAT, LAYER_NUM)

    fwd = jax.jit(functools.partial(net_forward, out_dim=2))
    out = jax.block_until_ready(fwd(params, x, edge_index, edge_attr))

    assert out.shape == (N, 2), out.shape
    assert bool(jnp.all(jnp.isfinite(out)))

    ref = net_forward_ref(params, x, edge_index, edge_attr, out_dim=2)
    assert bool(jnp.allclose(out, ref, rtol=2e-2, atol=2e-2)), (
        float(jnp.max(jnp.abs(out - ref))))

    print("KERNEL_OK")
</pallas_src>

<mosaic_0001>
module attributes {stable_mosaic.version = 11 : i64} {
  func.func @kernel(%arg0: memref<1x128xi32, #tpu.memory_space<vmem>>, %arg1: memref<1x128xi32, #tpu.memory_space<vmem>>, %arg2: memref<128x1xi32, #tpu.memory_space<vmem>>, %arg3: memref<24x128xbf16, #tpu.memory_space<vmem>>, %arg4: memref<1x128xf32, #tpu.memory_space<vmem>>, %arg5: memref<4x128xbf16, #tpu.memory_space<vmem>>, %arg6: memref<16x1xf32, #tpu.memory_space<vmem>>, %arg7: memref<16x1xf32, #tpu.memory_space<vmem>>, %arg8: memref<16x4xbf16, #tpu.memory_space<vmem>>, %arg9: memref<16x16xbf16, #tpu.memory_space<vmem>>, %arg10: memref<16x1xf32, #tpu.memory_space<vmem>>, %arg11: memref<24x16xbf16, #tpu.memory_space<vmem>>, %arg12: memref<64x24xbf16, #tpu.memory_space<vmem>>, %arg13: memref<64x1xf32, #tpu.memory_space<vmem>>, %arg14: memref<64x24xbf16, #tpu.memory_space<vmem>>, %arg15: memref<64x1xf32, #tpu.memory_space<vmem>>, %arg16: memref<4x64xbf16, #tpu.memory_space<vmem>>, %arg17: memref<4x64xbf16, #tpu.memory_space<vmem>>, %arg18: memref<64x1xf32, #tpu.memory_space<vmem>>, %arg19: memref<64x64xbf16, #tpu.memory_space<vmem>>, %arg20: memref<64x1xf32, #tpu.memory_space<vmem>>, %arg21: memref<64x64xbf16, #tpu.memory_space<vmem>>, %arg22: memref<64x1xf32, #tpu.memory_space<vmem>>, %arg23: memref<4x64xbf16, #tpu.memory_space<vmem>>, %arg24: memref<4x64xbf16, #tpu.memory_space<vmem>>, %arg25: memref<64x1xf32, #tpu.memory_space<vmem>>, %arg26: memref<128x64xbf16, #tpu.memory_space<vmem>>, %arg27: memref<128x1xf32, #tpu.memory_space<vmem>>, %arg28: memref<128x64xbf16, #tpu.memory_space<vmem>>, %arg29: memref<128x1xf32, #tpu.memory_space<vmem>>, %arg30: memref<1x128xbf16, #tpu.memory_space<vmem>>, %arg31: memref<1x128xbf16, #tpu.memory_space<vmem>>, %arg32: memref<128x1xf32, #tpu.memory_space<vmem>>, %arg33: memref<128x128xf32, #tpu.memory_space<vmem>>) attributes {dimension_semantics = [], scalar_prefetch = 0 : i64, scratch_operands = 0 : i64, tpu.core_type = #tpu.core_type<tc>} {
    %c0 = arith.constant 0 : index
    %c0_0 = arith.constant 0 : index
    %0 = vector.load %arg0[%c0, %c0_0] : memref<1x128xi32, #tpu.memory_space<vmem>>, vector<1x128xi32>
    %c0_1 = arith.constant 0 : index
    %c0_2 = arith.constant 0 : index
    %1 = vector.load %arg1[%c0_1, %c0_2] : memref<1x128xi32, #tpu.memory_space<vmem>>, vector<1x128xi32>
    %c0_3 = arith.constant 0 : index
    %c0_4 = arith.constant 0 : index
    %2 = vector.load %arg2[%c0_3, %c0_4] : memref<128x1xi32, #tpu.memory_space<vmem>>, vector<128x1xi32>
    %c0_5 = arith.constant 0 : index
    %c0_6 = arith.constant 0 : index
    %3 = vector.load %arg3[%c0_5, %c0_6] : memref<24x128xbf16, #tpu.memory_space<vmem>>, vector<24x128xbf16>
    %c0_7 = arith.constant 0 : index
    %c0_8 = arith.constant 0 : index
    %4 = vector.load %arg4[%c0_7, %c0_8] : memref<1x128xf32, #tpu.memory_space<vmem>>, vector<1x128xf32>
    %c0_9 = arith.constant 0 : index
    %c0_10 = arith.constant 0 : index
    %5 = vector.load %arg5[%c0_9, %c0_10] : memref<4x128xbf16, #tpu.memory_space<vmem>>, vector<4x128xbf16>
    %c0_11 = arith.constant 0 : index
    %c0_12 = arith.constant 0 : index
    %6 = vector.load %arg6[%c0_11, %c0_12] : memref<16x1xf32, #tpu.memory_space<vmem>>, vector<16x1xf32>
    %c0_13 = arith.constant 0 : index
    %c0_14 = arith.constant 0 : index
    %7 = vector.load %arg7[%c0_13, %c0_14] : memref<16x1xf32, #tpu.memory_space<vmem>>, vector<16x1xf32>
    %c0_15 = arith.constant 0 : index
    %c0_16 = arith.constant 0 : index
    %8 = vector.load %arg8[%c0_15, %c0_16] : memref<16x4xbf16, #tpu.memory_space<vmem>>, vector<16x4xbf16>
    %c0_17 = arith.constant 0 : index
    %c0_18 = arith.constant 0 : index
    %9 = vector.load %arg9[%c0_17, %c0_18] : memref<16x16xbf16, #tpu.memory_space<vmem>>, vector<16x16xbf16>
    %c0_19 = arith.constant 0 : index
    %c0_20 = arith.constant 0 : index
    %10 = vector.load %arg10[%c0_19, %c0_20] : memref<16x1xf32, #tpu.memory_space<vmem>>, vector<16x1xf32>
    %c0_21 = arith.constant 0 : index
    %c0_22 = arith.constant 0 : index
    %11 = vector.load %arg11[%c0_21, %c0_22] : memref<24x16xbf16, #tpu.memory_space<vmem>>, vector<24x16xbf16>
    %c0_23 = arith.constant 0 : index
    %c0_24 = arith.constant 0 : index
    %12 = vector.load %arg12[%c0_23, %c0_24] : memref<64x24xbf16, #tpu.memory_space<vmem>>, vector<64x24xbf16>
    %c0_25 = arith.constant 0 : index
    %c0_26 = arith.constant 0 : index
    %13 = vector.load %arg13[%c0_25, %c0_26] : memref<64x1xf32, #tpu.memory_space<vmem>>, vector<64x1xf32>
    %c0_27 = arith.constant 0 : index
    %c0_28 = arith.constant 0 : index
    %14 = vector.load %arg14[%c0_27, %c0_28] : memref<64x24xbf16, #tpu.memory_space<vmem>>, vector<64x24xbf16>
    %c0_29 = arith.constant 0 : index
    %c0_30 = arith.constant 0 : index
    %15 = vector.load %arg15[%c0_29, %c0_30] : memref<64x1xf32, #tpu.memory_space<vmem>>, vector<64x1xf32>
    %c0_31 = arith.constant 0 : index
    %c0_32 = arith.constant 0 : index
    %16 = vector.load %arg16[%c0_31, %c0_32] : memref<4x64xbf16, #tpu.memory_space<vmem>>, vector<4x64xbf16>
    %c0_33 = arith.constant 0 : index
    %c0_34 = arith.constant 0 : index
    %17 = vector.load %arg17[%c0_33, %c0_34] : memref<4x64xbf16, #tpu.memory_space<vmem>>, vector<4x64xbf16>
    %c0_35 = arith.constant 0 : index
    %c0_36 = arith.constant 0 : index
    %18 = vector.load %arg18[%c0_35, %c0_36] : memref<64x1xf32, #tpu.memory_space<vmem>>, vector<64x1xf32>
    %c0_37 = arith.constant 0 : index
    %c0_38 = arith.constant 0 : index
    %19 = vector.load %arg19[%c0_37, %c0_38] : memref<64x64xbf16, #tpu.memory_space<vmem>>, vector<64x64xbf16>
    %c0_39 = arith.constant 0 : index
    %c0_40 = arith.constant 0 : index
    %20 = vector.load %arg20[%c0_39, %c0_40] : memref<64x1xf32, #tpu.memory_space<vmem>>, vector<64x1xf32>
    %c0_41 = arith.constant 0 : index
    %c0_42 = arith.constant 0 : index
    %21 = vector.load %arg21[%c0_41, %c0_42] : memref<64x64xbf16, #tpu.memory_space<vmem>>, vector<64x64xbf16>
    %c0_43 = arith.constant 0 : index
    %c0_44 = arith.constant 0 : index
    %22 = vector.load %arg22[%c0_43, %c0_44] : memref<64x1xf32, #tpu.memory_space<vmem>>, vector<64x1xf32>
    %c0_45 = arith.constant 0 : index
    %c0_46 = arith.constant 0 : index
    %23 = vector.load %arg23[%c0_45, %c0_46] : memref<4x64xbf16, #tpu.memory_space<vmem>>, vector<4x64xbf16>
    %c0_47 = arith.constant 0 : index
    %c0_48 = arith.constant 0 : index
    %24 = vector.load %arg24[%c0_47, %c0_48] : memref<4x64xbf16, #tpu.memory_space<vmem>>, vector<4x64xbf16>
    %c0_49 = arith.constant 0 : index
    %c0_50 = arith.constant 0 : index
    %25 = vector.load %arg25[%c0_49, %c0_50] : memref<64x1xf32, #tpu.memory_space<vmem>>, vector<64x1xf32>
    %c0_51 = arith.constant 0 : index
    %c0_52 = arith.constant 0 : index
    %26 = vector.load %arg26[%c0_51, %c0_52] : memref<128x64xbf16, #tpu.memory_space<vmem>>, vector<128x64xbf16>
    %c0_53 = arith.constant 0 : index
    %c0_54 = arith.constant 0 : index
    %27 = vector.load %arg27[%c0_53, %c0_54] : memref<128x1xf32, #tpu.memory_space<vmem>>, vector<128x1xf32>
    %c0_55 = arith.constant 0 : index
    %c0_56 = arith.constant 0 : index
    %28 = vector.load %arg28[%c0_55, %c0_56] : memref<128x64xbf16, #tpu.memory_space<vmem>>, vector<128x64xbf16>
    %c0_57 = arith.constant 0 : index
    %c0_58 = arith.constant 0 : index
    %29 = vector.load %arg29[%c0_57, %c0_58] : memref<128x1xf32, #tpu.memory_space<vmem>>, vector<128x1xf32>
    %c0_59 = arith.constant 0 : index
    %c0_60 = arith.constant 0 : index
    %30 = vector.load %arg30[%c0_59, %c0_60] : memref<1x128xbf16, #tpu.memory_space<vmem>>, vector<1x128xbf16>
    %c0_61 = arith.constant 0 : index
    %c0_62 = arith.constant 0 : index
    %31 = vector.load %arg31[%c0_61, %c0_62] : memref<1x128xbf16, #tpu.memory_space<vmem>>, vector<1x128xbf16>
    %c0_63 = arith.constant 0 : index
    %c0_64 = arith.constant 0 : index
    %32 = vector.load %arg32[%c0_63, %c0_64] : memref<128x1xf32, #tpu.memory_space<vmem>>, vector<128x1xf32>
    %33 = tpu.iota {dimensions = array<i32: 0>} : vector<128x128xi32>
    %34 = tpu.iota {dimensions = array<i32: 1>} : vector<128x128xi32>
    %35 = vector.broadcast %0 : vector<1x128xi32> to vector<128x128xi32>
    %36 = arith.cmpi eq, %33, %35 : vector<128x128xi32>
    %cst = arith.constant 1.000000e+00 : f32
    %cst_65 = arith.constant 0.000000e+00 : f32
    %37 = vector.broadcast %cst : f32 to vector<128x128xf32>
    %38 = vector.broadcast %cst_65 : f32 to vector<128x128xf32>
    %39 = arith.select %36, %37, %38 : vector<128x128xi1>, vector<128x128xf32>
    %40 = arith.truncf %39 : vector<128x128xf32> to vector<128x128xbf16>
    %41 = vector.broadcast %1 : vector<1x128xi32> to vector<128x128xi32>
    %42 = arith.cmpi eq, %33, %41 : vector<128x128xi32>
    %cst_66 = arith.constant 1.000000e+00 : f32
    %cst_67 = arith.constant 0.000000e+00 : f32
    %43 = vector.broadcast %cst_66 : f32 to vector<128x128xf32>
    %44 = vector.broadcast %cst_67 : f32 to vector<128x128xf32>
    %45 = arith.select %42, %43, %44 : vector<128x128xi1>, vector<128x128xf32>
    %46 = arith.truncf %45 : vector<128x128xf32> to vector<128x128xbf16>
    %47 = vector.broadcast %2 : vector<128x1xi32> to vector<128x128xi32>
    %48 = arith.cmpi eq, %34, %47 : vector<128x128xi32>
    %cst_68 = arith.constant 1.000000e+00 : f32
    %cst_69 = arith.constant 0.000000e+00 : f32
    %49 = vector.broadcast %cst_68 : f32 to vector<128x128xf32>
    %50 = vector.broadcast %cst_69 : f32 to vector<128x128xf32>
    %51 = arith.select %48, %49, %50 : vector<128x128xi1>, vector<128x128xf32>
    %52 = arith.truncf %51 : vector<128x128xf32> to vector<128x128xbf16>
    %53 = vector.broadcast %6 : vector<16x1xf32> to vector<16x128xf32>
    %54 = vector.broadcast %4 : vector<1x128xf32> to vector<16x128xf32>
    %55 = arith.mulf %53, %54 : vector<16x128xf32>
    %56 = vector.broadcast %7 : vector<16x1xf32> to vector<16x128xf32>
    %57 = arith.addf %55, %56 : vector<16x128xf32>
    %58 = math.cos %57 : vector<16x128xf32>
    %cst_70 = arith.constant dense<0.000000e+00> : vector<16x128xf32>
    %59 = tpu.matmul %8, %5, %cst_70 {dimension_numbers = #tpu.dot_dimension_numbers<[1], [0], [0], [1], [0, 0, 1, 1], [], []>} : vector<16x4xbf16>, vector<4x128xbf16>, vector<16x128xf32> -> vector<16x128xf32>
    %60 = arith.truncf %58 : vector<16x128xf32> to vector<16x128xbf16>
    %cst_71 = arith.constant dense<0.000000e+00> : vector<16x128xf32>
    %61 = tpu.matmul %9, %60, %cst_71 {dimension_numbers = #tpu.dot_dimension_numbers<[1], [0], [0], [1], [0, 0, 1, 1], [], []>} : vector<16x16xbf16>, vector<16x128xbf16>, vector<16x128xf32> -> vector<16x128xf32>
    %62 = arith.addf %59, %61 : vector<16x128xf32>
    %63 = vector.broadcast %10 : vector<16x1xf32> to vector<16x128xf32>
    %64 = arith.addf %62, %63 : vector<16x128xf32>
    %65 = arith.truncf %64 : vector<16x128xf32> to vector<16x128xbf16>
    %cst_72 = arith.constant dense<0.000000e+00> : vector<24x128xf32>
    %66 = tpu.matmul %11, %65, %cst_72 {dimension_numbers = #tpu.dot_dimension_numbers<[1], [0], [0], [1], [0, 0, 1, 1], [], []>} : vector<24x16xbf16>, vector<16x128xbf16>, vector<24x128xf32> -> vector<24x128xf32>
    %cst_73 = arith.constant dense<0.000000e+00> : vector<64x128xf32>
    %67 = tpu.matmul %12, %3, %cst_73 {dimension_numbers = #tpu.dot_dimension_numbers<[1], [0], [0], [1], [0, 0, 1, 1], [], []>} : vector<64x24xbf16>, vector<24x128xbf16>, vector<64x128xf32> -> vector<64x128xf32>
    %68 = vector.broadcast %13 : vector<64x1xf32> to vector<64x128xf32>
    %69 = arith.addf %67, %68 : vector<64x128xf32>
    %cst_74 = arith.constant dense<0.000000e+00> : vector<64x128xf32>
    %70 = tpu.matmul %14, %3, %cst_74 {dimension_numbers = #tpu.dot_dimension_numbers<[1], [0], [0], [1], [0, 0, 1, 1], [], []>} : vector<64x24xbf16>, vector<24x128xbf16>, vector<64x128xf32> -> vector<64x128xf32>
    %71 = vector.broadcast %15 : vector<64x1xf32> to vector<64x128xf32>
    %72 = arith.addf %70, %71 : vector<64x128xf32>
    %73 = arith.truncf %69 : vector<64x128xf32> to vector<64x128xbf16>
    %cst_75 = arith.constant dense<0.000000e+00> : vector<64x128xf32>
    %74 = tpu.matmul %73, %40, %cst_75 {dimension_numbers = #tpu.dot_dimension_numbers<[1], [0], [0], [1], [0, 0, 1, 1], [], []>} : vector<64x128xbf16>, vector<128x128xbf16>, vector<64x128xf32> -> vector<64x128xf32>
    %75 = arith.truncf %69 : vector<64x128xf32> to vector<64x128xbf16>
    %cst_76 = arith.constant dense<0.000000e+00> : vector<4x128xf32>
    %76 = tpu.matmul %17, %75, %cst_76 {dimension_numbers = #tpu.dot_dimension_numbers<[1], [0], [0], [1], [0, 0, 1, 1], [], []>} : vector<4x64xbf16>, vector<64x128xbf16>, vector<4x128xf32> -> vector<4x128xf32>
    %77 = arith.truncf %74 : vector<64x128xf32> to vector<64x128xbf16>
    %cst_77 = arith.constant dense<0.000000e+00> : vector<4x128xf32>
    %78 = tpu.matmul %16, %77, %cst_77 {dimension_numbers = #tpu.dot_dimension_numbers<[1], [0], [0], [1], [0, 0, 1, 1], [], []>} : vector<4x64xbf16>, vector<64x128xbf16>, vector<4x128xf32> -> vector<4x128xf32>
    %79 = arith.truncf %76 : vector<4x128xf32> to vector<4x128xbf16>
    %cst_78 = arith.constant dense<0.000000e+00> : vector<4x128xf32>
    %80 = tpu.matmul %79, %46, %cst_78 {dimension_numbers = #tpu.dot_dimension_numbers<[1], [0], [0], [1], [0, 0, 1, 1], [], []>} : vector<4x128xbf16>, vector<128x128xbf16>, vector<4x128xf32> -> vector<4x128xf32>
    %81 = arith.addf %78, %80 : vector<4x128xf32>
    %82 = vector.extract_strided_slice %66 {offsets = [0, 0], sizes = [4, 128], strides = [1, 1]} : vector<24x128xf32> to vector<4x128xf32>
    %83 = arith.addf %81, %82 : vector<4x128xf32>
    %cst_79 = arith.constant 0.000000e+00 : f32
    %84 = vector.broadcast %cst_79 : f32 to vector<4x128xf32>
    %85 = arith.cmpf oge, %83, %84 : vector<4x128xf32>
    %cst_80 = arith.constant 2.000000e-01 : f32
    %86 = vector.broadcast %cst_80 : f32 to vector<4x128xf32>
    %87 = arith.mulf %86, %83 : vector<4x128xf32>
    %88 = arith.select %85, %83, %87 : vector<4x128xi1>, vector<4x128xf32>
    %cst_81 = arith.constant dense<0xFF800000> : vector<4xf32>
    %89 = vector.multi_reduction <maximumf>, %88, %cst_81 [1] : vector<4x128xf32> to vector<4xf32>
    %90 = vector.shape_cast %89 : vector<4xf32> to vector<4x1xf32>
    %91 = vector.broadcast %90 : vector<4x1xf32> to vector<4x128xf32>
    %92 = arith.subf %88, %91 : vector<4x128xf32>
    %93 = math.exp %92 : vector<4x128xf32>
    %94 = arith.truncf %93 : vector<4x128xf32> to vector<4x128xbf16>
    %cst_82 = arith.constant dense<0.000000e+00> : vector<4x128xf32>
    %95 = tpu.matmul %94, %52, %cst_82 {dimension_numbers = #tpu.dot_dimension_numbers<[1], [0], [0], [1], [0, 0, 1, 1], [], []>} : vector<4x128xbf16>, vector<128x128xbf16>, vector<4x128xf32> -> vector<4x128xf32>
    %cst_83 = arith.constant 0.000000e+00 : f32
    %96 = vector.broadcast %cst_83 : f32 to vector<4x128xf32>
    %97 = arith.cmpf ogt, %95, %96 : vector<4x128xf32>
    %cst_84 = arith.constant 1.000000e+00 : f32
    %98 = vector.broadcast %cst_84 : f32 to vector<4x128xf32>
    %99 = arith.divf %98, %95 : vector<4x128xf32>
    %cst_85 = arith.constant 0.000000e+00 : f32
    %100 = vector.broadcast %cst_85 : f32 to vector<4x128xf32>
    %101 = arith.select %97, %99, %100 : vector<4x128xi1>, vector<4x128xf32>
    %102 = arith.truncf %101 : vector<4x128xf32> to vector<4x128xbf16>
    %cst_86 = arith.constant dense<0.000000e+00> : vector<4x128xf32>
    %103 = tpu.matmul %102, %46, %cst_86 {dimension_numbers = #tpu.dot_dimension_numbers<[1], [0], [0], [1], [0, 0, 1, 1], [], []>} : vector<4x128xbf16>, vector<128x128xbf16>, vector<4x128xf32> -> vector<4x128xf32>
    %104 = arith.mulf %93, %103 : vector<4x128xf32>
    %105 = vector.extract_strided_slice %74 {offsets = [0, 0], sizes = [16, 128], strides = [1, 1]} : vector<64x128xf32> to vector<16x128xf32>
    %106 = vector.extract_strided_slice %104 {offsets = [0, 0], sizes = [1, 128], strides = [1, 1]} : vector<4x128xf32> to vector<1x128xf32>
    %107 = vector.broadcast %106 : vector<1x128xf32> to vector<16x128xf32>
    %108 = arith.mulf %105, %107 : vector<16x128xf32>
    %109 = vector.extract_strided_slice %74 {offsets = [16, 0], sizes = [16, 128], strides = [1, 1]} : vector<64x128xf32> to vector<16x128xf32>
    %110 = vector.extract_strided_slice %104 {offsets = [1, 0], sizes = [1, 128], strides = [1, 1]} : vector<4x128xf32> to vector<1x128xf32>
    %111 = vector.broadcast %110 : vector<1x128xf32> to vector<16x128xf32>
    %112 = arith.mulf %109, %111 : vector<16x128xf32>
    %113 = vector.extract_strided_slice %74 {offsets = [32, 0], sizes = [16, 128], strides = [1, 1]} : vector<64x128xf32> to vector<16x128xf32>
    %114 = vector.extract_strided_slice %104 {offsets = [2, 0], sizes = [1, 128], strides = [1, 1]} : vector<4x128xf32> to vector<1x128xf32>
    %115 = vector.broadcast %114 : vector<1x128xf32> to vector<16x128xf32>
    %116 = arith.mulf %113, %115 : vector<16x128xf32>
    %117 = vector.extract_strided_slice %74 {offsets = [48, 0], sizes = [16, 128], strides = [1, 1]} : vector<64x128xf32> to vector<16x128xf32>
    %118 = vector.extract_strided_slice %104 {offsets = [3, 0], sizes = [1, 128], strides = [1, 1]} : vector<4x128xf32> to vector<1x128xf32>
    %119 = vector.broadcast %118 : vector<1x128xf32> to vector<16x128xf32>
    %120 = arith.mulf %117, %119 : vector<16x128xf32>
    %121 = tpu.concatenate %108, %112, %116, %120 in 0 : vector<16x128xf32>, vector<16x128xf32>, vector<16x128xf32>, vector<16x128xf32> -> vector<64x128xf32>
    %122 = arith.truncf %121 : vector<64x128xf32> to vector<64x128xbf16>
    %cst_87 = arith.constant dense<0.000000e+00> : vector<64x128xf32>
    %123 = tpu.matmul %122, %52, %cst_87 {dimension_numbers = #tpu.dot_dimension_numbers<[1], [0], [0], [1], [0, 0, 1, 1], [], []>} : vector<64x128xbf16>, vector<128x128xbf16>, vector<64x128xf32> -> vector<64x128xf32>
    %124 = vector.broadcast %18 : vector<64x1xf32> to vector<64x128xf32>
    %125 = arith.addf %123, %124 : vector<64x128xf32>
    %126 = arith.addf %125, %72 : vector<64x128xf32>
    %cst_88 = arith.constant 0.000000e+00 : f32
    %127 = vector.broadcast %cst_88 : f32 to vector<64x128xf32>
    %128 = arith.maximumf %126, %127 : vector<64x128xf32>
    %129 = arith.truncf %128 : vector<64x128xf32> to vector<64x128xbf16>
    %cst_89 = arith.constant dense<0.000000e+00> : vector<64x128xf32>
    %130 = tpu.matmul %19, %129, %cst_89 {dimension_numbers = #tpu.dot_dimension_numbers<[1], [0], [0], [1], [0, 0, 1, 1], [], []>} : vector<64x64xbf16>, vector<64x128xbf16>, vector<64x128xf32> -> vector<64x128xf32>
    %131 = vector.broadcast %20 : vector<64x1xf32> to vector<64x128xf32>
    %132 = arith.addf %130, %131 : vector<64x128xf32>
    %133 = arith.truncf %128 : vector<64x128xf32> to vector<64x128xbf16>
    %cst_90 = arith.constant dense<0.000000e+00> : vector<64x128xf32>
    %134 = tpu.matmul %21, %133, %cst_90 {dimension_numbers = #tpu.dot_dimension_numbers<[1], [0], [0], [1], [0, 0, 1, 1], [], []>} : vector<64x64xbf16>, vector<64x128xbf16>, vector<64x128xf32> -> vector<64x128xf32>
    %135 = vector.broadcast %22 : vector<64x1xf32> to vector<64x128xf32>
    %136 = arith.addf %134, %135 : vector<64x128xf32>
    %137 = arith.truncf %132 : vector<64x128xf32> to vector<64x128xbf16>
    %cst_91 = arith.constant dense<0.000000e+00> : vector<64x128xf32>
    %138 = tpu.matmul %137, %40, %cst_91 {dimension_numbers = #tpu.dot_dimension_numbers<[1], [0], [0], [1], [0, 0, 1, 1], [], []>} : vector<64x128xbf16>, vector<128x128xbf16>, vector<64x128xf32> -> vector<64x128xf32>
    %139 = arith.truncf %132 : vector<64x128xf32> to vector<64x128xbf16>
    %cst_92 = arith.constant dense<0.000000e+00> : vector<4x128xf32>
    %140 = tpu.matmul %24, %139, %cst_92 {dimension_numbers = #tpu.dot_dimension_numbers<[1], [0], [0], [1], [0, 0, 1, 1], [], []>} : vector<4x64xbf16>, vector<64x128xbf16>, vector<4x128xf32> -> vector<4x128xf32>
    %141 = arith.truncf %138 : vector<64x128xf32> to vector<64x128xbf16>
    %cst_93 = arith.constant dense<0.000000e+00> : vector<4x128xf32>
    %142 = tpu.matmul %23, %141, %cst_93 {dimension_numbers = #tpu.dot_dimension_numbers<[1], [0], [0], [1], [0, 0, 1, 1], [], []>} : vector<4x64xbf16>, vector<64x128xbf16>, vector<4x128xf32> -> vector<4x128xf32>
    %143 = arith.truncf %140 : vector<4x128xf32> to vector<4x128xbf16>
    %cst_94 = arith.constant dense<0.000000e+00> : vector<4x128xf32>
    %144 = tpu.matmul %143, %46, %cst_94 {dimension_numbers = #tpu.dot_dimension_numbers<[1], [0], [0], [1], [0, 0, 1, 1], [], []>} : vector<4x128xbf16>, vector<128x128xbf16>, vector<4x128xf32> -> vector<4x128xf32>
    %145 = arith.addf %142, %144 : vector<4x128xf32>
    %146 = vector.extract_strided_slice %66 {offsets = [8, 0], sizes = [4, 128], strides = [1, 1]} : vector<24x128xf32> to vector<4x128xf32>
    %147 = arith.addf %145, %146 : vector<4x128xf32>
    %cst_95 = arith.constant 0.000000e+00 : f32
    %148 = vector.broadcast %cst_95 : f32 to vector<4x128xf32>
    %149 = arith.cmpf oge, %147, %148 : vector<4x128xf32>
    %cst_96 = arith.constant 2.000000e-01 : f32
    %150 = vector.broadcast %cst_96 : f32 to vector<4x128xf32>
    %151 = arith.mulf %150, %147 : vector<4x128xf32>
    %152 = arith.select %149, %147, %151 : vector<4x128xi1>, vector<4x128xf32>
    %cst_97 = arith.constant dense<0xFF800000> : vector<4xf32>
    %153 = vector.multi_reduction <maximumf>, %152, %cst_97 [1] : vector<4x128xf32> to vector<4xf32>
    %154 = vector.shape_cast %153 : vector<4xf32> to vector<4x1xf32>
    %155 = vector.broadcast %154 : vector<4x1xf32> to vector<4x128xf32>
    %156 = arith.subf %152, %155 : vector<4x128xf32>
    %157 = math.exp %156 : vector<4x128xf32>
    %158 = arith.truncf %157 : vector<4x128xf32> to vector<4x128xbf16>
    %cst_98 = arith.constant dense<0.000000e+00> : vector<4x128xf32>
    %159 = tpu.matmul %158, %52, %cst_98 {dimension_numbers = #tpu.dot_dimension_numbers<[1], [0], [0], [1], [0, 0, 1, 1], [], []>} : vector<4x128xbf16>, vector<128x128xbf16>, vector<4x128xf32> -> vector<4x128xf32>
    %cst_99 = arith.constant 0.000000e+00 : f32
    %160 = vector.broadcast %cst_99 : f32 to vector<4x128xf32>
    %161 = arith.cmpf ogt, %159, %160 : vector<4x128xf32>
    %cst_100 = arith.constant 1.000000e+00 : f32
    %162 = vector.broadcast %cst_100 : f32 to vector<4x128xf32>
    %163 = arith.divf %162, %159 : vector<4x128xf32>
    %cst_101 = arith.constant 0.000000e+00 : f32
    %164 = vector.broadcast %cst_101 : f32 to vector<4x128xf32>
    %165 = arith.select %161, %163, %164 : vector<4x128xi1>, vector<4x128xf32>
    %166 = arith.truncf %165 : vector<4x128xf32> to vector<4x128xbf16>
    %cst_102 = arith.constant dense<0.000000e+00> : vector<4x128xf32>
    %167 = tpu.matmul %166, %46, %cst_102 {dimension_numbers = #tpu.dot_dimension_numbers<[1], [0], [0], [1], [0, 0, 1, 1], [], []>} : vector<4x128xbf16>, vector<128x128xbf16>, vector<4x128xf32> -> vector<4x128xf32>
    %168 = arith.mulf %157, %167 : vector<4x128xf32>
    %169 = vector.extract_strided_slice %138 {offsets = [0, 0], sizes = [16, 128], strides = [1, 1]} : vector<64x128xf32> to vector<16x128xf32>
    %170 = vector.extract_strided_slice %168 {offsets = [0, 0], sizes = [1, 128], strides = [1, 1]} : vector<4x128xf32> to vector<1x128xf32>
    %171 = vector.broadcast %170 : vector<1x128xf32> to vector<16x128xf32>
    %172 = arith.mulf %169, %171 : vector<16x128xf32>
    %173 = vector.extract_strided_slice %138 {offsets = [16, 0], sizes = [16, 128], strides = [1, 1]} : vector<64x128xf32> to vector<16x128xf32>
    %174 = vector.extract_strided_slice %168 {offsets = [1, 0], sizes = [1, 128], strides = [1, 1]} : vector<4x128xf32> to vector<1x128xf32>
    %175 = vector.broadcast %174 : vector<1x128xf32> to vector<16x128xf32>
    %176 = arith.mulf %173, %175 : vector<16x128xf32>
    %177 = vector.extract_strided_slice %138 {offsets = [32, 0], sizes = [16, 128], strides = [1, 1]} : vector<64x128xf32> to vector<16x128xf32>
    %178 = vector.extract_strided_slice %168 {offsets = [2, 0], sizes = [1, 128], strides = [1, 1]} : vector<4x128xf32> to vector<1x128xf32>
    %179 = vector.broadcast %178 : vector<1x128xf32> to vector<16x128xf32>
    %180 = arith.mulf %177, %179 : vector<16x128xf32>
    %181 = vector.extract_strided_slice %138 {offsets = [48, 0], sizes = [16, 128], strides = [1, 1]} : vector<64x128xf32> to vector<16x128xf32>
    %182 = vector.extract_strided_slice %168 {offsets = [3, 0], sizes = [1, 128], strides = [1, 1]} : vector<4x128xf32> to vector<1x128xf32>
    %183 = vector.broadcast %182 : vector<1x128xf32> to vector<16x128xf32>
    %184 = arith.mulf %181, %183 : vector<16x128xf32>
    %185 = tpu.concatenate %172, %176, %180, %184 in 0 : vector<16x128xf32>, vector<16x128xf32>, vector<16x128xf32>, vector<16x128xf32> -> vector<64x128xf32>
    %186 = arith.truncf %185 : vector<64x128xf32> to vector<64x128xbf16>
    %cst_103 = arith.constant dense<0.000000e+00> : vector<64x128xf32>
    %187 = tpu.matmul %186, %52, %cst_103 {dimension_numbers = #tpu.dot_dimension_numbers<[1], [0], [0], [1], [0, 0, 1, 1], [], []>} : vector<64x128xbf16>, vector<128x128xbf16>, vector<64x128xf32> -> vector<64x128xf32>
    %188 = vector.broadcast %25 : vector<64x1xf32> to vector<64x128xf32>
    %189 = arith.addf %187, %188 : vector<64x128xf32>
    %190 = arith.addf %189, %136 : vector<64x128xf32>
    %cst_104 = arith.constant 0.000000e+00 : f32
    %191 = vector.broadcast %cst_104 : f32 to vector<64x128xf32>
    %192 = arith.maximumf %190, %191 : vector<64x128xf32>
    %193 = arith.truncf %192 : vector<64x128xf32> to vector<64x128xbf16>
    %cst_105 = arith.constant dense<0.000000e+00> : vector<128x128xf32>
    %194 = tpu.matmul %26, %193, %cst_105 {dimension_numbers = #tpu.dot_dimension_numbers<[1], [0], [0], [1], [0, 0, 1, 1], [], []>} : vector<128x64xbf16>, vector<64x128xbf16>, vector<128x128xf32> -> vector<128x128xf32>
    %195 = vector.broadcast %27 : vector<128x1xf32> to vector<128x128xf32>
    %196 = arith.addf %194, %195 : vector<128x128xf32>
    %197 = arith.truncf %192 : vector<64x128xf32> to vector<64x128xbf16>
    %cst_106 = arith.constant dense<0.000000e+00> : vector<128x128xf32>
    %198 = tpu.matmul %28, %197, %cst_106 {dimension_numbers = #tpu.dot_dimension_numbers<[1], [0], [0], [1], [0, 0, 1, 1], [], []>} : vector<128x64xbf16>, vector<64x128xbf16>, vector<128x128xf32> -> vector<128x128xf32>
    %199 = vector.broadcast %29 : vector<128x1xf32> to vector<128x128xf32>
    %200 = arith.addf %198, %199 : vector<128x128xf32>
    %201 = arith.truncf %196 : vector<128x128xf32> to vector<128x128xbf16>
    %cst_107 = arith.constant dense<0.000000e+00> : vector<128x128xf32>
    %202 = tpu.matmul %201, %40, %cst_107 {dimension_numbers = #tpu.dot_dimension_numbers<[1], [0], [0], [1], [0, 0, 1, 1], [], []>} : vector<128x128xbf16>, vector<128x128xbf16>, vector<128x128xf32> -> vector<128x128xf32>
    %203 = arith.truncf %196 : vector<128x128xf32> to vector<128x128xbf16>
    %cst_108 = arith.constant dense<0.000000e+00> : vector<1x128xf32>
    %204 = tpu.matmul %31, %203, %cst_108 {dimension_numbers = #tpu.dot_dimension_numbers<[1], [0], [0], [1], [0, 0, 1, 1], [], []>} : vector<1x128xbf16>, vector<128x128xbf16>, vector<1x128xf32> -> vector<1x128xf32>
    %205 = arith.truncf %202 : vector<128x128xf32> to vector<128x128xbf16>
    %cst_109 = arith.constant dense<0.000000e+00> : vector<1x128xf32>
    %206 = tpu.matmul %30, %205, %cst_109 {dimension_numbers = #tpu.dot_dimension_numbers<[1], [0], [0], [1], [0, 0, 1, 1], [], []>} : vector<1x128xbf16>, vector<128x128xbf16>, vector<1x128xf32> -> vector<1x128xf32>
    %207 = arith.truncf %204 : vector<1x128xf32> to vector<1x128xbf16>
    %cst_110 = arith.constant dense<0.000000e+00> : vector<1x128xf32>
    %208 = tpu.matmul %207, %46, %cst_110 {dimension_numbers = #tpu.dot_dimension_numbers<[1], [0], [0], [1], [0, 0, 1, 1], [], []>} : vector<1x128xbf16>, vector<128x128xbf16>, vector<1x128xf32> -> vector<1x128xf32>
    %209 = arith.addf %206, %208 : vector<1x128xf32>
    %210 = vector.extract_strided_slice %66 {offsets = [16, 0], sizes = [1, 128], strides = [1, 1]} : vector<24x128xf32> to vector<1x128xf32>
    %211 = arith.addf %209, %210 : vector<1x128xf32>
    %cst_111 = arith.constant 0.000000e+00 : f32
    %212 = vector.broadcast %cst_111 : f32 to vector<1x128xf32>
    %213 = arith.cmpf oge, %211, %212 : vector<1x128xf32>
    %cst_112 = arith.constant 2.000000e-01 : f32
    %214 = vector.broadcast %cst_112 : f32 to vector<1x128xf32>
    %215 = arith.mulf %214, %211 : vector<1x128xf32>
    %216 = arith.select %213, %211, %215 : vector<1x128xi1>, vector<1x128xf32>
    %cst_113 = arith.constant dense<0xFF800000> : vector<1xf32>
    %217 = vector.multi_reduction <maximumf>, %216, %cst_113 [1] : vector<1x128xf32> to vector<1xf32>
    %218 = vector.shape_cast %217 : vector<1xf32> to vector<1x1xf32>
    %219 = vector.broadcast %218 : vector<1x1xf32> to vector<1x128xf32>
    %220 = arith.subf %216, %219 : vector<1x128xf32>
    %221 = math.exp %220 : vector<1x128xf32>
    %222 = arith.truncf %221 : vector<1x128xf32> to vector<1x128xbf16>
    %cst_114 = arith.constant dense<0.000000e+00> : vector<1x128xf32>
    %223 = tpu.matmul %222, %52, %cst_114 {dimension_numbers = #tpu.dot_dimension_numbers<[1], [0], [0], [1], [0, 0, 1, 1], [], []>} : vector<1x128xbf16>, vector<128x128xbf16>, vector<1x128xf32> -> vector<1x128xf32>
    %cst_115 = arith.constant 0.000000e+00 : f32
    %224 = vector.broadcast %cst_115 : f32 to vector<1x128xf32>
    %225 = arith.cmpf ogt, %223, %224 : vector<1x128xf32>
    %cst_116 = arith.constant 1.000000e+00 : f32
    %226 = vector.broadcast %cst_116 : f32 to vector<1x128xf32>
    %227 = arith.divf %226, %223 : vector<1x128xf32>
    %cst_117 = arith.constant 0.000000e+00 : f32
    %228 = vector.broadcast %cst_117 : f32 to vector<1x128xf32>
    %229 = arith.select %225, %227, %228 : vector<1x128xi1>, vector<1x128xf32>
    %230 = arith.truncf %229 : vector<1x128xf32> to vector<1x128xbf16>
    %cst_118 = arith.constant dense<0.000000e+00> : vector<1x128xf32>
    %231 = tpu.matmul %230, %46, %cst_118 {dimension_numbers = #tpu.dot_dimension_numbers<[1], [0], [0], [1], [0, 0, 1, 1], [], []>} : vector<1x128xbf16>, vector<128x128xbf16>, vector<1x128xf32> -> vector<1x128xf32>
    %232 = arith.mulf %221, %231 : vector<1x128xf32>
    %233 = vector.broadcast %232 : vector<1x128xf32> to vector<128x128xf32>
    %234 = arith.mulf %202, %233 : vector<128x128xf32>
    %235 = arith.truncf %234 : vector<128x128xf32> to vector<128x128xbf16>
    %cst_119 = arith.constant dense<0.000000e+00> : vector<128x128xf32>
    %236 = tpu.matmul %235, %52, %cst_119 {dimension_numbers = #tpu.dot_dimension_numbers<[1], [0], [0], [1], [0, 0, 1, 1], [], []>} : vector<128x128xbf16>, vector<128x128xbf16>, vector<128x128xf32> -> vector<128x128xf32>
    %237 = vector.broadcast %32 : vector<128x1xf32> to vector<128x128xf32>
    %238 = arith.addf %236, %237 : vector<128x128xf32>
    %239 = arith.addf %238, %200 : vector<128x128xf32>
    %cst_120 = arith.constant 0.000000e+00 : f32
    %240 = vector.broadcast %cst_120 : f32 to vector<128x128xf32>
    %241 = arith.maximumf %239, %240 : vector<128x128xf32>
    %c0_121 = arith.constant 0 : index
    %c0_122 = arith.constant 0 : index
    %242 = vector.load %arg33[%c0_121, %c0_122] : memref<128x128xf32, #tpu.memory_space<vmem>>, vector<128x128xf32>
    tpu.vector_store %arg33[%c0_121, %c0_122], %241 {strides = array<i32>} : memref<128x128xf32, #tpu.memory_space<vmem>>, vector<128x128xf32>,
    return
  }
}

</mosaic_0001>

<llo_original>
// kernel: net_forward.1
$region0: #{net_forward.1}
  #allocation0 [shape = 'u32[]', space=smem, size = 0x4, offset = 0x4, fixed_abs, tag = 'smem constant byte address 0x4 - core index']
  #allocation1 [shape = 'u32[144,128]{1,0:T(1,128)}', space=vmem, size = 0x12000, scoped, tag = 'internal scratch']
  %s0 = inlined_call_operand.smem [shape: u32[34], index: -1, kind: input, shape index: {}]
  %s1 = sld [smem:[%s0]]
  %s2 = scalar_lea.smem %s0, 1
  %s3 = sld [smem:[%s2]]
  %s4 = scalar_lea.smem %s0, 2
  %s5 = sld [smem:[%s4]]
  %s6 = scalar_lea.smem %s0, 3
  %s7 = sld [smem:[%s6]]
  %s8 = scalar_lea.smem %s0, 4
  %s9 = sld [smem:[%s8]]
  %s10 = scalar_lea.smem %s0, 5
  %s11 = sld [smem:[%s10]]
  %s12 = scalar_lea.smem %s0, 6
  %s13 = sld [smem:[%s12]]
  %s14 = scalar_lea.smem %s0, 7
  %s15 = sld [smem:[%s14]]
  %s16 = scalar_lea.smem %s0, 8
  %s17 = sld [smem:[%s16]]
  %s18 = scalar_lea.smem %s0, 9
  %s19 = sld [smem:[%s18]]
  %s20 = scalar_lea.smem %s0, 10
  %s21 = sld [smem:[%s20]]
  %s22 = scalar_lea.smem %s0, 11
  %s23 = sld [smem:[%s22]]
  %s24 = scalar_lea.smem %s0, 12
  %s25 = sld [smem:[%s24]]
  %s26 = scalar_lea.smem %s0, 13
  %s27 = sld [smem:[%s26]]
  %s28 = scalar_lea.smem %s0, 14
  %s29 = sld [smem:[%s28]]
  %s30 = scalar_lea.smem %s0, 15
  %s31 = sld [smem:[%s30]]
  %s32 = scalar_lea.smem %s0, 16
  %s33 = sld [smem:[%s32]]
  %s34 = scalar_lea.smem %s0, 17
  %s35 = sld [smem:[%s34]]
  %s36 = scalar_lea.smem %s0, 18
  %s37 = sld [smem:[%s36]]
  %s38 = scalar_lea.smem %s0, 19
  %s39 = sld [smem:[%s38]]
  %s40 = scalar_lea.smem %s0, 20
  %s41 = sld [smem:[%s40]]
  %s42 = scalar_lea.smem %s0, 21
  %s43 = sld [smem:[%s42]]
  %s44 = scalar_lea.smem %s0, 22
  %s45 = sld [smem:[%s44]]
  %s46 = scalar_lea.smem %s0, 23
  %s47 = sld [smem:[%s46]]
  %s48 = scalar_lea.smem %s0, 24
  %s49 = sld [smem:[%s48]]
  %s50 = scalar_lea.smem %s0, 25
  %s51 = sld [smem:[%s50]]
  %s52 = scalar_lea.smem %s0, 26
  %s53 = sld [smem:[%s52]]
  %s54 = scalar_lea.smem %s0, 27
  %s55 = sld [smem:[%s54]]
  %s56 = scalar_lea.smem %s0, 28
  %s57 = sld [smem:[%s56]]
  %s58 = scalar_lea.smem %s0, 29
  %s59 = sld [smem:[%s58]]
  %s60 = scalar_lea.smem %s0, 30
  %s61 = sld [smem:[%s60]]
  %s62 = scalar_lea.smem %s0, 31
  %s63 = sld [smem:[%s62]]
  %s64 = scalar_lea.smem %s0, 32
  %s65 = sld [smem:[%s64]]
  %s66 = scalar_lea.smem %s0, 33
  %s67 = sld [smem:[%s66]]
  %s68 = sld [smem:[#allocation0]]
  $region142: #{net_forward.1} parent=0
    _
  %s70 = ssub.s32 1, %s68
  %s71 = scalar_select 0, %s70, %s68
  // Predicated region
  $region2: #{net_forward.1} parent=0 // pred_check
    _
  $region3: #{net_forward.1} parent=0 // pred_check_branch
    %73 = sbr.rel (0) target = $region5
  $region4: #{net_forward.1} parent=0 // pred_region
    _
  $region5: #{net_forward.1} parent=0 // pred_fallthru
    _
  // Predicated region
  $region6: #{net_forward.1} parent=0 // pred_check
    _
  $region7: #{net_forward.1} parent=0 // pred_check_branch
    %75 = sbr.rel (0) target = $region9
  $region8: #{net_forward.1} parent=0 // pred_region
    _
  $region9: #{net_forward.1} parent=0 // pred_fallthru
    _
  // Predicated region
  $region10: #{net_forward.1} parent=0 // pred_check
    _
  $region11: #{net_forward.1} parent=0 // pred_check_branch
    %77 = sbr.rel (0) target = $region13
  $region12: #{net_forward.1} parent=0 // pred_region
    _
  $region13: #{net_forward.1} parent=0 // pred_fallthru
    _
  // Predicated region
  $region14: #{net_forward.1} parent=0 // pred_check
    _
  $region15: #{net_forward.1} parent=0 // pred_check_branch
    %79 = sbr.rel (0) target = $region17
  $region16: #{net_forward.1} parent=0 // pred_region
    _
  $region17: #{net_forward.1} parent=0 // pred_fallthru
    _
  // Predicated region
  $region18: #{net_forward.1} parent=0 // pred_check
    _
  $region19: #{net_forward.1} parent=0 // pred_check_branch
    %81 = sbr.rel (0) target = $region21
  $region20: #{net_forward.1} parent=0 // pred_region
    _
  $region21: #{net_forward.1} parent=0 // pred_fallthru
    _
  // Predicated region
  $region22: #{net_forward.1} parent=0 // pred_check
    _
  $region23: #{net_forward.1} parent=0 // pred_check_branch
    %83 = sbr.rel (0) target = $region25
  $region24: #{net_forward.1} parent=0 // pred_region
    _
  $region25: #{net_forward.1} parent=0 // pred_fallthru
    _
  // Predicated region
  $region26: #{net_forward.1} parent=0 // pred_check
    _
  $region27: #{net_forward.1} parent=0 // pred_check_branch
    %85 = sbr.rel (0) target = $region29
  $region28: #{net_forward.1} parent=0 // pred_region
    _
  $region29: #{net_forward.1} parent=0 // pred_fallthru
    _
  // Predicated region
  $region30: #{net_forward.1} parent=0 // pred_check
    _
  $region31: #{net_forward.1} parent=0 // pred_check_branch
    %87 = sbr.rel (0) target = $region33
  $region32: #{net_forward.1} parent=0 // pred_region
    _
  $region33: #{net_forward.1} parent=0 // pred_fallthru
    _
  // Predicated region
  $region34: #{net_forward.1} parent=0 // pred_check
    _
  $region35: #{net_forward.1} parent=0 // pred_check_branch
    %89 = sbr.rel (0) target = $region37
  $region36: #{net_forward.1} parent=0 // pred_region
    _
  $region37: #{net_forward.1} parent=0 // pred_fallthru
    _
  // Predicated region
  $region38: #{net_forward.1} parent=0 // pred_check
    _
  $region39: #{net_forward.1} parent=0 // pred_check_branch
    %91 = sbr.rel (0) target = $region41
  $region40: #{net_forward.1} parent=0 // pred_region
    _
  $region41: #{net_forward.1} parent=0 // pred_fallthru
    _
  // Predicated region
  $region42: #{net_forward.1} parent=0 // pred_check
    _
  $region43: #{net_forward.1} parent=0 // pred_check_branch
    %93 = sbr.rel (0) target = $region45
  $region44: #{net_forward.1} parent=0 // pred_region
    _
  $region45: #{net_forward.1} parent=0 // pred_fallthru
    _
  // Predicated region
  $region46: #{net_forward.1} parent=0 // pred_check
    _
  $region47: #{net_forward.1} parent=0 // pred_check_branch
    %95 = sbr.rel (0) target = $region49
  $region48: #{net_forward.1} parent=0 // pred_region
    _
  $region49: #{net_forward.1} parent=0 // pred_fallthru
    _
  // Predicated region
  $region50: #{net_forward.1} parent=0 // pred_check
    _
  $region51: #{net_forward.1} parent=0 // pred_check_branch
    %97 = sbr.rel (0) target = $region53
  $region52: #{net_forward.1} parent=0 // pred_region
    _
  $region53: #{net_forward.1} parent=0 // pred_fallthru
    _
  // Predicated region
  $region54: #{net_forward.1} parent=0 // pred_check
    _
  $region55: #{net_forward.1} parent=0 // pred_check_branch
    %99 = sbr.rel (0) target = $region57
  $region56: #{net_forward.1} parent=0 // pred_region
    _
  $region57: #{net_forward.1} parent=0 // pred_fallthru
    _
  // Predicated region
  $region58: #{net_forward.1} parent=0 // pred_check
    _
  $region59: #{net_forward.1} parent=0 // pred_check_branch
    %101 = sbr.rel (0) target = $region61
  $region60: #{net_forward.1} parent=0 // pred_region
    _
  $region61: #{net_forward.1} parent=0 // pred_fallthru
    _
  // Predicated region
  $region62: #{net_forward.1} parent=0 // pred_check
    _
  $region63: #{net_forward.1} parent=0 // pred_check_branch
    %103 = sbr.rel (0) target = $region65
  $region64: #{net_forward.1} parent=0 // pred_region
    _
  $region65: #{net_forward.1} parent=0 // pred_fallthru
    _
  // Predicated region
  $region66: #{net_forward.1} parent=0 // pred_check
    _
  $region67: #{net_forward.1} parent=0 // pred_check_branch
    %105 = sbr.rel (0) target = $region69
  $region68: #{net_forward.1} parent=0 // pred_region
    _
  $region69: #{net_forward.1} parent=0 // pred_fallthru
    _
  // Predicated region
  $region70: #{net_forward.1} parent=0 // pred_check
    _
  $region71: #{net_forward.1} parent=0 // pred_check_branch
    %107 = sbr.rel (0) target = $region73
  $region72: #{net_forward.1} parent=0 // pred_region
    _
  $region73: #{net_forward.1} parent=0 // pred_fallthru
    _
  // Predicated region
  $region74: #{net_forward.1} parent=0 // pred_check
    _
  $region75: #{net_forward.1} parent=0 // pred_check_branch
    %109 = sbr.rel (0) target = $region77
  $region76: #{net_forward.1} parent=0 // pred_region
    _
  $region77: #{net_forward.1} parent=0 // pred_fallthru
    _
  // Predicated region
  $region78: #{net_forward.1} parent=0 // pred_check
    _
  $region79: #{net_forward.1} parent=0 // pred_check_branch
    %111 = sbr.rel (0) target = $region81
  $region80: #{net_forward.1} parent=0 // pred_region
    _
  $region81: #{net_forward.1} parent=0 // pred_fallthru
    _
  // Predicated region
  $region82: #{net_forward.1} parent=0 // pred_check
    _
  $region83: #{net_forward.1} parent=0 // pred_check_branch
    %113 = sbr.rel (0) target = $region85
  $region84: #{net_forward.1} parent=0 // pred_region
    _
  $region85: #{net_forward.1} parent=0 // pred_fallthru
    _
  // Predicated region
  $region86: #{net_forward.1} parent=0 // pred_check
    _
  $region87: #{net_forward.1} parent=0 // pred_check_branch
    %115 = sbr.rel (0) target = $region89
  $region88: #{net_forward.1} parent=0 // pred_region
    _
  $region89: #{net_forward.1} parent=0 // pred_fallthru
    _
  // Predicated region
  $region90: #{net_forward.1} parent=0 // pred_check
    _
  $region91: #{net_forward.1} parent=0 // pred_check_branch
    %117 = sbr.rel (0) target = $region93
  $region92: #{net_forward.1} parent=0 // pred_region
    _
  $region93: #{net_forward.1} parent=0 // pred_fallthru
    _
  // Predicated region
  $region94: #{net_forward.1} parent=0 // pred_check
    _
  $region95: #{net_forward.1} parent=0 // pred_check_branch
    %119 = sbr.rel (0) target = $region97
  $region96: #{net_forward.1} parent=0 // pred_region
    _
  $region97: #{net_forward.1} parent=0 // pred_fallthru
    _
  // Predicated region
  $region98: #{net_forward.1} parent=0 // pred_check
    _
  $region99: #{net_forward.1} parent=0 // pred_check_branch
    %121 = sbr.rel (0) target = $region101
  $region100: #{net_forward.1} parent=0 // pred_region
    _
  $region101: #{net_forward.1} parent=0 // pred_fallthru
    _
  // Predicated region
  $region102: #{net_forward.1} parent=0 // pred_check
    _
  $region103: #{net_forward.1} parent=0 // pred_check_branch
    %123 = sbr.rel (0) target = $region105
  $region104: #{net_forward.1} parent=0 // pred_region
    _
  $region105: #{net_forward.1} parent=0 // pred_fallthru
    _
  // Predicated region
  $region106: #{net_forward.1} parent=0 // pred_check
    _
  $region107: #{net_forward.1} parent=0 // pred_check_branch
    %125 = sbr.rel (0) target = $region109
  $region108: #{net_forward.1} parent=0 // pred_region
    _
  $region109: #{net_forward.1} parent=0 // pred_fallthru
    _
  // Predicated region
  $region110: #{net_forward.1} parent=0 // pred_check
    _
  $region111: #{net_forward.1} parent=0 // pred_check_branch
    %127 = sbr.rel (0) target = $region113
  $region112: #{net_forward.1} parent=0 // pred_region
    _
  $region113: #{net_forward.1} parent=0 // pred_fallthru
    _
  // Predicated region
  $region114: #{net_forward.1} parent=0 // pred_check
    _
  $region115: #{net_forward.1} parent=0 // pred_check_branch
    %129 = sbr.rel (0) target = $region117
  $region116: #{net_forward.1} parent=0 // pred_region
    _
  $region117: #{net_forward.1} parent=0 // pred_fallthru
    _
  // Predicated region
  $region118: #{net_forward.1} parent=0 // pred_check
    _
  $region119: #{net_forward.1} parent=0 // pred_check_branch
    %131 = sbr.rel (0) target = $region121
  $region120: #{net_forward.1} parent=0 // pred_region
    _
  $region121: #{net_forward.1} parent=0 // pred_fallthru
    _
  // Predicated region
  $region122: #{net_forward.1} parent=0 // pred_check
    _
  $region123: #{net_forward.1} parent=0 // pred_check_branch
    %133 = sbr.rel (0) target = $region125
  $region124: #{net_forward.1} parent=0 // pred_region
    _
  $region125: #{net_forward.1} parent=0 // pred_fallthru
    _
  // Predicated region
  $region126: #{net_forward.1} parent=0 // pred_check
    _
  $region127: #{net_forward.1} parent=0 // pred_check_branch
    %135 = sbr.rel (0) target = $region129
  $region128: #{net_forward.1} parent=0 // pred_region
    _
  $region129: #{net_forward.1} parent=0 // pred_fallthru
    _
  // Predicated region
  $region130: #{net_forward.1} parent=0 // pred_check
    _
  $region131: #{net_forward.1} parent=0 // pred_check_branch
    %137 = sbr.rel (0) target = $region133
  $region132: #{net_forward.1} parent=0 // pred_region
    _
  $region133: #{net_forward.1} parent=0 // pred_fallthru
    _
  %v139 = vld [vmem:[%s1] sm:$0x1]
  %v140 = vld [vmem:[%s3] sm:$0x1]
  %v141 = vld [vmem:[%s5] sm:$0xff]
  %v142 = vld [vmem:[%s5 + $0x8] sm:$0xff]
  %v143 = vld [vmem:[%s5 + $0x10] sm:$0xff]
  %v144 = vld [vmem:[%s5 + $0x18] sm:$0xff]
  %v145 = vld [vmem:[%s5 + $0x20] sm:$0xff]
  %v146 = vld [vmem:[%s5 + $0x28] sm:$0xff]
  %v147 = vld [vmem:[%s5 + $0x30] sm:$0xff]
  %v148 = vld [vmem:[%s5 + $0x38] sm:$0xff]
  %v149 = vld [vmem:[%s5 + $0x40] sm:$0xff]
  %v150 = vld [vmem:[%s5 + $0x48] sm:$0xff]
  %v151 = vld [vmem:[%s5 + $0x50] sm:$0xff]
  %v152 = vld [vmem:[%s5 + $0x58] sm:$0xff]
  %v153 = vld [vmem:[%s5 + $0x60] sm:$0xff]
  %v154 = vld [vmem:[%s5 + $0x68] sm:$0xff]
  %v155 = vld [vmem:[%s5 + $0x70] sm:$0xff]
  %v156 = vld [vmem:[%s5 + $0x78] sm:$0xff]
  %v157 = vld [vmem:[%s7] sm:$0xf]
  %v158 = vld [vmem:[%s7 + $0x4] sm:$0xf]
  %v159 = vld [vmem:[%s7 + $0x8] sm:$0xf]
  %v160 = vld [vmem:[%s9] sm:$0x1]
  %v161 = vld [vmem:[%s11] sm:$0x3]
  %v162 = vld [vmem:[%s13] sm:$0xff]
  %v163 = vld [vmem:[%s13 + $0x8] sm:$0xff]
  %v164 = vld [vmem:[%s15] sm:$0xff]
  %v165 = vld [vmem:[%s15 + $0x8] sm:$0xff]
  %v166 = vld [vmem:[%s17] sm:$0xf]
  %v167 = vld [vmem:[%s17 + $0x4] sm:$0xf]
  %v168 = vld [vmem:[%s19] sm:$0xf]
  %v169 = vld [vmem:[%s19 + $0x4] sm:$0xf]
  %v170 = vld [vmem:[%s21] sm:$0xff]
  %v171 = vld [vmem:[%s21 + $0x8] sm:$0xff]
  %v172 = vld [vmem:[%s23] sm:$0xf]
  %v173 = vld [vmem:[%s23 + $0x4] sm:$0xf]
  %v174 = vld [vmem:[%s23 + $0x8] sm:$0xf]
  %v175 = vld [vmem:[%s25] sm:$0xf]
  %v176 = vld [vmem:[%s25 + $0x4] sm:$0xf]
  %v177 = vld [vmem:[%s25 + $0x8] sm:$0xf]
  %v178 = vld [vmem:[%s25 + $0xc] sm:$0xf]
  %v179 = vld [vmem:[%s25 + $0x10] sm:$0xf]
  %v180 = vld [vmem:[%s25 + $0x14] sm:$0xf]
  %v181 = vld [vmem:[%s25 + $0x18] sm:$0xf]
  %v182 = vld [vmem:[%s25 + $0x1c] sm:$0xf]
  %v183 = vld [vmem:[%s27] sm:$0xff]
  %v184 = vld [vmem:[%s27 + $0x8] sm:$0xff]
  %v185 = vld [vmem:[%s27 + $0x10] sm:$0xff]
  %v186 = vld [vmem:[%s27 + $0x18] sm:$0xff]
  %v187 = vld [vmem:[%s27 + $0x20] sm:$0xff]
  %v188 = vld [vmem:[%s27 + $0x28] sm:$0xff]
  %v189 = vld [vmem:[%s27 + $0x30] sm:$0xff]
  %v190 = vld [vmem:[%s27 + $0x38] sm:$0xff]
  %v191 = vld [vmem:[%s29] sm:$0xf]
  %v192 = vld [vmem:[%s29 + $0x4] sm:$0xf]
  %v193 = vld [vmem:[%s29 + $0x8] sm:$0xf]
  %v194 = vld [vmem:[%s29 + $0xc] sm:$0xf]
  %v195 = vld [vmem:[%s29 + $0x10] sm:$0xf]
  %v196 = vld [vmem:[%s29 + $0x14] sm:$0xf]
  %v197 = vld [vmem:[%s29 + $0x18] sm:$0xf]
  %v198 = vld [vmem:[%s29 + $0x1c] sm:$0xf]
  %v199 = vld [vmem:[%s31] sm:$0xff]
  %v200 = vld [vmem:[%s31 + $0x8] sm:$0xff]
  %v201 = vld [vmem:[%s31 + $0x10] sm:$0xff]
  %v202 = vld [vmem:[%s31 + $0x18] sm:$0xff]
  %v203 = vld [vmem:[%s31 + $0x20] sm:$0xff]
  %v204 = vld [vmem:[%s31 + $0x28] sm:$0xff]
  %v205 = vld [vmem:[%s31 + $0x30] sm:$0xff]
  %v206 = vld [vmem:[%s31 + $0x38] sm:$0xff]
  %v207 = vld [vmem:[%s33] sm:$0x3]
  %v208 = vld [vmem:[%s35] sm:$0x3]
  %v209 = vld [vmem:[%s37] sm:$0xff]
  %v210 = vld [vmem:[%s37 + $0x8] sm:$0xff]
  %v211 = vld [vmem:[%s37 + $0x10] sm:$0xff]
  %v212 = vld [vmem:[%s37 + $0x18] sm:$0xff]
  %v213 = vld [vmem:[%s37 + $0x20] sm:$0xff]
  %v214 = vld [vmem:[%s37 + $0x28] sm:$0xff]
  %v215 = vld [vmem:[%s37 + $0x30] sm:$0xff]
  %v216 = vld [vmem:[%s37 + $0x38] sm:$0xff]
  %v217 = vld [vmem:[%s39] sm:$0xf]
  %v218 = vld [vmem:[%s39 + $0x4] sm:$0xf]
  %v219 = vld [vmem:[%s39 + $0x8] sm:$0xf]
  %v220 = vld [vmem:[%s39 + $0xc] sm:$0xf]
  %v221 = vld [vmem:[%s39 + $0x10] sm:$0xf]
  %v222 = vld [vmem:[%s39 + $0x14] sm:$0xf]
  %v223 = vld [vmem:[%s39 + $0x18] sm:$0xf]
  %v224 = vld [vmem:[%s39 + $0x1c] sm:$0xf]
  %v225 = vld [vmem:[%s41] sm:$0xff]
  %v226 = vld [vmem:[%s41 + $0x8] sm:$0xff]
  %v227 = vld [vmem:[%s41 + $0x10] sm:$0xff]
  %v228 = vld [vmem:[%s41 + $0x18] sm:$0xff]
  %v229 = vld [vmem:[%s41 + $0x20] sm:$0xff]
  %v230 = vld [vmem:[%s41 + $0x28] sm:$0xff]
  %v231 = vld [vmem:[%s41 + $0x30] sm:$0xff]
  %v232 = vld [vmem:[%s41 + $0x38] sm:$0xff]
  %v233 = vld [vmem:[%s43] sm:$0xf]
  %v234 = vld [vmem:[%s43 + $0x4] sm:$0xf]
  %v235 = vld [vmem:[%s43 + $0x8] sm:$0xf]
  %v236 = vld [vmem:[%s43 + $0xc] sm:$0xf]
  %v237 = vld [vmem:[%s43 + $0x10] sm:$0xf]
  %v238 = vld [vmem:[%s43 + $0x14] sm:$0xf]
  %v239 = vld [vmem:[%s43 + $0x18] sm:$0xf]
  %v240 = vld [vmem:[%s43 + $0x1c] sm:$0xf]
  %v241 = vld [vmem:[%s45] sm:$0xff]
  %v242 = vld [vmem:[%s45 + $0x8] sm:$0xff]
  %v243 = vld [vmem:[%s45 + $0x10] sm:$0xff]
  %v244 = vld [vmem:[%s45 + $0x18] sm:$0xff]
  %v245 = vld [vmem:[%s45 + $0x20] sm:$0xff]
  %v246 = vld [vmem:[%s45 + $0x28] sm:$0xff]
  %v247 = vld [vmem:[%s45 + $0x30] sm:$0xff]
  %v248 = vld [vmem:[%s45 + $0x38] sm:$0xff]
  %v249 = vld [vmem:[%s47] sm:$0x3]
  %v250 = vld [vmem:[%s49] sm:$0x3]
  %v251 = vld [vmem:[%s51] sm:$0xff]
  %v252 = vld [vmem:[%s51 + $0x8] sm:$0xff]
  %v253 = vld [vmem:[%s51 + $0x10] sm:$0xff]
  %v254 = vld [vmem:[%s51 + $0x18] sm:$0xff]
  %v255 = vld [vmem:[%s51 + $0x20] sm:$0xff]
  %v256 = vld [vmem:[%s51 + $0x28] sm:$0xff]
  %v257 = vld [vmem:[%s51 + $0x30] sm:$0xff]
  %v258 = vld [vmem:[%s51 + $0x38] sm:$0xff]
  %v259 = vld [vmem:[%s53] sm:$0xf]
  %v260 = vld [vmem:[%s53 + $0x4] sm:$0xf]
  %v261 = vld [vmem:[%s53 + $0x8] sm:$0xf]
  %v262 = vld [vmem:[%s53 + $0xc] sm:$0xf]
  %v263 = vld [vmem:[%s53 + $0x10] sm:$0xf]
  %v264 = vld [vmem:[%s53 + $0x14] sm:$0xf]
  %v265 = vld [vmem:[%s53 + $0x18] sm:$0xf]
  %v266 = vld [vmem:[%s53 + $0x1c] sm:$0xf]
  %v267 = vld [vmem:[%s53 + $0x20] sm:$0xf]
  %v268 = vld [vmem:[%s53 + $0x24] sm:$0xf]
  %v269 = vld [vmem:[%s53 + $0x28] sm:$0xf]
  %v270 = vld [vmem:[%s53 + $0x2c] sm:$0xf]
  %v271 = vld [vmem:[%s53 + $0x30] sm:$0xf]
  %v272 = vld [vmem:[%s53 + $0x34] sm:$0xf]
  %v273 = vld [vmem:[%s53 + $0x38] sm:$0xf]
  %v274 = vld [vmem:[%s53 + $0x3c] sm:$0xf]
  %v275 = vld [vmem:[%s55] sm:$0xff]
  %v276 = vld [vmem:[%s55 + $0x8] sm:$0xff]
  %v277 = vld [vmem:[%s55 + $0x10] sm:$0xff]
  %v278 = vld [vmem:[%s55 + $0x18] sm:$0xff]
  %v279 = vld [vmem:[%s55 + $0x20] sm:$0xff]
  %v280 = vld [vmem:[%s55 + $0x28] sm:$0xff]
  %v281 = vld [vmem:[%s55 + $0x30] sm:$0xff]
  %v282 = vld [vmem:[%s55 + $0x38] sm:$0xff]
  %v283 = vld [vmem:[%s55 + $0x40] sm:$0xff]
  %v284 = vld [vmem:[%s55 + $0x48] sm:$0xff]
  %v285 = vld [vmem:[%s55 + $0x50] sm:$0xff]
  %v286 = vld [vmem:[%s55 + $0x58] sm:$0xff]
  %v287 = vld [vmem:[%s55 + $0x60] sm:$0xff]
  %v288 = vld [vmem:[%s55 + $0x68] sm:$0xff]
  %v289 = vld [vmem:[%s55 + $0x70] sm:$0xff]
  %v290 = vld [vmem:[%s55 + $0x78] sm:$0xff]
  %v291 = vld [vmem:[%s57] sm:$0xf]
  %v292 = vld [vmem:[%s57 + $0x4] sm:$0xf]
  %v293 = vld [vmem:[%s57 + $0x8] sm:$0xf]
  %v294 = vld [vmem:[%s57 + $0xc] sm:$0xf]
  %v295 = vld [vmem:[%s57 + $0x10] sm:$0xf]
  %v296 = vld [vmem:[%s57 + $0x14] sm:$0xf]
  %v297 = vld [vmem:[%s57 + $0x18] sm:$0xf]
  %v298 = vld [vmem:[%s57 + $0x1c] sm:$0xf]
  %v299 = vld [vmem:[%s57 + $0x20] sm:$0xf]
  %v300 = vld [vmem:[%s57 + $0x24] sm:$0xf]
  %v301 = vld [vmem:[%s57 + $0x28] sm:$0xf]
  %v302 = vld [vmem:[%s57 + $0x2c] sm:$0xf]
  %v303 = vld [vmem:[%s57 + $0x30] sm:$0xf]
  %v304 = vld [vmem:[%s57 + $0x34] sm:$0xf]
  %v305 = vld [vmem:[%s57 + $0x38] sm:$0xf]
  %v306 = vld [vmem:[%s57 + $0x3c] sm:$0xf]
  %v307 = vld [vmem:[%s59] sm:$0xff]
  %v308 = vld [vmem:[%s59 + $0x8] sm:$0xff]
  %v309 = vld [vmem:[%s59 + $0x10] sm:$0xff]
  %v310 = vld [vmem:[%s59 + $0x18] sm:$0xff]
  %v311 = vld [vmem:[%s59 + $0x20] sm:$0xff]
  %v312 = vld [vmem:[%s59 + $0x28] sm:$0xff]
  %v313 = vld [vmem:[%s59 + $0x30] sm:$0xff]
  %v314 = vld [vmem:[%s59 + $0x38] sm:$0xff]
  %v315 = vld [vmem:[%s59 + $0x40] sm:$0xff]
  %v316 = vld [vmem:[%s59 + $0x48] sm:$0xff]
  %v317 = vld [vmem:[%s59 + $0x50] sm:$0xff]
  %v318 = vld [vmem:[%s59 + $0x58] sm:$0xff]
  %v319 = vld [vmem:[%s59 + $0x60] sm:$0xff]
  %v320 = vld [vmem:[%s59 + $0x68] sm:$0xff]
  %v321 = vld [vmem:[%s59 + $0x70] sm:$0xff]
  %v322 = vld [vmem:[%s59 + $0x78] sm:$0xff]
  %v323 = vld [vmem:[%s61] sm:$0x1]
  %v324 = vld [vmem:[%s63] sm:$0x1]
  %v325 = vld [vmem:[%s65] sm:$0xff]
  %v326 = vld [vmem:[%s65 + $0x8] sm:$0xff]
  %v327 = vld [vmem:[%s65 + $0x10] sm:$0xff]
  %v328 = vld [vmem:[%s65 + $0x18] sm:$0xff]
  %v329 = vld [vmem:[%s65 + $0x20] sm:$0xff]
  %v330 = vld [vmem:[%s65 + $0x28] sm:$0xff]
  %v331 = vld [vmem:[%s65 + $0x30] sm:$0xff]
  %v332 = vld [vmem:[%s65 + $0x38] sm:$0xff]
  %v333 = vld [vmem:[%s65 + $0x40] sm:$0xff]
  %v334 = vld [vmem:[%s65 + $0x48] sm:$0xff]
  %v335 = vld [vmem:[%s65 + $0x50] sm:$0xff]
  %v336 = vld [vmem:[%s65 + $0x58] sm:$0xff]
  %v337 = vld [vmem:[%s65 + $0x60] sm:$0xff]
  %v338 = vld [vmem:[%s65 + $0x68] sm:$0xff]
  %v339 = vld [vmem:[%s65 + $0x70] sm:$0xff]
  %v340 = vld [vmem:[%s65 + $0x78] sm:$0xff]
  %v341 = vlaneseq
  %v342 = vshrl.u32 %v341, 7
  %v343 = vadd.s32 %v342, 8
  %v344 = vadd.s32 %v342, 16
  %v345 = vadd.s32 %v342, 24
  %v346 = vadd.s32 %v342, 32
  %v347 = vadd.s32 %v342, 40
  %v348 = vadd.s32 %v342, 48
  %v349 = vadd.s32 %v342, 56
  %v350 = vadd.s32 %v342, 64
  %v351 = vadd.s32 %v342, 72
  %v352 = vadd.s32 %v342, 80
  %v353 = vadd.s32 %v342, 88
  %v354 = vadd.s32 %v342, 96
  %v355 = vadd.s32 %v342, 104
  %v356 = vadd.s32 %v342, 112
  %v357 = vadd.s32 %v342, 120
  %v358 = vlaneseq
  %v359 = vand.u32 %v358, 127
  %v360 = vlaneseq
  %v361 = vshrl.u32 %v360, 7
  %v362 = vsub.s32 0, %v361
  %v363 = vrot.slane %v139, %v362
  %vm364 = vcmp.eq.s32.totalorder %v342, %v363
  %vm365 = vcmp.eq.s32.totalorder %v343, %v363
  %vm366 = vcmp.eq.s32.totalorder %v344, %v363
  %vm367 = vcmp.eq.s32.totalorder %v345, %v363
  %vm368 = vcmp.eq.s32.totalorder %v346, %v363
  %vm369 = vcmp.eq.s32.totalorder %v347, %v363
  %vm370 = vcmp.eq.s32.totalorder %v348, %v363
  %vm371 = vcmp.eq.s32.totalorder %v349, %v363
  %vm372 = vcmp.eq.s32.totalorder %v350, %v363
  %vm373 = vcmp.eq.s32.totalorder %v351, %v363
  %vm374 = vcmp.eq.s32.totalorder %v352, %v363
  %vm375 = vcmp.eq.s32.totalorder %v353, %v363
  %vm376 = vcmp.eq.s32.totalorder %v354, %v363
  %vm377 = vcmp.eq.s32.totalorder %v355, %v363
  %vm378 = vcmp.eq.s32.totalorder %v356, %v363
  %vm379 = vcmp.eq.s32.totalorder %v357, %v363
  %v380 = vsel %vm364, 1.0, 0.0
  %v381 = vsel %vm365, 1.0, 0.0
  %v382 = vsel %vm366, 1.0, 0.0
  %v383 = vsel %vm367, 1.0, 0.0
  %v384 = vsel %vm368, 1.0, 0.0
  %v385 = vsel %vm369, 1.0, 0.0
  %v386 = vsel %vm370, 1.0, 0.0
  %v387 = vsel %vm371, 1.0, 0.0
  %v388 = vsel %vm372, 1.0, 0.0
  %v389 = vsel %vm373, 1.0, 0.0
  %v390 = vsel %vm374, 1.0, 0.0
  %v391 = vsel %vm375, 1.0, 0.0
  %v392 = vsel %vm376, 1.0, 0.0
  %v393 = vsel %vm377, 1.0, 0.0
  %v394 = vsel %vm378, 1.0, 0.0
  %v395 = vsel %vm379, 1.0, 0.0
  %v396 = vpack.c.bf16 %v381, %v380
  %v397 = vpack.c.bf16 %v383, %v382
  %v398 = vpack.c.bf16 %v385, %v384
  %v399 = vpack.c.bf16 %v387, %v386
  %v400 = vpack.c.bf16 %v389, %v388
  %v401 = vpack.c.bf16 %v391, %v390
  %v402 = vpack.c.bf16 %v393, %v392
  %v403 = vpack.c.bf16 %v395, %v394
  %v404 = vlaneseq
  %v405 = vshrl.u32 %v404, 7
  %v406 = vsub.s32 0, %v405
  %v407 = vrot.slane %v140, %v406
  %vm408 = vcmp.eq.s32.totalorder %v342, %v407
  %vm409 = vcmp.eq.s32.totalorder %v343, %v407
  %vm410 = vcmp.eq.s32.totalorder %v344, %v407
  %vm411 = vcmp.eq.s32.totalorder %v345, %v407
  %vm412 = vcmp.eq.s32.totalorder %v346, %v407
  %vm413 = vcmp.eq.s32.totalorder %v347, %v407
  %vm414 = vcmp.eq.s32.totalorder %v348, %v407
  %vm415 = vcmp.eq.s32.totalorder %v349, %v407
  %vm416 = vcmp.eq.s32.totalorder %v350, %v407
  %vm417 = vcmp.eq.s32.totalorder %v351, %v407
  %vm418 = vcmp.eq.s32.totalorder %v352, %v407
  %vm419 = vcmp.eq.s32.totalorder %v353, %v407
  %vm420 = vcmp.eq.s32.totalorder %v354, %v407
  %vm421 = vcmp.eq.s32.totalorder %v355, %v407
  %vm422 = vcmp.eq.s32.totalorder %v356, %v407
  %vm423 = vcmp.eq.s32.totalorder %v357, %v407
  %v424 = vsel %vm408, 1.0, 0.0
  %v425 = vsel %vm409, 1.0, 0.0
  %v426 = vsel %vm410, 1.0, 0.0
  %v427 = vsel %vm411, 1.0, 0.0
  %v428 = vsel %vm412, 1.0, 0.0
  %v429 = vsel %vm413, 1.0, 0.0
  %v430 = vsel %vm414, 1.0, 0.0
  %v431 = vsel %vm415, 1.0, 0.0
  %v432 = vsel %vm416, 1.0, 0.0
  %v433 = vsel %vm417, 1.0, 0.0
  %v434 = vsel %vm418, 1.0, 0.0
  %v435 = vsel %vm419, 1.0, 0.0
  %v436 = vsel %vm420, 1.0, 0.0
  %v437 = vsel %vm421, 1.0, 0.0
  %v438 = vsel %vm422, 1.0, 0.0
  %v439 = vsel %vm423, 1.0, 0.0
  %v440 = vpack.c.bf16 %v425, %v424
  %v441 = vpack.c.bf16 %v427, %v426
  %v442 = vpack.c.bf16 %v429, %v428
  %v443 = vpack.c.bf16 %v431, %v430
  %v444 = vpack.c.bf16 %v433, %v432
  %v445 = vpack.c.bf16 %v435, %v434
  %v446 = vpack.c.bf16 %v437, %v436
  %v447 = vpack.c.bf16 %v439, %v438
  %448 = vset.pattern.permute.xlu0 0
  %449 = vperm.xlu0 %448, %v141
  %v450 = vpop.permute.xlu0 %449
  %451 = vset.pattern.permute.xlu0 0
  %452 = vperm.xlu0 %451, %v142
  %v453 = vpop.permute.xlu0 %452
  %454 = vset.pattern.permute.xlu0 0
  %455 = vperm.xlu0 %454, %v143
  %v456 = vpop.permute.xlu0 %455
  %457 = vset.pattern.permute.xlu0 0
  %458 = vperm.xlu0 %457, %v144
  %v459 = vpop.permute.xlu0 %458
  %460 = vset.pattern.permute.xlu0 0
  %461 = vperm.xlu0 %460, %v145
  %v462 = vpop.permute.xlu0 %461
  %463 = vset.pattern.permute.xlu0 0
  %464 = vperm.xlu0 %463, %v146
  %v465 = vpop.permute.xlu0 %464
  %466 = vset.pattern.permute.xlu0 0
  %467 = vperm.xlu0 %466, %v147
  %v468 = vpop.permute.xlu0 %467
  %469 = vset.pattern.permute.xlu0 0
  %470 = vperm.xlu0 %469, %v148
  %v471 = vpop.permute.xlu0 %470
  %472 = vset.pattern.permute.xlu0 0
  %473 = vperm.xlu0 %472, %v149
  %v474 = vpop.permute.xlu0 %473
  %475 = vset.pattern.permute.xlu0 0
  %476 = vperm.xlu0 %475, %v150
  %v477 = vpop.permute.xlu0 %476
  %478 = vset.pattern.permute.xlu0 0
  %479 = vperm.xlu0 %478, %v151
  %v480 = vpop.permute.xlu0 %479
  %481 = vset.pattern.permute.xlu0 0
  %482 = vperm.xlu0 %481, %v152
  %v483 = vpop.permute.xlu0 %482
  %484 = vset.pattern.permute.xlu0 0
  %485 = vperm.xlu0 %484, %v153
  %v486 = vpop.permute.xlu0 %485
  %487 = vset.pattern.permute.xlu0 0
  %488 = vperm.xlu0 %487, %v154
  %v489 = vpop.permute.xlu0 %488
  %490 = vset.pattern.permute.xlu0 0
  %491 = vperm.xlu0 %490, %v155
  %v492 = vpop.permute.xlu0 %491
  %493 = vset.pattern.permute.xlu0 0
  %494 = vperm.xlu0 %493, %v156
  %v495 = vpop.permute.xlu0 %494
  %vm496 = vcmp.eq.s32.totalorder %v359, %v450
  %vm497 = vcmp.eq.s32.totalorder %v359, %v453
  %vm498 = vcmp.eq.s32.totalorder %v359, %v456
  %vm499 = vcmp.eq.s32.totalorder %v359, %v459
  %vm500 = vcmp.eq.s32.totalorder %v359, %v462
  %vm501 = vcmp.eq.s32.totalorder %v359, %v465
  %vm502 = vcmp.eq.s32.totalorder %v359, %v468
  %vm503 = vcmp.eq.s32.totalorder %v359, %v471
  %vm504 = vcmp.eq.s32.totalorder %v359, %v474
  %vm505 = vcmp.eq.s32.totalorder %v359, %v477
  %vm506 = vcmp.eq.s32.totalorder %v359, %v480
  %vm507 = vcmp.eq.s32.totalorder %v359, %v483
  %vm508 = vcmp.eq.s32.totalorder %v359, %v486
  %vm509 = vcmp.eq.s32.totalorder %v359, %v489
  %vm510 = vcmp.eq.s32.totalorder %v359, %v492
  %vm511 = vcmp.eq.s32.totalorder %v359, %v495
  %v512 = vsel %vm496, 1.0, 0.0
  %v513 = vsel %vm497, 1.0, 0.0
  %v514 = vsel %vm498, 1.0, 0.0
  %v515 = vsel %vm499, 1.0, 0.0
  %v516 = vsel %vm500, 1.0, 0.0
  %v517 = vsel %vm501, 1.0, 0.0
  %v518 = vsel %vm502, 1.0, 0.0
  %v519 = vsel %vm503, 1.0, 0.0
  %v520 = vsel %vm504, 1.0, 0.0
  %v521 = vsel %vm505, 1.0, 0.0
  %v522 = vsel %vm506, 1.0, 0.0
  %v523 = vsel %vm507, 1.0, 0.0
  %v524 = vsel %vm508, 1.0, 0.0
  %v525 = vsel %vm509, 1.0, 0.0
  %v526 = vsel %vm510, 1.0, 0.0
  %v527 = vsel %vm511, 1.0, 0.0
  %v528 = vpack.c.bf16 %v513, %v512
  %v529 = vpack.c.bf16 %v515, %v514
  %v530 = vpack.c.bf16 %v517, %v516
  %v531 = vpack.c.bf16 %v519, %v518
  %v532 = vpack.c.bf16 %v521, %v520
  %v533 = vpack.c.bf16 %v523, %v522
  %v534 = vpack.c.bf16 %v525, %v524
  %v535 = vpack.c.bf16 %v527, %v526
  %537 = vset.pattern.permute.xlu0 0
  %538 = vperm.xlu0 %537, %v162
  %v539 = vpop.permute.xlu0 %538
  %542 = vset.pattern.permute.xlu0 0
  %543 = vperm.xlu0 %542, %v163
  %v544 = vpop.permute.xlu0 %543
  %v547 = vlaneseq
  %v548 = vshrl.u32 %v547, 7
  %v549 = vsub.s32 0, %v548
  %v550 = vrot.slane %v160, %v549
  %v552 = vmul.f32 %v539, %v550
  %v553 = vmul.f32 %v544, %v550
  %555 = vset.pattern.permute.xlu0 0
  %556 = vperm.xlu0 %555, %v164
  %v557 = vpop.permute.xlu0 %556
  %560 = vset.pattern.permute.xlu0 0
  %561 = vperm.xlu0 %560, %v165
  %v562 = vpop.permute.xlu0 %561
  %v564 = vadd.f32 %v552, %v557
  %v565 = vadd.f32 %v553, %v562
  %v566 = vand.u32 2147483647, %v564
  %vm567 = vcmp.le.f32.partialorder %v566, 0.7853982
  %vm568 = vcmp.lt.s32.totalorder %v564, 0
  %v569 = vand.u32 %v564, 2139095040
  %v570 = vshrl.u32 %v569, 23
  %v571 = vsub.s32 %v570, 127
  %v572 = vand.u32 2147483647, %v564
  %v573 = vand.u32 %v572, 8388607
  %v574 = vor.u32 %v573, 8388608
  %v575 = vsub.s32 0, %v574
  %v576 = vadd.s32 %v571, 1
  %vm577 = vcmp.gt.s32.totalorder %v576, 0
  %v578 = vsel %vm577, %v576, 0
  %v579 = vshrl.u32 %v578, 5
  %v580 = vand.u32 %v578, 31
  %v581 = vsub.s32 32, %v580
  %v582 = vshrl.u32 683565275, %v581
  %v583 = vshll.u32 683565275, %v580
  %v584 = vshrl.u32 2475754826, %v581
  %v585 = vor.u32 %v583, %v584
  %v586 = vshll.u32 2475754826, %v580
  %v587 = vshrl.u32 2131351028, %v581
  %v588 = vor.u32 %v586, %v587
  %v589 = vshll.u32 2131351028, %v580
  %v590 = vshrl.u32 2102212464, %v581
  %v591 = vor.u32 %v589, %v590
  %v592 = vshll.u32 2102212464, %v580
  %v593 = vshrl.u32 920167782, %v581
  %v594 = vor.u32 %v592, %v593
  %v595 = vshll.u32 920167782, %v580
  %v596 = vshrl.u32 1326507024, %v581
  %v597 = vor.u32 %v595, %v596
  %vm598 = vcmp.lt.s32.totalorder %v579, 1
  %vm599 = vcmp.lt.s32.totalorder %v579, 2
  %vm600 = vcmp.lt.s32.totalorder %v579, 3
  %vm601 = vcmp.lt.s32.totalorder %v579, 4
  %v602 = vsel %vm598, %v582, %v585
  %v603 = vsel %vm601, %v591, 2102212464
  %v604 = vsel %vm600, %v588, %v603
  %v605 = vsel %vm599, %v602, %v604
  %v606 = vsel %vm598, %v585, %v588
  %v607 = vsel %vm601, %v594, 920167782
  %v608 = vsel %vm600, %v591, %v607
  %v609 = vsel %vm599, %v606, %v608
  %v610 = vsel %vm598, %v588, %v591
  %v611 = vsel %vm601, %v597, 1326507024
  %v612 = vsel %vm600, %v594, %v611
  %v613 = vsel %vm599, %v610, %v612
  %v614 = vshll.u32 %v574, 8
  %v615 = vmul.u32.u64.compose %v614, %v613
  %v616 = vextract.low.u32 %v615
  %v617 = vextract.high.u32 %v615
  %v618 = vmul.u32.u64.compose %v614, %v609
  %v619 = vextract.low.u32 %v618
  %v620 = vextract.high.u32 %v618
  %v621 = vmul.u32 %v614, %v605
  %v622 = vadd.s32 %v617, %v619
  %vm623 = vc.u32 %v617, %v619
  %v624 = vadd.s32 %v620, 1
  %v625 = vsel %vm623, %v624, %v620
  %v626 = vadd.s32 %v621, %v625
  %v627 = vadd.s32 %v626, 536870912
  %v628 = vshrl.u32 %v627, 30
  %v629 = vshll.u32 %v628, 30
  %v630 = vsub.s32 %v626, %v629
  %vm631 = vcmp.lt.s32.totalorder %v630, 0
  %v632 = vsub.s32 0, %v630
  %v633 = vsel %vm631, %v632, %v630
  %v634 = vclz %v633
  %v635 = vsub.s32 %v634, 2
  %vm636 = vcmp.gt.s32.totalorder 0, %v635
  %v637 = vsel %vm636, 0, %v635
  %v638 = vsub.s32 32, %v637
  %v639 = vshll.u32 %v630, %v637
  %v640 = vshrl.u32 %v622, %v638
  %v641 = vor.u32 %v639, %v640
  %v642 = vsub.s32 4294967266, %v637
  %v643 = vadd.s32 %v642, 127
  %v644 = vshll.u32 %v643, 23
  %v645 = vor.u32 4788187, %v644
  %v646 = vand.u32 2147483647, %v645
  %v648 = vcvt.s32.f32 %v641
  %v649 = vmul.f32 %v648, %v646
  %v650 = vxor.u32 %v649, 2147483648
  %v651 = vsel %vm568, %v650, %v649
  %v652 = vsub.s32 4, %v628
  %v653 = vsel %vm568, %v652, %v628
  %v654 = vsel %vm567, %v564, %v651
  %v655 = vsel %vm567, 0, %v653
  %v656 = vcosq.f32.pop %v654
  %v657 = vsinq.f32.pop %v654
  %vm658 = vweird.f32 %v564
  %v659 = vand.u32 %v655, 3
  %vm660 = vcmp.lt.s32.totalorder %v659, 2
  %vm661 = vcmp.eq.s32.totalorder %v659, 0
  %v662 = vxor.u32 %v657, 2147483648
  %v663 = vsel %vm661, %v656, %v662
  %vm664 = vcmp.eq.s32.totalorder %v659, 2
  %v665 = vxor.u32 %v656, 2147483648
  %v666 = vsel %vm664, %v665, %v657
  %v667 = vsel %vm660, %v663, %v666
  %v668 = vsel %vm658, nan, %v667
  %v669 = vand.u32 2147483647, %v565
  %vm670 = vcmp.le.f32.partialorder %v669, 0.7853982
  %vm671 = vcmp.lt.s32.totalorder %v565, 0
  %v672 = vand.u32 %v565, 2139095040
  %v673 = vshrl.u32 %v672, 23
  %v674 = vsub.s32 %v673, 127
  %v675 = vand.u32 2147483647, %v565
  %v676 = vand.u32 %v675, 8388607
  %v677 = vor.u32 %v676, 8388608
  %v678 = vsub.s32 0, %v677
  %v679 = vadd.s32 %v674, 1
  %vm680 = vcmp.gt.s32.totalorder %v679, 0
  %v681 = vsel %vm680, %v679, 0
  %v682 = vshrl.u32 %v681, 5
  %v683 = vand.u32 %v681, 31
  %v684 = vsub.s32 32, %v683
  %v685 = vshrl.u32 683565275, %v684
  %v686 = vshll.u32 683565275, %v683
  %v687 = vshrl.u32 2475754826, %v684
  %v688 = vor.u32 %v686, %v687
  %v689 = vshll.u32 2475754826, %v683
  %v690 = vshrl.u32 2131351028, %v684
  %v691 = vor.u32 %v689, %v690
  %v692 = vshll.u32 2131351028, %v683
  %v693 = vshrl.u32 2102212464, %v684
  %v694 = vor.u32 %v692, %v693
  %v695 = vshll.u32 2102212464, %v683
  %v696 = vshrl.u32 920167782, %v684
  %v697 = vor.u32 %v695, %v696
  %v698 = vshll.u32 920167782, %v683
  %v699 = vshrl.u32 1326507024, %v684
  %v700 = vor.u32 %v698, %v699
  %vm701 = vcmp.lt.s32.totalorder %v682, 1
  %vm702 = vcmp.lt.s32.totalorder %v682, 2
  %vm703 = vcmp.lt.s32.totalorder %v682, 3
  %vm704 = vcmp.lt.s32.totalorder %v682, 4
  %v705 = vsel %vm701, %v685, %v688
  %v706 = vsel %vm704, %v694, 2102212464
  %v707 = vsel %vm703, %v691, %v706
  %v708 = vsel %vm702, %v705, %v707
  %v709 = vsel %vm701, %v688, %v691
  %v710 = vsel %vm704, %v697, 920167782
  %v711 = vsel %vm703, %v694, %v710
  %v712 = vsel %vm702, %v709, %v711
  %v713 = vsel %vm701, %v691, %v694
  %v714 = vsel %vm704, %v700, 1326507024
  %v715 = vsel %vm703, %v697, %v714
  %v716 = vsel %vm702, %v713, %v715
  %v717 = vshll.u32 %v677, 8
  %v718 = vmul.u32.u64.compose %v717, %v716
  %v719 = vextract.low.u32 %v718
  %v720 = vextract.high.u32 %v718
  %v721 = vmul.u32.u64.compose %v717, %v712
  %v722 = vextract.low.u32 %v721
  %v723 = vextract.high.u32 %v721
  %v724 = vmul.u32 %v717, %v708
  %v725 = vadd.s32 %v720, %v722
  %vm726 = vc.u32 %v720, %v722
  %v727 = vadd.s32 %v723, 1
  %v728 = vsel %vm726, %v727, %v723
  %v729 = vadd.s32 %v724, %v728
  %v730 = vadd.s32 %v729, 536870912
  %v731 = vshrl.u32 %v730, 30
  %v732 = vshll.u32 %v731, 30
  %v733 = vsub.s32 %v729, %v732
  %vm734 = vcmp.lt.s32.totalorder %v733, 0
  %v735 = vsub.s32 0, %v733
  %v736 = vsel %vm734, %v735, %v733
  %v737 = vclz %v736
  %v738 = vsub.s32 %v737, 2
  %vm739 = vcmp.gt.s32.totalorder 0, %v738
  %v740 = vsel %vm739, 0, %v738
  %v741 = vsub.s32 32, %v740
  %v742 = vshll.u32 %v733, %v740
  %v743 = vshrl.u32 %v725, %v741
  %v744 = vor.u32 %v742, %v743
  %v745 = vsub.s32 4294967266, %v740
  %v746 = vadd.s32 %v745, 127
  %v747 = vshll.u32 %v746, 23
  %v748 = vor.u32 4788187, %v747
  %v749 = vand.u32 2147483647, %v748
  %v751 = vcvt.s32.f32 %v744
  %v752 = vmul.f32 %v751, %v749
  %v753 = vxor.u32 %v752, 2147483648
  %v754 = vsel %vm671, %v753, %v752
  %v755 = vsub.s32 4, %v731
  %v756 = vsel %vm671, %v755, %v731
  %v757 = vsel %vm670, %v565, %v754
  %v758 = vsel %vm670, 0, %v756
  %v759 = vcosq.f32.pop %v757
  %v760 = vsinq.f32.pop %v757
  %vm761 = vweird.f32 %v565
  %v762 = vand.u32 %v758, 3
  %vm763 = vcmp.lt.s32.totalorder %v762, 2
  %vm764 = vcmp.eq.s32.totalorder %v762, 0
  %v765 = vxor.u32 %v760, 2147483648
  %v766 = vsel %vm764, %v759, %v765
  %vm767 = vcmp.eq.s32.totalorder %v762, 2
  %v768 = vxor.u32 %v759, 2147483648
  %v769 = vsel %vm767, %v768, %v760
  %v770 = vsel %vm763, %v766, %v769
  %v771 = vsel %vm761, nan, %v770
  %v772 = vpack.c.bf16 %v771, %v668
  %v775 = vunpack.c.l.b16 %v168
  %v776 = vunpack.c.l.b16 %v169
  %v777 = vpack.c.b16 %v776, %v775
  %vm778 = vcmask 130048
  %v780 = vsel %vm778, %v777, 0
  %782 = vmatprep.subr.bf16.mxu0 0
  %783 = vmatpush1.bf16.msra.mxu0 %v772
  %784 = vmatprep.subr.bf16.mxu0 0
  %785 = vmatpush1.bf16.msra.mxu0 0
  %786 = vmatprep.subr.bf16.mxu0 0
  %787 = vmatpush1.bf16.msra.mxu0 0
  %788 = vmatprep.subr.bf16.mxu0 0
  %789 = vmatpush1.bf16.msra.mxu0 0
  %790 = vmatprep.subr.bf16.mxu0 0
  %791 = vmatpush1.bf16.msra.mxu0 0
  %792 = vmatprep.subr.bf16.mxu0 0
  %793 = vmatpush1.bf16.msra.mxu0 0
  %794 = vmatprep.subr.bf16.mxu0 0
  %795 = vmatpush1.bf16.msra.mxu0 0
  %796 = vmatprep.subr.bf16.mxu0 0
  %797 = vmatpush1.bf16.msra.mxu0 0
  %798 = vmatprep.subr.bf16.mxu0 0
  %799 = vmatpush1.bf16.msra.mxu0 0
  %800 = vmatprep.subr.bf16.mxu0 0
  %801 = vmatpush1.bf16.msra.mxu0 0
  %802 = vmatprep.subr.bf16.mxu0 0
  %803 = vmatpush1.bf16.msra.mxu0 0
  %804 = vmatprep.subr.bf16.mxu0 0
  %805 = vmatpush1.bf16.msra.mxu0 0
  %806 = vmatprep.subr.bf16.mxu0 0
  %807 = vmatpush1.bf16.msra.mxu0 0
  %808 = vmatprep.subr.bf16.mxu0 0
  %809 = vmatpush1.bf16.msra.mxu0 0
  %810 = vmatprep.subr.bf16.mxu0 0
  %811 = vmatpush1.bf16.msra.mxu0 0
  %812 = vmatprep.subr.bf16.mxu0 0
  %813 = vmatpush1.bf16.msra.mxu0 0
  %814 = vmatprep.mubr.bf16.mxu0 0
  %815 = vmatmul.mubr.bf16.gmra.mrb[0].mxu0 %v780
  %v816 = vpop.f32.mrb[0].mxu0
  %v817 = vadd.f32 0.0, %v816
  %v818 = vpop.f32.mrb[0].mxu0
  %v819 = vpop.f32.mrb[0].mxu0
  %v820 = vadd.f32 0.0, %v819
  %v821 = vpop.f32.mrb[0].mxu0
  %822 = vdwg.mxu0
  %v825 = vunpack.c.l.b16 %v166
  %v826 = vunpack.c.l.b16 %v167
  %v827 = vpack.c.b16 %v826, %v825
  %vm828 = vcmask 31744
  %v830 = vsel %vm828, %v827, 0
  %vm832 = vcmask 1041408
  %v834 = vsel %vm832, %v161, 0
  %836 = vmatprep.subr.bf16.mxu0 0
  %837 = vmatpush1.bf16.msra.mxu0 %v834
  %838 = vmatprep.subr.bf16.mxu0 0
  %839 = vmatpush1.bf16.msra.mxu0 0
  %840 = vmatprep.subr.bf16.mxu0 0
  %841 = vmatpush1.bf16.msra.mxu0 0
  %842 = vmatprep.subr.bf16.mxu0 0
  %843 = vmatpush1.bf16.msra.mxu0 0
  %844 = vmatprep.subr.bf16.mxu0 0
  %845 = vmatpush1.bf16.msra.mxu0 0
  %846 = vmatprep.subr.bf16.mxu0 0
  %847 = vmatpush1.bf16.msra.mxu0 0
  %848 = vmatprep.subr.bf16.mxu0 0
  %849 = vmatpush1.bf16.msra.mxu0 0
  %850 = vmatprep.subr.bf16.mxu0 0
  %851 = vmatpush1.bf16.msra.mxu0 0
  %852 = vmatprep.subr.bf16.mxu0 0
  %853 = vmatpush1.bf16.msra.mxu0 0
  %854 = vmatprep.subr.bf16.mxu0 0
  %855 = vmatpush1.bf16.msra.mxu0 0
  %856 = vmatprep.subr.bf16.mxu0 0
  %857 = vmatpush1.bf16.msra.mxu0 0
  %858 = vmatprep.subr.bf16.mxu0 0
  %859 = vmatpush1.bf16.msra.mxu0 0
  %860 = vmatprep.subr.bf16.mxu0 0
  %861 = vmatpush1.bf16.msra.mxu0 0
  %862 = vmatprep.subr.bf16.mxu0 0
  %863 = vmatpush1.bf16.msra.mxu0 0
  %864 = vmatprep.subr.bf16.mxu0 0
  %865 = vmatpush1.bf16.msra.mxu0 0
  %866 = vmatprep.subr.bf16.mxu0 0
  %867 = vmatpush1.bf16.msra.mxu0 0
  %868 = vmatprep.mubr.bf16.mxu0 0
  %869 = vmatmul.mubr.bf16.gmra.mrb[0].mxu0 %v830
  %v870 = vpop.f32.mrb[0].mxu0
  %v871 = vadd.f32 %v817, %v870
  %v872 = vpop.f32.mrb[0].mxu0
  %v873 = vpop.f32.mrb[0].mxu0
  %v874 = vadd.f32 %v820, %v873
  %v875 = vpop.f32.mrb[0].mxu0
  %876 = vdwg.mxu0
  %878 = vset.pattern.permute.xlu0 0
  %879 = vperm.xlu0 %878, %v170
  %v880 = vpop.permute.xlu0 %879
  %883 = vset.pattern.permute.xlu0 0
  %884 = vperm.xlu0 %883, %v171
  %v885 = vpop.permute.xlu0 %884
  %v887 = vadd.f32 %v871, %v880
  %v888 = vadd.f32 %v874, %v885
  %v889 = vpack.c.bf16 %v888, %v887
  %v893 = vunpack.c.l.b16 %v172
  %v894 = vunpack.c.l.b16 %v173
  %v895 = vunpack.c.l.b16 %v174
  %v896 = vpack.c.b16 %v894, %v893
  %v897 = vpack.c.b16 %v895, %v895
  %v899 = vsel %vm778, %v896, 0
  %v902 = vsel %vm778, %v897, 0
  %904 = vmatprep.subr.bf16.mxu0 0
  %905 = vmatpush1.bf16.msra.mxu0 %v889
  %906 = vmatprep.subr.bf16.mxu0 0
  %907 = vmatpush1.bf16.msra.mxu0 0
  %908 = vmatprep.subr.bf16.mxu0 0
  %909 = vmatpush1.bf16.msra.mxu0 0
  %910 = vmatprep.subr.bf16.mxu0 0
  %911 = vmatpush1.bf16.msra.mxu0 0
  %912 = vmatprep.subr.bf16.mxu0 0
  %913 = vmatpush1.bf16.msra.mxu0 0
  %914 = vmatprep.subr.bf16.mxu0 0
  %915 = vmatpush1.bf16.msra.mxu0 0
  %916 = vmatprep.subr.bf16.mxu0 0
  %917 = vmatpush1.bf16.msra.mxu0 0
  %918 = vmatprep.subr.bf16.mxu0 0
  %919 = vmatpush1.bf16.msra.mxu0 0
  %920 = vmatprep.subr.bf16.mxu0 0
  %921 = vmatpush1.bf16.msra.mxu0 0
  %922 = vmatprep.subr.bf16.mxu0 0
  %923 = vmatpush1.bf16.msra.mxu0 0
  %924 = vmatprep.subr.bf16.mxu0 0
  %925 = vmatpush1.bf16.msra.mxu0 0
  %926 = vmatprep.subr.bf16.mxu0 0
  %927 = vmatpush1.bf16.msra.mxu0 0
  %928 = vmatprep.subr.bf16.mxu0 0
  %929 = vmatpush1.bf16.msra.mxu0 0
  %930 = vmatprep.subr.bf16.mxu0 0
  %931 = vmatpush1.bf16.msra.mxu0 0
  %932 = vmatprep.subr.bf16.mxu0 0
  %933 = vmatpush1.bf16.msra.mxu0 0
  %934 = vmatprep.subr.bf16.mxu0 0
  %935 = vmatpush1.bf16.msra.mxu0 0
  %936 = vmatprep.mubr.bf16.mxu0 0
  %937 = vmatmul.mubr.bf16.gmra.mrb[0].mxu0 %v899
  %v938 = vpop.f32.mrb[0].mxu0
  %v939 = vadd.f32 0.0, %v938
  %v940 = vpop.f32.mrb[0].mxu0
  %v941 = vpop.f32.mrb[0].mxu0
  %v942 = vadd.f32 0.0, %v941
  %v943 = vpop.f32.mrb[0].mxu0
  %944 = vmatprep.mubr.bf16.mxu0 0
  %945 = vmatmul.mubr.bf16.gmra.mrb[0].mxu0 %v902
  %v946 = vpop.f32.mrb[0].mxu0
  %v947 = vadd.f32 0.0, %v946
  %v948 = vpop.f32.mrb[0].mxu0
  %v949 = vpop.f32.mrb[0].mxu0
  %v950 = vpop.f32.mrb[0].mxu0
  %951 = vdwg.mxu0
  %953 = vset.pattern.permute.xlu0 0
  %954 = vperm.xlu0 %953, %v183
  %v955 = vpop.permute.xlu0 %954
  %958 = vset.pattern.permute.xlu0 0
  %959 = vperm.xlu0 %958, %v184
  %v960 = vpop.permute.xlu0 %959
  %963 = vset.pattern.permute.xlu0 0
  %964 = vperm.xlu0 %963, %v185
  %v965 = vpop.permute.xlu0 %964
  %968 = vset.pattern.permute.xlu0 0
  %969 = vperm.xlu0 %968, %v186
  %v970 = vpop.permute.xlu0 %969
  %973 = vset.pattern.permute.xlu0 0
  %974 = vperm.xlu0 %973, %v187
  %v975 = vpop.permute.xlu0 %974
  %978 = vset.pattern.permute.xlu0 0
  %979 = vperm.xlu0 %978, %v188
  %v980 = vpop.permute.xlu0 %979
  %983 = vset.pattern.permute.xlu0 0
  %984 = vperm.xlu0 %983, %v189
  %v985 = vpop.permute.xlu0 %984
  %988 = vset.pattern.permute.xlu0 0
  %989 = vperm.xlu0 %988, %v190
  %v990 = vpop.permute.xlu0 %989
  %v1000 = vunpack.c.l.b16 %v175
  %v1001 = vunpack.c.l.b16 %v176
  %v1002 = vunpack.c.l.b16 %v177
  %v1003 = vunpack.c.l.b16 %v178
  %v1004 = vunpack.c.l.b16 %v179
  %v1005 = vunpack.c.l.b16 %v180
  %v1006 = vunpack.c.l.b16 %v181
  %v1007 = vunpack.c.l.b16 %v182
  %v1008 = vpack.c.b16 %v1001, %v1000
  %v1009 = vpack.c.b16 %v1003, %v1002
  %v1010 = vpack.c.b16 %v1005, %v1004
  %v1011 = vpack.c.b16 %v1007, %v1006
  %v1015 = vunpack.c.l.b16 %v157
  %v1016 = vunpack.c.l.b16 %v158
  %v1017 = vunpack.c.l.b16 %v159
  %v1018 = vpack.c.b16 %v1016, %v1015
  %v1019 = vpack.c.b16 %v1017, %v1017
  %vm1021 = vcmask 195584
  %v1023 = vsel %vm1021, %v1008, 0
  %v1026 = vsel %vm1021, %v1009, 0
  %v1029 = vsel %vm1021, %v1010, 0
  %v1032 = vsel %vm1021, %v1011, 0
  %vm1034 = vcmask 1043456
  %v1036 = vsel %vm1034, %v1019, 0
  %1038 = vmatprep.subr.bf16.mxu0 0
  %1039 = vmatpush1.bf16.msra.mxu0 %v1018
  %1040 = vmatprep.subr.bf16.mxu0 0
  %1041 = vmatpush1.bf16.msra.mxu0 %v1036
  %1042 = vmatprep.subr.bf16.mxu0 0
  %1043 = vmatpush1.bf16.msra.mxu0 0
  %1044 = vmatprep.subr.bf16.mxu0 0
  %1045 = vmatpush1.bf16.msra.mxu0 0
  %1046 = vmatprep.subr.bf16.mxu0 0
  %1047 = vmatpush1.bf16.msra.mxu0 0
  %1048 = vmatprep.subr.bf16.mxu0 0
  %1049 = vmatpush1.bf16.msra.mxu0 0
  %1050 = vmatprep.subr.bf16.mxu0 0
  %1051 = vmatpush1.bf16.msra.mxu0 0
  %1052 = vmatprep.subr.bf16.mxu0 0
  %1053 = vmatpush1.bf16.msra.mxu0 0
  %1054 = vmatprep.subr.bf16.mxu0 0
  %1055 = vmatpush1.bf16.msra.mxu0 0
  %1056 = vmatprep.subr.bf16.mxu0 0
  %1057 = vmatpush1.bf16.msra.mxu0 0
  %1058 = vmatprep.subr.bf16.mxu0 0
  %1059 = vmatpush1.bf16.msra.mxu0 0
  %1060 = vmatprep.subr.bf16.mxu0 0
  %1061 = vmatpush1.bf16.msra.mxu0 0
  %1062 = vmatprep.subr.bf16.mxu0 0
  %1063 = vmatpush1.bf16.msra.mxu0 0
  %1064 = vmatprep.subr.bf16.mxu0 0
  %1065 = vmatpush1.bf16.msra.mxu0 0
  %1066 = vmatprep.subr.bf16.mxu0 0
  %1067 = vmatpush1.bf16.msra.mxu0 0
  %1068 = vmatprep.subr.bf16.mxu0 0
  %1069 = vmatpush1.bf16.msra.mxu0 0
  %1070 = vmatprep.mubr.bf16.mxu0 0
  %1071 = vmatmul.mubr.bf16.gmra.mrb[0].mxu0 %v1023
  %v1072 = vpop.f32.mrb[0].mxu0
  %v1073 = vadd.f32 %v955, %v1072
  %v1074 = vpop.f32.mrb[0].mxu0
  %v1075 = vpop.f32.mrb[0].mxu0
  %v1076 = vadd.f32 %v960, %v1075
  %v1077 = vpop.f32.mrb[0].mxu0
  %1078 = vmatprep.mubr.bf16.mxu0 0
  %1079 = vmatmul.mubr.bf16.gmra.mrb[0].mxu0 %v1026
  %v1080 = vpop.f32.mrb[0].mxu0
  %v1081 = vadd.f32 %v965, %v1080
  %v1082 = vpop.f32.mrb[0].mxu0
  %v1083 = vpop.f32.mrb[0].mxu0
  %v1084 = vadd.f32 %v970, %v1083
  %v1085 = vpop.f32.mrb[0].mxu0
  %1086 = vmatprep.mubr.bf16.mxu0 0
  %1087 = vmatmul.mubr.bf16.gmra.mrb[0].mxu0 %v1029
  %v1088 = vpop.f32.mrb[0].mxu0
  %v1089 = vadd.f32 %v975, %v1088
  %v1090 = vpop.f32.mrb[0].mxu0
  %v1091 = vpop.f32.mrb[0].mxu0
  %v1092 = vadd.f32 %v980, %v1091
  %v1093 = vpop.f32.mrb[0].mxu0
  %1094 = vmatprep.mubr.bf16.mxu0 0
  %1095 = vmatmul.mubr.bf16.gmra.mrb[0].mxu0 %v1032
  %v1096 = vpop.f32.mrb[0].mxu0
  %v1097 = vadd.f32 %v985, %v1096
  %v1098 = vpop.f32.mrb[0].mxu0
  %v1099 = vpop.f32.mrb[0].mxu0
  %v1100 = vadd.f32 %v990, %v1099
  %v1101 = vpop.f32.mrb[0].mxu0
  %1102 = vdwg.mxu0
  %1104 = vset.pattern.permute.xlu0 0
  %1105 = vperm.xlu0 %1104, %v199
  %v1106 = vpop.permute.xlu0 %1105
  %1109 = vset.pattern.permute.xlu0 0
  %1110 = vperm.xlu0 %1109, %v200
  %v1111 = vpop.permute.xlu0 %1110
  %1114 = vset.pattern.permute.xlu0 0
  %1115 = vperm.xlu0 %1114, %v201
  %v1116 = vpop.permute.xlu0 %1115
  %1119 = vset.pattern.permute.xlu0 0
  %1120 = vperm.xlu0 %1119, %v202
  %v1121 = vpop.permute.xlu0 %1120
  %1124 = vset.pattern.permute.xlu0 0
  %1125 = vperm.xlu0 %1124, %v203
  %v1126 = vpop.permute.xlu0 %1125
  %1129 = vset.pattern.permute.xlu0 0
  %1130 = vperm.xlu0 %1129, %v204
  %v1131 = vpop.permute.xlu0 %1130
  %1134 = vset.pattern.permute.xlu0 0
  %1135 = vperm.xlu0 %1134, %v205
  %v1136 = vpop.permute.xlu0 %1135
  %1139 = vset.pattern.permute.xlu0 0
  %1140 = vperm.xlu0 %1139, %v206
  %v1141 = vpop.permute.xlu0 %1140
  %v1151 = vunpack.c.l.b16 %v191
  %v1152 = vunpack.c.l.b16 %v192
  %v1153 = vunpack.c.l.b16 %v193
  %v1154 = vunpack.c.l.b16 %v194
  %v1155 = vunpack.c.l.b16 %v195
  %v1156 = vunpack.c.l.b16 %v196
  %v1157 = vunpack.c.l.b16 %v197
  %v1158 = vunpack.c.l.b16 %v198
  %v1159 = vpack.c.b16 %v1152, %v1151
  %v1160 = vpack.c.b16 %v1154, %v1153
  %v1161 = vpack.c.b16 %v1156, %v1155
  %v1162 = vpack.c.b16 %v1158, %v1157
  %v1164 = vsel %vm1021, %v1159, 0
  %v1167 = vsel %vm1021, %v1160, 0
  %v1170 = vsel %vm1021, %v1161, 0
  %v1173 = vsel %vm1021, %v1162, 0
  %1175 = vmatprep.subr.bf16.mxu0 0
  %1176 = vmatpush1.bf16.msra.mxu0 %v1018
  %1177 = vmatprep.subr.bf16.mxu0 0
  %1178 = vmatpush1.bf16.msra.mxu0 %v1036
  %1179 = vmatprep.subr.bf16.mxu0 0
  %1180 = vmatpush1.bf16.msra.mxu0 0
  %1181 = vmatprep.subr.bf16.mxu0 0
  %1182 = vmatpush1.bf16.msra.mxu0 0
  %1183 = vmatprep.subr.bf16.mxu0 0
  %1184 = vmatpush1.bf16.msra.mxu0 0
  %1185 = vmatprep.subr.bf16.mxu0 0
  %1186 = vmatpush1.bf16.msra.mxu0 0
  %1187 = vmatprep.subr.bf16.mxu0 0
  %1188 = vmatpush1.bf16.msra.mxu0 0
  %1189 = vmatprep.subr.bf16.mxu0 0
  %1190 = vmatpush1.bf16.msra.mxu0 0
  %1191 = vmatprep.subr.bf16.mxu0 0
  %1192 = vmatpush1.bf16.msra.mxu0 0
  %1193 = vmatprep.subr.bf16.mxu0 0
  %1194 = vmatpush1.bf16.msra.mxu0 0
  %1195 = vmatprep.subr.bf16.mxu0 0
  %1196 = vmatpush1.bf16.msra.mxu0 0
  %1197 = vmatprep.subr.bf16.mxu0 0
  %1198 = vmatpush1.bf16.msra.mxu0 0
  %1199 = vmatprep.subr.bf16.mxu0 0
  %1200 = vmatpush1.bf16.msra.mxu0 0
  %1201 = vmatprep.subr.bf16.mxu0 0
  %1202 = vmatpush1.bf16.msra.mxu0 0
  %1203 = vmatprep.subr.bf16.mxu0 0
  %1204 = vmatpush1.bf16.msra.mxu0 0
  %1205 = vmatprep.subr.bf16.mxu0 0
  %1206 = vmatpush1.bf16.msra.mxu0 0
  %1207 = vmatprep.mubr.bf16.mxu0 0
  %1208 = vmatmul.mubr.bf16.gmra.mrb[0].mxu0 %v1164
  %v1209 = vpop.f32.mrb[0].mxu0
  %v1210 = vadd.f32 %v1106, %v1209
  %v1211 = vpop.f32.mrb[0].mxu0
  %v1212 = vpop.f32.mrb[0].mxu0
  %v1213 = vadd.f32 %v1111, %v1212
  %v1214 = vpop.f32.mrb[0].mxu0
  %1215 = vmatprep.mubr.bf16.mxu0 0
  %1216 = vmatmul.mubr.bf16.gmra.mrb[0].mxu0 %v1167
  %v1217 = vpop.f32.mrb[0].mxu0
  %v1218 = vadd.f32 %v1116, %v1217
  %v1219 = vpop.f32.mrb[0].mxu0
  %v1220 = vpop.f32.mrb[0].mxu0
  %v1221 = vadd.f32 %v1121, %v1220
  %v1222 = vpop.f32.mrb[0].mxu0
  %1223 = vmatprep.mubr.bf16.mxu0 0
  %1224 = vmatmul.mubr.bf16.gmra.mrb[0].mxu0 %v1170
  %v1225 = vpop.f32.mrb[0].mxu0
  %v1226 = vadd.f32 %v1126, %v1225
  %v1227 = vpop.f32.mrb[0].mxu0
  %v1228 = vpop.f32.mrb[0].mxu0
  %v1229 = vadd.f32 %v1131, %v1228
  %v1230 = vpop.f32.mrb[0].mxu0
  %1231 = vmatprep.mubr.bf16.mxu0 0
  %1232 = vmatmul.mubr.bf16.gmra.mrb[0].mxu0 %v1173
  %v1233 = vpop.f32.mrb[0].mxu0
  %v1234 = vadd.f32 %v1136, %v1233
  %v1235 = vpop.f32.mrb[0].mxu0
  %v1236 = vpop.f32.mrb[0].mxu0
  %v1237 = vadd.f32 %v1141, %v1236
  %v1238 = vpop.f32.mrb[0].mxu0
  %1239 = vdwg.mxu0
  %v1240 = vpack.c.bf16 %v1076, %v1073
  %v1241 = vpack.c.bf16 %v1084, %v1081
  %v1242 = vpack.c.bf16 %v1092, %v1089
  %v1243 = vpack.c.bf16 %v1100, %v1097
  %1244 = vmatprep.subr.bf16.mxu0 0
  %1245 = vmatpush1.bf16.msra.mxu0 %v396
  %1246 = vmatprep.subr.bf16.mxu0 0
  %1247 = vmatpush1.bf16.msra.mxu0 %v397
  %1248 = vmatprep.subr.bf16.mxu0 0
  %1249 = vmatpush1.bf16.msra.mxu0 %v398
  %1250 = vmatprep.subr.bf16.mxu0 0
  %1251 = vmatpush1.bf16.msra.mxu0 %v399
  %1252 = vmatprep.subr.bf16.mxu0 0
  %1253 = vmatpush1.bf16.msra.mxu0 %v400
  %1254 = vmatprep.subr.bf16.mxu0 0
  %1255 = vmatpush1.bf16.msra.mxu0 %v401
  %1256 = vmatprep.subr.bf16.mxu0 0
  %1257 = vmatpush1.bf16.msra.mxu0 %v402
  %1258 = vmatprep.subr.bf16.mxu0 0
  %1259 = vmatpush1.bf16.msra.mxu0 %v403
  %1260 = vmatprep.subr.bf16.mxu0 0
  %1261 = vmatpush1.bf16.msra.mxu0 0
  %1262 = vmatprep.subr.bf16.mxu0 0
  %1263 = vmatpush1.bf16.msra.mxu0 0
  %1264 = vmatprep.subr.bf16.mxu0 0
  %1265 = vmatpush1.bf16.msra.mxu0 0
  %1266 = vmatprep.subr.bf16.mxu0 0
  %1267 = vmatpush1.bf16.msra.mxu0 0
  %1268 = vmatprep.subr.bf16.mxu0 0
  %1269 = vmatpush1.bf16.msra.mxu0 0
  %1270 = vmatprep.subr.bf16.mxu0 0
  %1271 = vmatpush1.bf16.msra.mxu0 0
  %1272 = vmatprep.subr.bf16.mxu0 0
  %1273 = vmatpush1.bf16.msra.mxu0 0
  %1274 = vmatprep.subr.bf16.mxu0 0
  %1275 = vmatpush1.bf16.msra.mxu0 0
  %1276 = vmatprep.mubr.bf16.mxu0 0
  %1277 = vmatmul.mubr.bf16.gmra.mrb[0].mxu0 %v1240
  %v1278 = vpop.f32.mrb[0].mxu0
  %v1279 = vadd.f32 0.0, %v1278
  %v1280 = vpop.f32.mrb[0].mxu0
  %v1281 = vpop.f32.mrb[0].mxu0
  %v1282 = vadd.f32 0.0, %v1281
  %v1283 = vpop.f32.mrb[0].mxu0
  %1284 = vmatprep.mubr.bf16.mxu0 0
  %1285 = vmatmul.mubr.bf16.gmra.mrb[0].mxu0 %v1241
  %v1286 = vpop.f32.mrb[0].mxu0
  %v1287 = vadd.f32 0.0, %v1286
  %v1288 = vpop.f32.mrb[0].mxu0
  %v1289 = vpop.f32.mrb[0].mxu0
  %v1290 = vadd.f32 0.0, %v1289
  %v1291 = vpop.f32.mrb[0].mxu0
  %1292 = vmatprep.mubr.bf16.mxu0 0
  %1293 = vmatmul.mubr.bf16.gmra.mrb[0].mxu0 %v1242
  %v1294 = vpop.f32.mrb[0].mxu0
  %v1295 = vadd.f32 0.0, %v1294
  %v1296 = vpop.f32.mrb[0].mxu0
  %v1297 = vpop.f32.mrb[0].mxu0
  %v1298 = vadd.f32 0.0, %v1297
  %v1299 = vpop.f32.mrb[0].mxu0
  %1300 = vmatprep.mubr.bf16.mxu0 0
  %1301 = vmatmul.mubr.bf16.gmra.mrb[0].mxu0 %v1243
  %v1302 = vpop.f32.mrb[0].mxu0
  %v1303 = vadd.f32 0.0, %v1302
  %v1304 = vpop.f32.mrb[0].mxu0
  %v1305 = vpop.f32.mrb[0].mxu0
  %v1306 = vadd.f32 0.0, %v1305
  %v1307 = vpop.f32.mrb[0].mxu0
  %1308 = vdwg.mxu0
  %vm1309 = vcmask 523264
  %v1311 = vsel %vm1309, %v208, 0
  %1313 = vmatprep.subr.bf16.mxu0 0
  %1314 = vmatpush1.bf16.msra.mxu0 %v1240
  %1315 = vmatprep.subr.bf16.mxu0 0
  %1316 = vmatpush1.bf16.msra.mxu0 %v1241
  %1317 = vmatprep.subr.bf16.mxu0 0
  %1318 = vmatpush1.bf16.msra.mxu0 %v1242
  %1319 = vmatprep.subr.bf16.mxu0 0
  %1320 = vmatpush1.bf16.msra.mxu0 %v1243
  %1321 = vmatprep.subr.bf16.mxu0 0
  %1322 = vmatpush1.bf16.msra.mxu0 0
  %1323 = vmatprep.subr.bf16.mxu0 0
  %1324 = vmatpush1.bf16.msra.mxu0 0
  %1325 = vmatprep.subr.bf16.mxu0 0
  %1326 = vmatpush1.bf16.msra.mxu0 0
  %1327 = vmatprep.subr.bf16.mxu0 0
  %1328 = vmatpush1.bf16.msra.mxu0 0
  %1329 = vmatprep.subr.bf16.mxu0 0
  %1330 = vmatpush1.bf16.msra.mxu0 0
  %1331 = vmatprep.subr.bf16.mxu0 0
  %1332 = vmatpush1.bf16.msra.mxu0 0
  %1333 = vmatprep.subr.bf16.mxu0 0
  %1334 = vmatpush1.bf16.msra.mxu0 0
  %1335 = vmatprep.subr.bf16.mxu0 0
  %1336 = vmatpush1.bf16.msra.mxu0 0
  %1337 = vmatprep.subr.bf16.mxu0 0
  %1338 = vmatpush1.bf16.msra.mxu0 0
  %1339 = vmatprep.subr.bf16.mxu0 0
  %1340 = vmatpush1.bf16.msra.mxu0 0
  %1341 = vmatprep.subr.bf16.mxu0 0
  %1342 = vmatpush1.bf16.msra.mxu0 0
  %1343 = vmatprep.subr.bf16.mxu0 0
  %1344 = vmatpush1.bf16.msra.mxu0 0
  %1345 = vmatprep.mubr.bf16.mxu0 0
  %1346 = vmatmul.mubr.bf16.gmra.mrb[0].mxu0 %v1311
  %v1347 = vpop.f32.mrb[0].mxu0
  %v1348 = vadd.f32 0.0, %v1347
  %v1349 = vpop.f32.mrb[0].mxu0
  %v1350 = vpop.f32.mrb[0].mxu0
  %v1351 = vpop.f32.mrb[0].mxu0
  %1352 = vdwg.mxu0
  %v1353 = vpack.c.bf16 %v1282, %v1279
  %v1354 = vpack.c.bf16 %v1290, %v1287
  %v1355 = vpack.c.bf16 %v1298, %v1295
  %v1356 = vpack.c.bf16 %v1306, %v1303
  %v1357 = vpack.c.bf16 %v1348, %v1348
  %1358 = vmatprep.subr.bf16.mxu0 0
  %1359 = vmatpush1.bf16.msra.mxu0 %v440
  %1360 = vmatprep.subr.bf16.mxu0 0
  %1361 = vmatpush1.bf16.msra.mxu0 %v441
  %1362 = vmatprep.subr.bf16.mxu0 0
  %1363 = vmatpush1.bf16.msra.mxu0 %v442
  %1364 = vmatprep.subr.bf16.mxu0 0
  %1365 = vmatpush1.bf16.msra.mxu0 %v443
  %1366 = vmatprep.subr.bf16.mxu0 0
  %1367 = vmatpush1.bf16.msra.mxu0 %v444
  %1368 = vmatprep.subr.bf16.mxu0 0
  %1369 = vmatpush1.bf16.msra.mxu0 %v445
  %1370 = vmatprep.subr.bf16.mxu0 0
  %1371 = vmatpush1.bf16.msra.mxu0 %v446
  %1372 = vmatprep.subr.bf16.mxu0 0
  %1373 = vmatpush1.bf16.msra.mxu0 %v447
  %1374 = vmatprep.subr.bf16.mxu0 0
  %1375 = vmatpush1.bf16.msra.mxu0 0
  %1376 = vmatprep.subr.bf16.mxu0 0
  %1377 = vmatpush1.bf16.msra.mxu0 0
  %1378 = vmatprep.subr.bf16.mxu0 0
  %1379 = vmatpush1.bf16.msra.mxu0 0
  %1380 = vmatprep.subr.bf16.mxu0 0
  %1381 = vmatpush1.bf16.msra.mxu0 0
  %1382 = vmatprep.subr.bf16.mxu0 0
  %1383 = vmatpush1.bf16.msra.mxu0 0
  %1384 = vmatprep.subr.bf16.mxu0 0
  %1385 = vmatpush1.bf16.msra.mxu0 0
  %1386 = vmatprep.subr.bf16.mxu0 0
  %1387 = vmatpush1.bf16.msra.mxu0 0
  %1388 = vmatprep.subr.bf16.mxu0 0
  %1389 = vmatpush1.bf16.msra.mxu0 0
  %1390 = vmatprep.mubr.bf16.mxu0 0
  %1391 = vmatmul.mubr.bf16.gmra.mrb[0].mxu0 %v1357
  %v1392 = vpop.f32.mrb[0].mxu0
  %v1393 = vadd.f32 0.0, %v1392
  %v1394 = vpop.f32.mrb[0].mxu0
  %v1395 = vpop.f32.mrb[0].mxu0
  %v1396 = vpop.f32.mrb[0].mxu0
  %1397 = vdwg.mxu0
  %v1399 = vsel %vm1309, %v207, 0
  %1401 = vmatprep.subr.bf16.mxu0 0
  %1402 = vmatpush1.bf16.msra.mxu0 %v1353
  %1403 = vmatprep.subr.bf16.mxu0 0
  %1404 = vmatpush1.bf16.msra.mxu0 %v1354
  %1405 = vmatprep.subr.bf16.mxu0 0
  %1406 = vmatpush1.bf16.msra.mxu0 %v1355
  %1407 = vmatprep.subr.bf16.mxu0 0
  %1408 = vmatpush1.bf16.msra.mxu0 %v1356
  %1409 = vmatprep.subr.bf16.mxu0 0
  %1410 = vmatpush1.bf16.msra.mxu0 0
  %1411 = vmatprep.subr.bf16.mxu0 0
  %1412 = vmatpush1.bf16.msra.mxu0 0
  %1413 = vmatprep.subr.bf16.mxu0 0
  %1414 = vmatpush1.bf16.msra.mxu0 0
  %1415 = vmatprep.subr.bf16.mxu0 0
  %1416 = vmatpush1.bf16.msra.mxu0 0
  %1417 = vmatprep.subr.bf16.mxu0 0
  %1418 = vmatpush1.bf16.msra.mxu0 0
  %1419 = vmatprep.subr.bf16.mxu0 0
  %1420 = vmatpush1.bf16.msra.mxu0 0
  %1421 = vmatprep.subr.bf16.mxu0 0
  %1422 = vmatpush1.bf16.msra.mxu0 0
  %1423 = vmatprep.subr.bf16.mxu0 0
  %1424 = vmatpush1.bf16.msra.mxu0 0
  %1425 = vmatprep.subr.bf16.mxu0 0
  %1426 = vmatpush1.bf16.msra.mxu0 0
  %1427 = vmatprep.subr.bf16.mxu0 0
  %1428 = vmatpush1.bf16.msra.mxu0 0
  %1429 = vmatprep.subr.bf16.mxu0 0
  %1430 = vmatpush1.bf16.msra.mxu0 0
  %1431 = vmatprep.subr.bf16.mxu0 0
  %1432 = vmatpush1.bf16.msra.mxu0 0
  %1433 = vmatprep.mubr.bf16.mxu0 0
  %1434 = vmatmul.mubr.bf16.gmra.mrb[0].mxu0 %v1399
  %v1435 = vpop.f32.mrb[0].mxu0
  %v1436 = vadd.f32 %v1393, %v1435
  %v1437 = vpop.f32.mrb[0].mxu0
  %v1438 = vpop.f32.mrb[0].mxu0
  %v1439 = vpop.f32.mrb[0].mxu0
  %1440 = vdwg.mxu0
  %v1441 = vadd.f32 %v1436, %v939
  %vm1442 = vcmp.ge.f32.partialorder %v1441, 0.0
  %v1443 = vmul.f32 %v1441, 0.2
  %v1444 = vsel %vm1442, %v1441, %v1443
  %v1445 = vsel %vm1034, %v1444, -inf
  %1446 = vmax.xlane.f32.xlu0 %v1445
  %v1447 = vpop.xlane.xlu0 %1446
  %v1448 = vsub.f32 %v1444, %v1447
  %v1449 = vmul.f32 %v1448, 1.442695
  %v1450 = vpow.pop %v1449
  %v1451 = vpack.c.bf16 %v1450, %v1450
  %1452 = vmatprep.subr.bf16.mxu0 0
  %1453 = vmatpush1.bf16.msra.mxu0 %v528
  %1454 = vmatprep.subr.bf16.mxu0 0
  %1455 = vmatpush1.bf16.msra.mxu0 %v529
  %1456 = vmatprep.subr.bf16.mxu0 0
  %1457 = vmatpush1.bf16.msra.mxu0 %v530
  %1458 = vmatprep.subr.bf16.mxu0 0
  %1459 = vmatpush1.bf16.msra.mxu0 %v531
  %1460 = vmatprep.subr.bf16.mxu0 0
  %1461 = vmatpush1.bf16.msra.mxu0 %v532
  %1462 = vmatprep.subr.bf16.mxu0 0
  %1463 = vmatpush1.bf16.msra.mxu0 %v533
  %1464 = vmatprep.subr.bf16.mxu0 0
  %1465 = vmatpush1.bf16.msra.mxu0 %v534
  %1466 = vmatprep.subr.bf16.mxu0 0
  %1467 = vmatpush1.bf16.msra.mxu0 %v535
  %1468 = vmatprep.subr.bf16.mxu0 0
  %1469 = vmatpush1.bf16.msra.mxu0 0
  %1470 = vmatprep.subr.bf16.mxu0 0
  %1471 = vmatpush1.bf16.msra.mxu0 0
  %1472 = vmatprep.subr.bf16.mxu0 0
  %1473 = vmatpush1.bf16.msra.mxu0 0
  %1474 = vmatprep.subr.bf16.mxu0 0
  %1475 = vmatpush1.bf16.msra.mxu0 0
  %1476 = vmatprep.subr.bf16.mxu0 0
  %1477 = vmatpush1.bf16.msra.mxu0 0
  %1478 = vmatprep.subr.bf16.mxu0 0
  %1479 = vmatpush1.bf16.msra.mxu0 0
  %1480 = vmatprep.subr.bf16.mxu0 0
  %1481 = vmatpush1.bf16.msra.mxu0 0
  %1482 = vmatprep.subr.bf16.mxu0 0
  %1483 = vmatpush1.bf16.msra.mxu0 0
  %1484 = vmatprep.mubr.bf16.mxu0 0
  %1485 = vmatmul.mubr.bf16.gmra.mrb[0].mxu0 %v1451
  %v1486 = vpop.f32.mrb[0].mxu0
  %v1487 = vadd.f32 0.0, %v1486
  %v1488 = vpop.f32.mrb[0].mxu0
  %v1489 = vpop.f32.mrb[0].mxu0
  %v1490 = vpop.f32.mrb[0].mxu0
  %1491 = vdwg.mxu0
  %vm1492 = vcmp.gt.f32.partialorder %v1487, 0.0
  %v1493 = vrcp.pop %v1487
  %v1494 = vmul.f32 1.0, %v1493
  %v1495 = vsel %vm1492, %v1494, 0.0
  %v1496 = vpack.c.bf16 %v1495, %v1495
  %1497 = vmatprep.subr.bf16.mxu0 0
  %1498 = vmatpush1.bf16.msra.mxu0 %v440
  %1499 = vmatprep.subr.bf16.mxu0 0
  %1500 = vmatpush1.bf16.msra.mxu0 %v441
  %1501 = vmatprep.subr.bf16.mxu0 0
  %1502 = vmatpush1.bf16.msra.mxu0 %v442
  %1503 = vmatprep.subr.bf16.mxu0 0
  %1504 = vmatpush1.bf16.msra.mxu0 %v443
  %1505 = vmatprep.subr.bf16.mxu0 0
  %1506 = vmatpush1.bf16.msra.mxu0 %v444
  %1507 = vmatprep.subr.bf16.mxu0 0
  %1508 = vmatpush1.bf16.msra.mxu0 %v445
  %1509 = vmatprep.subr.bf16.mxu0 0
  %1510 = vmatpush1.bf16.msra.mxu0 %v446
  %1511 = vmatprep.subr.bf16.mxu0 0
  %1512 = vmatpush1.bf16.msra.mxu0 %v447
  %1513 = vmatprep.subr.bf16.mxu0 0
  %1514 = vmatpush1.bf16.msra.mxu0 0
  %1515 = vmatprep.subr.bf16.mxu0 0
  %1516 = vmatpush1.bf16.msra.mxu0 0
  %1517 = vmatprep.subr.bf16.mxu0 0
  %1518 = vmatpush1.bf16.msra.mxu0 0
  %1519 = vmatprep.subr.bf16.mxu0 0
  %1520 = vmatpush1.bf16.msra.mxu0 0
  %1521 = vmatprep.subr.bf16.mxu0 0
  %1522 = vmatpush1.bf16.msra.mxu0 0
  %1523 = vmatprep.subr.bf16.mxu0 0
  %1524 = vmatpush1.bf16.msra.mxu0 0
  %1525 = vmatprep.subr.bf16.mxu0 0
  %1526 = vmatpush1.bf16.msra.mxu0 0
  %1527 = vmatprep.subr.bf16.mxu0 0
  %1528 = vmatpush1.bf16.msra.mxu0 0
  %1529 = vmatprep.mubr.bf16.mxu0 0
  %1530 = vmatmul.mubr.bf16.gmra.mrb[0].mxu0 %v1496
  %v1531 = vpop.f32.mrb[0].mxu0
  %v1532 = vadd.f32 0.0, %v1531
  %v1533 = vpop.f32.mrb[0].mxu0
  %v1534 = vpop.f32.mrb[0].mxu0
  %v1535 = vpop.f32.mrb[0].mxu0
  %1536 = vdwg.mxu0
  %v1537 = vmul.f32 %v1450, %v1532
  %v1538 = vlaneseq
  %v1539 = vshrl.u32 %v1538, 7
  %v1540 = vsub.s32 0, %v1539
  %v1541 = vrot.slane %v1537, %v1540
  %v1542 = vmul.f32 %v1279, %v1541
  %v1543 = vmul.f32 %v1282, %v1541
  %v1544 = vlaneseq
  %v1545 = vshrl.u32 %v1544, 7
  %v1546 = vsub.s32 1, %v1545
  %v1547 = vrot.slane %v1537, %v1546
  %v1548 = vmul.f32 %v1287, %v1547
  %v1549 = vmul.f32 %v1290, %v1547
  %v1550 = vlaneseq
  %v1551 = vshrl.u32 %v1550, 7
  %v1552 = vsub.s32 2, %v1551
  %v1553 = vrot.slane %v1537, %v1552
  %v1554 = vmul.f32 %v1295, %v1553
  %v1555 = vmul.f32 %v1298, %v1553
  %v1556 = vlaneseq
  %v1557 = vshrl.u32 %v1556, 7
  %v1558 = vsub.s32 3, %v1557
  %v1559 = vrot.slane %v1537, %v1558
  %v1560 = vmul.f32 %v1303, %v1559
  %v1561 = vmul.f32 %v1306, %v1559
  %v1562 = vpack.c.bf16 %v1543, %v1542
  %v1563 = vpack.c.bf16 %v1549, %v1548
  %v1564 = vpack.c.bf16 %v1555, %v1554
  %v1565 = vpack.c.bf16 %v1561, %v1560
  %1567 = vset.pattern.permute.xlu0 0
  %1568 = vperm.xlu0 %1567, %v209
  %v1569 = vpop.permute.xlu0 %1568
  %1572 = vset.pattern.permute.xlu0 0
  %1573 = vperm.xlu0 %1572, %v210
  %v1574 = vpop.permute.xlu0 %1573
  %1577 = vset.pattern.permute.xlu0 0
  %1578 = vperm.xlu0 %1577, %v211
  %v1579 = vpop.permute.xlu0 %1578
  %1582 = vset.pattern.permute.xlu0 0
  %1583 = vperm.xlu0 %1582, %v212
  %v1584 = vpop.permute.xlu0 %1583
  %1587 = vset.pattern.permute.xlu0 0
  %1588 = vperm.xlu0 %1587, %v213
  %v1589 = vpop.permute.xlu0 %1588
  %1592 = vset.pattern.permute.xlu0 0
  %1593 = vperm.xlu0 %1592, %v214
  %v1594 = vpop.permute.xlu0 %1593
  %1597 = vset.pattern.permute.xlu0 0
  %1598 = vperm.xlu0 %1597, %v215
  %v1599 = vpop.permute.xlu0 %1598
  %1602 = vset.pattern.permute.xlu0 0
  %1603 = vperm.xlu0 %1602, %v216
  %v1604 = vpop.permute.xlu0 %1603
  %1606 = vmatprep.subr.bf16.mxu0 0
  %1607 = vmatpush1.bf16.msra.mxu0 %v528
  %1608 = vmatprep.subr.bf16.mxu0 0
  %1609 = vmatpush1.bf16.msra.mxu0 %v529
  %1610 = vmatprep.subr.bf16.mxu0 0
  %1611 = vmatpush1.bf16.msra.mxu0 %v530
  %1612 = vmatprep.subr.bf16.mxu0 0
  %1613 = vmatpush1.bf16.msra.mxu0 %v531
  %1614 = vmatprep.subr.bf16.mxu0 0
  %1615 = vmatpush1.bf16.msra.mxu0 %v532
  %1616 = vmatprep.subr.bf16.mxu0 0
  %1617 = vmatpush1.bf16.msra.mxu0 %v533
  %1618 = vmatprep.subr.bf16.mxu0 0
  %1619 = vmatpush1.bf16.msra.mxu0 %v534
  %1620 = vmatprep.subr.bf16.mxu0 0
  %1621 = vmatpush1.bf16.msra.mxu0 %v535
  %1622 = vmatprep.subr.bf16.mxu0 0
  %1623 = vmatpush1.bf16.msra.mxu0 0
  %1624 = vmatprep.subr.bf16.mxu0 0
  %1625 = vmatpush1.bf16.msra.mxu0 0
  %1626 = vmatprep.subr.bf16.mxu0 0
  %1627 = vmatpush1.bf16.msra.mxu0 0
  %1628 = vmatprep.subr.bf16.mxu0 0
  %1629 = vmatpush1.bf16.msra.mxu0 0
  %1630 = vmatprep.subr.bf16.mxu0 0
  %1631 = vmatpush1.bf16.msra.mxu0 0
  %1632 = vmatprep.subr.bf16.mxu0 0
  %1633 = vmatpush1.bf16.msra.mxu0 0
  %1634 = vmatprep.subr.bf16.mxu0 0
  %1635 = vmatpush1.bf16.msra.mxu0 0
  %1636 = vmatprep.subr.bf16.mxu0 0
  %1637 = vmatpush1.bf16.msra.mxu0 0
  %1638 = vmatprep.mubr.bf16.mxu0 0
  %1639 = vmatmul.mubr.bf16.gmra.mrb[0].mxu0 %v1562
  %v1640 = vpop.f32.mrb[0].mxu0
  %v1641 = vadd.f32 %v1569, %v1640
  %v1642 = vpop.f32.mrb[0].mxu0
  %v1643 = vpop.f32.mrb[0].mxu0
  %v1644 = vadd.f32 %v1574, %v1643
  %v1645 = vpop.f32.mrb[0].mxu0
  %1646 = vmatprep.mubr.bf16.mxu0 0
  %1647 = vmatmul.mubr.bf16.gmra.mrb[0].mxu0 %v1563
  %v1648 = vpop.f32.mrb[0].mxu0
  %v1649 = vadd.f32 %v1579, %v1648
  %v1650 = vpop.f32.mrb[0].mxu0
  %v1651 = vpop.f32.mrb[0].mxu0
  %v1652 = vadd.f32 %v1584, %v1651
  %v1653 = vpop.f32.mrb[0].mxu0
  %1654 = vmatprep.mubr.bf16.mxu0 0
  %1655 = vmatmul.mubr.bf16.gmra.mrb[0].mxu0 %v1564
  %v1656 = vpop.f32.mrb[0].mxu0
  %v1657 = vadd.f32 %v1589, %v1656
  %v1658 = vpop.f32.mrb[0].mxu0
  %v1659 = vpop.f32.mrb[0].mxu0
  %v1660 = vadd.f32 %v1594, %v1659
  %v1661 = vpop.f32.mrb[0].mxu0
  %1662 = vmatprep.mubr.bf16.mxu0 0
  %1663 = vmatmul.mubr.bf16.gmra.mrb[0].mxu0 %v1565
  %v1664 = vpop.f32.mrb[0].mxu0
  %v1665 = vadd.f32 %v1599, %v1664
  %v1666 = vpop.f32.mrb[0].mxu0
  %v1667 = vpop.f32.mrb[0].mxu0
  %v1668 = vadd.f32 %v1604, %v1667
  %v1669 = vpop.f32.mrb[0].mxu0
  %1670 = vdwg.mxu0
  %v1671 = vadd.f32 %v1641, %v1210
  %v1672 = vadd.f32 %v1644, %v1213
  %v1673 = vadd.f32 %v1649, %v1218
  %v1674 = vadd.f32 %v1652, %v1221
  %v1675 = vadd.f32 %v1657, %v1226
  %v1676 = vadd.f32 %v1660, %v1229
  %v1677 = vadd.f32 %v1665, %v1234
  %v1678 = vadd.f32 %v1668, %v1237
  %v1679 = vmax.f32 %v1671, 0.0
  %v1680 = vmax.f32 %v1672, 0.0
  %v1681 = vmax.f32 %v1673, 0.0
  %v1682 = vmax.f32 %v1674, 0.0
  %v1683 = vmax.f32 %v1675, 0.0
  %v1684 = vmax.f32 %v1676, 0.0
  %v1685 = vmax.f32 %v1677, 0.0
  %v1686 = vmax.f32 %v1678, 0.0
  %v1687 = vpack.c.bf16 %v1680, %v1679
  %v1688 = vpack.c.bf16 %v1682, %v1681
  %v1689 = vpack.c.bf16 %v1684, %v1683
  %v1690 = vpack.c.bf16 %v1686, %v1685
  %1692 = vset.pattern.permute.xlu0 0
  %1693 = vperm.xlu0 %1692, %v225
  %v1694 = vpop.permute.xlu0 %1693
  %1697 = vset.pattern.permute.xlu0 0
  %1698 = vperm.xlu0 %1697, %v226
  %v1699 = vpop.permute.xlu0 %1698
  %1702 = vset.pattern.permute.xlu0 0
  %1703 = vperm.xlu0 %1702, %v227
  %v1704 = vpop.permute.xlu0 %1703
  %1707 = vset.pattern.permute.xlu0 0
  %1708 = vperm.xlu0 %1707, %v228
  %v1709 = vpop.permute.xlu0 %1708
  %1712 = vset.pattern.permute.xlu0 0
  %1713 = vperm.xlu0 %1712, %v229
  %v1714 = vpop.permute.xlu0 %1713
  %1717 = vset.pattern.permute.xlu0 0
  %1718 = vperm.xlu0 %1717, %v230
  %v1719 = vpop.permute.xlu0 %1718
  %1722 = vset.pattern.permute.xlu0 0
  %1723 = vperm.xlu0 %1722, %v231
  %v1724 = vpop.permute.xlu0 %1723
  %1727 = vset.pattern.permute.xlu0 0
  %1728 = vperm.xlu0 %1727, %v232
  %v1729 = vpop.permute.xlu0 %1728
  %v1739 = vunpack.c.l.b16 %v217
  %v1740 = vunpack.c.l.b16 %v218
  %v1741 = vunpack.c.l.b16 %v219
  %v1742 = vunpack.c.l.b16 %v220
  %v1743 = vunpack.c.l.b16 %v221
  %v1744 = vunpack.c.l.b16 %v222
  %v1745 = vunpack.c.l.b16 %v223
  %v1746 = vunpack.c.l.b16 %v224
  %v1747 = vpack.c.b16 %v1740, %v1739
  %v1748 = vpack.c.b16 %v1742, %v1741
  %v1749 = vpack.c.b16 %v1744, %v1743
  %v1750 = vpack.c.b16 %v1746, %v1745
  %v1752 = vsel %vm1309, %v1747, 0
  %v1755 = vsel %vm1309, %v1748, 0
  %v1758 = vsel %vm1309, %v1749, 0
  %v1761 = vsel %vm1309, %v1750, 0
  %1763 = vmatprep.subr.bf16.mxu0 0
  %1764 = vmatpush1.bf16.msra.mxu0 %v1687
  %1765 = vmatprep.subr.bf16.mxu0 0
  %1766 = vmatpush1.bf16.msra.mxu0 %v1688
  %1767 = vmatprep.subr.bf16.mxu0 0
  %1768 = vmatpush1.bf16.msra.mxu0 %v1689
  %1769 = vmatprep.subr.bf16.mxu0 0
  %1770 = vmatpush1.bf16.msra.mxu0 %v1690
  %1771 = vmatprep.subr.bf16.mxu0 0
  %1772 = vmatpush1.bf16.msra.mxu0 0
  %1773 = vmatprep.subr.bf16.mxu0 0
  %1774 = vmatpush1.bf16.msra.mxu0 0
  %1775 = vmatprep.subr.bf16.mxu0 0
  %1776 = vmatpush1.bf16.msra.mxu0 0
  %1777 = vmatprep.subr.bf16.mxu0 0
  %1778 = vmatpush1.bf16.msra.mxu0 0
  %1779 = vmatprep.subr.bf16.mxu0 0
  %1780 = vmatpush1.bf16.msra.mxu0 0
  %1781 = vmatprep.subr.bf16.mxu0 0
  %1782 = vmatpush1.bf16.msra.mxu0 0
  %1783 = vmatprep.subr.bf16.mxu0 0
  %1784 = vmatpush1.bf16.msra.mxu0 0
  %1785 = vmatprep.subr.bf16.mxu0 0
  %1786 = vmatpush1.bf16.msra.mxu0 0
  %1787 = vmatprep.subr.bf16.mxu0 0
  %1788 = vmatpush1.bf16.msra.mxu0 0
  %1789 = vmatprep.subr.bf16.mxu0 0
  %1790 = vmatpush1.bf16.msra.mxu0 0
  %1791 = vmatprep.subr.bf16.mxu0 0
  %1792 = vmatpush1.bf16.msra.mxu0 0
  %1793 = vmatprep.subr.bf16.mxu0 0
  %1794 = vmatpush1.bf16.msra.mxu0 0
  %1795 = vmatprep.mubr.bf16.mxu0 0
  %1796 = vmatmul.mubr.bf16.gmra.mrb[0].mxu0 %v1752
  %v1797 = vpop.f32.mrb[0].mxu0
  %v1798 = vadd.f32 %v1694, %v1797
  %v1799 = vpop.f32.mrb[0].mxu0
  %v1800 = vpop.f32.mrb[0].mxu0
  %v1801 = vadd.f32 %v1699, %v1800
  %v1802 = vpop.f32.mrb[0].mxu0
  %1803 = vmatprep.mubr.bf16.mxu0 0
  %1804 = vmatmul.mubr.bf16.gmra.mrb[0].mxu0 %v1755
  %v1805 = vpop.f32.mrb[0].mxu0
  %v1806 = vadd.f32 %v1704, %v1805
  %v1807 = vpop.f32.mrb[0].mxu0
  %v1808 = vpop.f32.mrb[0].mxu0
  %v1809 = vadd.f32 %v1709, %v1808
  %v1810 = vpop.f32.mrb[0].mxu0
  %1811 = vmatprep.mubr.bf16.mxu0 0
  %1812 = vmatmul.mubr.bf16.gmra.mrb[0].mxu0 %v1758
  %v1813 = vpop.f32.mrb[0].mxu0
  %v1814 = vadd.f32 %v1714, %v1813
  %v1815 = vpop.f32.mrb[0].mxu0
  %v1816 = vpop.f32.mrb[0].mxu0
  %v1817 = vadd.f32 %v1719, %v1816
  %v1818 = vpop.f32.mrb[0].mxu0
  %1819 = vmatprep.mubr.bf16.mxu0 0
  %1820 = vmatmul.mubr.bf16.gmra.mrb[0].mxu0 %v1761
  %v1821 = vpop.f32.mrb[0].mxu0
  %v1822 = vadd.f32 %v1724, %v1821
  %v1823 = vpop.f32.mrb[0].mxu0
  %v1824 = vpop.f32.mrb[0].mxu0
  %v1825 = vadd.f32 %v1729, %v1824
  %v1826 = vpop.f32.mrb[0].mxu0
  %1827 = vdwg.mxu0
  %1829 = vset.pattern.permute.xlu0 0
  %1830 = vperm.xlu0 %1829, %v241
  %v1831 = vpop.permute.xlu0 %1830
  %1834 = vset.pattern.permute.xlu0 0
  %1835 = vperm.xlu0 %1834, %v242
  %v1836 = vpop.permute.xlu0 %1835
  %1839 = vset.pattern.permute.xlu0 0
  %1840 = vperm.xlu0 %1839, %v243
  %v1841 = vpop.permute.xlu0 %1840
  %1844 = vset.pattern.permute.xlu0 0
  %1845 = vperm.xlu0 %1844, %v244
  %v1846 = vpop.permute.xlu0 %1845
  %1849 = vset.pattern.permute.xlu0 0
  %1850 = vperm.xlu0 %1849, %v245
  %v1851 = vpop.permute.xlu0 %1850
  %1854 = vset.pattern.permute.xlu0 0
  %1855 = vperm.xlu0 %1854, %v246
  %v1856 = vpop.permute.xlu0 %1855
  %1859 = vset.pattern.permute.xlu0 0
  %1860 = vperm.xlu0 %1859, %v247
  %v1861 = vpop.permute.xlu0 %1860
  %1864 = vset.pattern.permute.xlu0 0
  %1865 = vperm.xlu0 %1864, %v248
  %v1866 = vpop.permute.xlu0 %1865
  %v1876 = vunpack.c.l.b16 %v233
  %v1877 = vunpack.c.l.b16 %v234
  %v1878 = vunpack.c.l.b16 %v235
  %v1879 = vunpack.c.l.b16 %v236
  %v1880 = vunpack.c.l.b16 %v237
  %v1881 = vunpack.c.l.b16 %v238
  %v1882 = vunpack.c.l.b16 %v239
  %v1883 = vunpack.c.l.b16 %v240
  %v1884 = vpack.c.b16 %v1877, %v1876
  %v1885 = vpack.c.b16 %v1879, %v1878
  %v1886 = vpack.c.b16 %v1881, %v1880
  %v1887 = vpack.c.b16 %v1883, %v1882
  %v1889 = vsel %vm1309, %v1884, 0
  %v1892 = vsel %vm1309, %v1885, 0
  %v1895 = vsel %vm1309, %v1886, 0
  %v1898 = vsel %vm1309, %v1887, 0
  %1900 = vmatprep.subr.bf16.mxu0 0
  %1901 = vmatpush1.bf16.msra.mxu0 %v1687
  %1902 = vmatprep.subr.bf16.mxu0 0
  %1903 = vmatpush1.bf16.msra.mxu0 %v1688
  %1904 = vmatprep.subr.bf16.mxu0 0
  %1905 = vmatpush1.bf16.msra.mxu0 %v1689
  %1906 = vmatprep.subr.bf16.mxu0 0
  %1907 = vmatpush1.bf16.msra.mxu0 %v1690
  %1908 = vmatprep.subr.bf16.mxu0 0
  %1909 = vmatpush1.bf16.msra.mxu0 0
  %1910 = vmatprep.subr.bf16.mxu0 0
  %1911 = vmatpush1.bf16.msra.mxu0 0
  %1912 = vmatprep.subr.bf16.mxu0 0
  %1913 = vmatpush1.bf16.msra.mxu0 0
  %1914 = vmatprep.subr.bf16.mxu0 0
  %1915 = vmatpush1.bf16.msra.mxu0 0
  %1916 = vmatprep.subr.bf16.mxu0 0
  %1917 = vmatpush1.bf16.msra.mxu0 0
  %1918 = vmatprep.subr.bf16.mxu0 0
  %1919 = vmatpush1.bf16.msra.mxu0 0
  %1920 = vmatprep.subr.bf16.mxu0 0
  %1921 = vmatpush1.bf16.msra.mxu0 0
  %1922 = vmatprep.subr.bf16.mxu0 0
  %1923 = vmatpush1.bf16.msra.mxu0 0
  %1924 = vmatprep.subr.bf16.mxu0 0
  %1925 = vmatpush1.bf16.msra.mxu0 0
  %1926 = vmatprep.subr.bf16.mxu0 0
  %1927 = vmatpush1.bf16.msra.mxu0 0
  %1928 = vmatprep.subr.bf16.mxu0 0
  %1929 = vmatpush1.bf16.msra.mxu0 0
  %1930 = vmatprep.subr.bf16.mxu0 0
  %1931 = vmatpush1.bf16.msra.mxu0 0
  %1932 = vmatprep.mubr.bf16.mxu0 0
  %1933 = vmatmul.mubr.bf16.gmra.mrb[0].mxu0 %v1889
  %v1934 = vpop.f32.mrb[0].mxu0
  %v1935 = vadd.f32 %v1831, %v1934
  %v1936 = vpop.f32.mrb[0].mxu0
  %v1937 = vpop.f32.mrb[0].mxu0
  %v1938 = vadd.f32 %v1836, %v1937
  %v1939 = vpop.f32.mrb[0].mxu0
  %1940 = vmatprep.mubr.bf16.mxu0 0
  %1941 = vmatmul.mubr.bf16.gmra.mrb[0].mxu0 %v1892
  %v1942 = vpop.f32.mrb[0].mxu0
  %v1943 = vadd.f32 %v1841, %v1942
  %v1944 = vpop.f32.mrb[0].mxu0
  %v1945 = vpop.f32.mrb[0].mxu0
  %v1946 = vadd.f32 %v1846, %v1945
  %v1947 = vpop.f32.mrb[0].mxu0
  %1948 = vmatprep.mubr.bf16.mxu0 0
  %1949 = vmatmul.mubr.bf16.gmra.mrb[0].mxu0 %v1895
  %v1950 = vpop.f32.mrb[0].mxu0
  %v1951 = vadd.f32 %v1851, %v1950
  %v1952 = vpop.f32.mrb[0].mxu0
  %v1953 = vpop.f32.mrb[0].mxu0
  %v1954 = vadd.f32 %v1856, %v1953
  %v1955 = vpop.f32.mrb[0].mxu0
  %1956 = vmatprep.mubr.bf16.mxu0 0
  %1957 = vmatmul.mubr.bf16.gmra.mrb[0].mxu0 %v1898
  %v1958 = vpop.f32.mrb[0].mxu0
  %v1959 = vadd.f32 %v1861, %v1958
  %v1960 = vpop.f32.mrb[0].mxu0
  %v1961 = vpop.f32.mrb[0].mxu0
  %v1962 = vadd.f32 %v1866, %v1961
  %v1963 = vpop.f32.mrb[0].mxu0
  %1964 = vdwg.mxu0
  %v1965 = vpack.c.bf16 %v1801, %v1798
  %v1966 = vpack.c.bf16 %v1809, %v1806
  %v1967 = vpack.c.bf16 %v1817, %v1814
  %v1968 = vpack.c.bf16 %v1825, %v1822
  %1969 = vmatprep.subr.bf16.mxu0 0
  %1970 = vmatpush1.bf16.msra.mxu0 %v396
  %1971 = vmatprep.subr.bf16.mxu0 0
  %1972 = vmatpush1.bf16.msra.mxu0 %v397
  %1973 = vmatprep.subr.bf16.mxu0 0
  %1974 = vmatpush1.bf16.msra.mxu0 %v398
  %1975 = vmatprep.subr.bf16.mxu0 0
  %1976 = vmatpush1.bf16.msra.mxu0 %v399
  %1977 = vmatprep.subr.bf16.mxu0 0
  %1978 = vmatpush1.bf16.msra.mxu0 %v400
  %1979 = vmatprep.subr.bf16.mxu0 0
  %1980 = vmatpush1.bf16.msra.mxu0 %v401
  %1981 = vmatprep.subr.bf16.mxu0 0
  %1982 = vmatpush1.bf16.msra.mxu0 %v402
  %1983 = vmatprep.subr.bf16.mxu0 0
  %1984 = vmatpush1.bf16.msra.mxu0 %v403
  %1985 = vmatprep.subr.bf16.mxu0 0
  %1986 = vmatpush1.bf16.msra.mxu0 0
  %1987 = vmatprep.subr.bf16.mxu0 0
  %1988 = vmatpush1.bf16.msra.mxu0 0
  %1989 = vmatprep.subr.bf16.mxu0 0
  %1990 = vmatpush1.bf16.msra.mxu0 0
  %1991 = vmatprep.subr.bf16.mxu0 0
  %1992 = vmatpush1.bf16.msra.mxu0 0
  %1993 = vmatprep.subr.bf16.mxu0 0
  %1994 = vmatpush1.bf16.msra.mxu0 0
  %1995 = vmatprep.subr.bf16.mxu0 0
  %1996 = vmatpush1.bf16.msra.mxu0 0
  %1997 = vmatprep.subr.bf16.mxu0 0
  %1998 = vmatpush1.bf16.msra.mxu0 0
  %1999 = vmatprep.subr.bf16.mxu0 0
  %2000 = vmatpush1.bf16.msra.mxu0 0
  %2001 = vmatprep.mubr.bf16.mxu0 0
  %2002 = vmatmul.mubr.bf16.gmra.mrb[0].mxu0 %v1965
  %v2003 = vpop.f32.mrb[0].mxu0
  %v2004 = vadd.f32 0.0, %v2003
  %v2005 = vpop.f32.mrb[0].mxu0
  %v2006 = vpop.f32.mrb[0].mxu0
  %v2007 = vadd.f32 0.0, %v2006
  %v2008 = vpop.f32.mrb[0].mxu0
  %2009 = vmatprep.mubr.bf16.mxu0 0
  %2010 = vmatmul.mubr.bf16.gmra.mrb[0].mxu0 %v1966
  %v2011 = vpop.f32.mrb[0].mxu0
  %v2012 = vadd.f32 0.0, %v2011
  %v2013 = vpop.f32.mrb[0].mxu0
  %v2014 = vpop.f32.mrb[0].mxu0
  %v2015 = vadd.f32 0.0, %v2014
  %v2016 = vpop.f32.mrb[0].mxu0
  %2017 = vmatprep.mubr.bf16.mxu0 0
  %2018 = vmatmul.mubr.bf16.gmra.mrb[0].mxu0 %v1967
  %v2019 = vpop.f32.mrb[0].mxu0
  %v2020 = vadd.f32 0.0, %v2019
  %v2021 = vpop.f32.mrb[0].mxu0
  %v2022 = vpop.f32.mrb[0].mxu0
  %v2023 = vadd.f32 0.0, %v2022
  %v2024 = vpop.f32.mrb[0].mxu0
  %2025 = vmatprep.mubr.bf16.mxu0 0
  %2026 = vmatmul.mubr.bf16.gmra.mrb[0].mxu0 %v1968
  %v2027 = vpop.f32.mrb[0].mxu0
  %v2028 = vadd.f32 0.0, %v2027
  %v2029 = vpop.f32.mrb[0].mxu0
  %v2030 = vpop.f32.mrb[0].mxu0
  %v2031 = vadd.f32 0.0, %v2030
  %v2032 = vpop.f32.mrb[0].mxu0
  %2033 = vdwg.mxu0
  %v2035 = vsel %vm1309, %v250, 0
  %2037 = vmatprep.subr.bf16.mxu0 0
  %2038 = vmatpush1.bf16.msra.mxu0 %v1965
  %2039 = vmatprep.subr.bf16.mxu0 0
  %2040 = vmatpush1.bf16.msra.mxu0 %v1966
  %2041 = vmatprep.subr.bf16.mxu0 0
  %2042 = vmatpush1.bf16.msra.mxu0 %v1967
  %2043 = vmatprep.subr.bf16.mxu0 0
  %2044 = vmatpush1.bf16.msra.mxu0 %v1968
  %2045 = vmatprep.subr.bf16.mxu0 0
  %2046 = vmatpush1.bf16.msra.mxu0 0
  %2047 = vmatprep.subr.bf16.mxu0 0
  %2048 = vmatpush1.bf16.msra.mxu0 0
  %2049 = vmatprep.subr.bf16.mxu0 0
  %2050 = vmatpush1.bf16.msra.mxu0 0
  %2051 = vmatprep.subr.bf16.mxu0 0
  %2052 = vmatpush1.bf16.msra.mxu0 0
  %2053 = vmatprep.subr.bf16.mxu0 0
  %2054 = vmatpush1.bf16.msra.mxu0 0
  %2055 = vmatprep.subr.bf16.mxu0 0
  %2056 = vmatpush1.bf16.msra.mxu0 0
  %2057 = vmatprep.subr.bf16.mxu0 0
  %2058 = vmatpush1.bf16.msra.mxu0 0
  %2059 = vmatprep.subr.bf16.mxu0 0
  %2060 = vmatpush1.bf16.msra.mxu0 0
  %2061 = vmatprep.subr.bf16.mxu0 0
  %2062 = vmatpush1.bf16.msra.mxu0 0
  %2063 = vmatprep.subr.bf16.mxu0 0
  %2064 = vmatpush1.bf16.msra.mxu0 0
  %2065 = vmatprep.subr.bf16.mxu0 0
  %2066 = vmatpush1.bf16.msra.mxu0 0
  %2067 = vmatprep.subr.bf16.mxu0 0
  %2068 = vmatpush1.bf16.msra.mxu0 0
  %2069 = vmatprep.mubr.bf16.mxu0 0
  %2070 = vmatmul.mubr.bf16.gmra.mrb[0].mxu0 %v2035
  %v2071 = vpop.f32.mrb[0].mxu0
  %v2072 = vadd.f32 0.0, %v2071
  %v2073 = vpop.f32.mrb[0].mxu0
  %v2074 = vpop.f32.mrb[0].mxu0
  %v2075 = vpop.f32.mrb[0].mxu0
  %2076 = vdwg.mxu0
  %v2077 = vpack.c.bf16 %v2007, %v2004
  %v2078 = vpack.c.bf16 %v2015, %v2012
  %v2079 = vpack.c.bf16 %v2023, %v2020
  %v2080 = vpack.c.bf16 %v2031, %v2028
  %v2081 = vpack.c.bf16 %v2072, %v2072
  %2082 = vmatprep.subr.bf16.mxu0 0
  %2083 = vmatpush1.bf16.msra.mxu0 %v440
  %2084 = vmatprep.subr.bf16.mxu0 0
  %2085 = vmatpush1.bf16.msra.mxu0 %v441
  %2086 = vmatprep.subr.bf16.mxu0 0
  %2087 = vmatpush1.bf16.msra.mxu0 %v442
  %2088 = vmatprep.subr.bf16.mxu0 0
  %2089 = vmatpush1.bf16.msra.mxu0 %v443
  %2090 = vmatprep.subr.bf16.mxu0 0
  %2091 = vmatpush1.bf16.msra.mxu0 %v444
  %2092 = vmatprep.subr.bf16.mxu0 0
  %2093 = vmatpush1.bf16.msra.mxu0 %v445
  %2094 = vmatprep.subr.bf16.mxu0 0
  %2095 = vmatpush1.bf16.msra.mxu0 %v446
  %2096 = vmatprep.subr.bf16.mxu0 0
  %2097 = vmatpush1.bf16.msra.mxu0 %v447
  %2098 = vmatprep.subr.bf16.mxu0 0
  %2099 = vmatpush1.bf16.msra.mxu0 0
  %2100 = vmatprep.subr.bf16.mxu0 0
  %2101 = vmatpush1.bf16.msra.mxu0 0
  %2102 = vmatprep.subr.bf16.mxu0 0
  %2103 = vmatpush1.bf16.msra.mxu0 0
  %2104 = vmatprep.subr.bf16.mxu0 0
  %2105 = vmatpush1.bf16.msra.mxu0 0
  %2106 = vmatprep.subr.bf16.mxu0 0
  %2107 = vmatpush1.bf16.msra.mxu0 0
  %2108 = vmatprep.subr.bf16.mxu0 0
  %2109 = vmatpush1.bf16.msra.mxu0 0
  %2110 = vmatprep.subr.bf16.mxu0 0
  %2111 = vmatpush1.bf16.msra.mxu0 0
  %2112 = vmatprep.subr.bf16.mxu0 0
  %2113 = vmatpush1.bf16.msra.mxu0 0
  %2114 = vmatprep.mubr.bf16.mxu0 0
  %2115 = vmatmul.mubr.bf16.gmra.mrb[0].mxu0 %v2081
  %v2116 = vpop.f32.mrb[0].mxu0
  %v2117 = vadd.f32 0.0, %v2116
  %v2118 = vpop.f32.mrb[0].mxu0
  %v2119 = vpop.f32.mrb[0].mxu0
  %v2120 = vpop.f32.mrb[0].mxu0
  %2121 = vdwg.mxu0
  %v2123 = vsel %vm1309, %v249, 0
  %2125 = vmatprep.subr.bf16.mxu0 0
  %2126 = vmatpush1.bf16.msra.mxu0 %v2077
  %2127 = vmatprep.subr.bf16.mxu0 0
  %2128 = vmatpush1.bf16.msra.mxu0 %v2078
  %2129 = vmatprep.subr.bf16.mxu0 0
  %2130 = vmatpush1.bf16.msra.mxu0 %v2079
  %2131 = vmatprep.subr.bf16.mxu0 0
  %2132 = vmatpush1.bf16.msra.mxu0 %v2080
  %2133 = vmatprep.subr.bf16.mxu0 0
  %2134 = vmatpush1.bf16.msra.mxu0 0
  %2135 = vmatprep.subr.bf16.mxu0 0
  %2136 = vmatpush1.bf16.msra.mxu0 0
  %2137 = vmatprep.subr.bf16.mxu0 0
  %2138 = vmatpush1.bf16.msra.mxu0 0
  %2139 = vmatprep.subr.bf16.mxu0 0
  %2140 = vmatpush1.bf16.msra.mxu0 0
  %2141 = vmatprep.subr.bf16.mxu0 0
  %2142 = vmatpush1.bf16.msra.mxu0 0
  %2143 = vmatprep.subr.bf16.mxu0 0
  %2144 = vmatpush1.bf16.msra.mxu0 0
  %2145 = vmatprep.subr.bf16.mxu0 0
  %2146 = vmatpush1.bf16.msra.mxu0 0
  %2147 = vmatprep.subr.bf16.mxu0 0
  %2148 = vmatpush1.bf16.msra.mxu0 0
  %2149 = vmatprep.subr.bf16.mxu0 0
  %2150 = vmatpush1.bf16.msra.mxu0 0
  %2151 = vmatprep.subr.bf16.mxu0 0
  %2152 = vmatpush1.bf16.msra.mxu0 0
  %2153 = vmatprep.subr.bf16.mxu0 0
  %2154 = vmatpush1.bf16.msra.mxu0 0
  %2155 = vmatprep.subr.bf16.mxu0 0
  %2156 = vmatpush1.bf16.msra.mxu0 0
  %2157 = vmatprep.mubr.bf16.mxu0 0
  %2158 = vmatmul.mubr.bf16.gmra.mrb[0].mxu0 %v2123
  %v2159 = vpop.f32.mrb[0].mxu0
  %v2160 = vadd.f32 %v2117, %v2159
  %v2161 = vpop.f32.mrb[0].mxu0
  %v2162 = vpop.f32.mrb[0].mxu0
  %v2163 = vpop.f32.mrb[0].mxu0
  %2164 = vdwg.mxu0
  %v2165 = vadd.f32 %v2160, %v942
  %vm2166 = vcmp.ge.f32.partialorder %v2165, 0.0
  %v2167 = vmul.f32 %v2165, 0.2
  %v2168 = vsel %vm2166, %v2165, %v2167
  %v2169 = vsel %vm1034, %v2168, -inf
  %2170 = vmax.xlane.f32.xlu0 %v2169
  %v2171 = vpop.xlane.xlu0 %2170
  %v2172 = vsub.f32 %v2168, %v2171
  %v2173 = vmul.f32 %v2172, 1.442695
  %v2174 = vpow.pop %v2173
  %v2175 = vpack.c.bf16 %v2174, %v2174
  %2176 = vmatprep.subr.bf16.mxu0 0
  %2177 = vmatpush1.bf16.msra.mxu0 %v528
  %2178 = vmatprep.subr.bf16.mxu0 0
  %2179 = vmatpush1.bf16.msra.mxu0 %v529
  %2180 = vmatprep.subr.bf16.mxu0 0
  %2181 = vmatpush1.bf16.msra.mxu0 %v530
  %2182 = vmatprep.subr.bf16.mxu0 0
  %2183 = vmatpush1.bf16.msra.mxu0 %v531
  %2184 = vmatprep.subr.bf16.mxu0 0
  %2185 = vmatpush1.bf16.msra.mxu0 %v532
  %2186 = vmatprep.subr.bf16.mxu0 0
  %2187 = vmatpush1.bf16.msra.mxu0 %v533
  %2188 = vmatprep.subr.bf16.mxu0 0
  %2189 = vmatpush1.bf16.msra.mxu0 %v534
  %2190 = vmatprep.subr.bf16.mxu0 0
  %2191 = vmatpush1.bf16.msra.mxu0 %v535
  %2192 = vmatprep.subr.bf16.mxu0 0
  %2193 = vmatpush1.bf16.msra.mxu0 0
  %2194 = vmatprep.subr.bf16.mxu0 0
  %2195 = vmatpush1.bf16.msra.mxu0 0
  %2196 = vmatprep.subr.bf16.mxu0 0
  %2197 = vmatpush1.bf16.msra.mxu0 0
  %2198 = vmatprep.subr.bf16.mxu0 0
  %2199 = vmatpush1.bf16.msra.mxu0 0
  %2200 = vmatprep.subr.bf16.mxu0 0
  %2201 = vmatpush1.bf16.msra.mxu0 0
  %2202 = vmatprep.subr.bf16.mxu0 0
  %2203 = vmatpush1.bf16.msra.mxu0 0
  %2204 = vmatprep.subr.bf16.mxu0 0
  %2205 = vmatpush1.bf16.msra.mxu0 0
  %2206 = vmatprep.subr.bf16.mxu0 0
  %2207 = vmatpush1.bf16.msra.mxu0 0
  %2208 = vmatprep.mubr.bf16.mxu0 0
  %2209 = vmatmul.mubr.bf16.gmra.mrb[0].mxu0 %v2175
  %v2210 = vpop.f32.mrb[0].mxu0
  %v2211 = vadd.f32 0.0, %v2210
  %v2212 = vpop.f32.mrb[0].mxu0
  %v2213 = vpop.f32.mrb[0].mxu0
  %v2214 = vpop.f32.mrb[0].mxu0
  %2215 = vdwg.mxu0
  %vm2216 = vcmp.gt.f32.partialorder %v2211, 0.0
  %v2217 = vrcp.pop %v2211
  %v2218 = vmul.f32 1.0, %v2217
  %v2219 = vsel %vm2216, %v2218, 0.0
  %v2220 = vpack.c.bf16 %v2219, %v2219
  %2221 = vmatprep.subr.bf16.mxu0 0
  %2222 = vmatpush1.bf16.msra.mxu0 %v440
  %2223 = vmatprep.subr.bf16.mxu0 0
  %2224 = vmatpush1.bf16.msra.mxu0 %v441
  %2225 = vmatprep.subr.bf16.mxu0 0
  %2226 = vmatpush1.bf16.msra.mxu0 %v442
  %2227 = vmatprep.subr.bf16.mxu0 0
  %2228 = vmatpush1.bf16.msra.mxu0 %v443
  %2229 = vmatprep.subr.bf16.mxu0 0
  %2230 = vmatpush1.bf16.msra.mxu0 %v444
  %2231 = vmatprep.subr.bf16.mxu0 0
  %2232 = vmatpush1.bf16.msra.mxu0 %v445
  %2233 = vmatprep.subr.bf16.mxu0 0
  %2234 = vmatpush1.bf16.msra.mxu0 %v446
  %2235 = vmatprep.subr.bf16.mxu0 0
  %2236 = vmatpush1.bf16.msra.mxu0 %v447
  %2237 = vmatprep.subr.bf16.mxu0 0
  %2238 = vmatpush1.bf16.msra.mxu0 0
  %2239 = vmatprep.subr.bf16.mxu0 0
  %2240 = vmatpush1.bf16.msra.mxu0 0
  %2241 = vmatprep.subr.bf16.mxu0 0
  %2242 = vmatpush1.bf16.msra.mxu0 0
  %2243 = vmatprep.subr.bf16.mxu0 0
  %2244 = vmatpush1.bf16.msra.mxu0 0
  %2245 = vmatprep.subr.bf16.mxu0 0
  %2246 = vmatpush1.bf16.msra.mxu0 0
  %2247 = vmatprep.subr.bf16.mxu0 0
  %2248 = vmatpush1.bf16.msra.mxu0 0
  %2249 = vmatprep.subr.bf16.mxu0 0
  %2250 = vmatpush1.bf16.msra.mxu0 0
  %2251 = vmatprep.subr.bf16.mxu0 0
  %2252 = vmatpush1.bf16.msra.mxu0 0
  %2253 = vmatprep.mubr.bf16.mxu0 0
  %2254 = vmatmul.mubr.bf16.gmra.mrb[0].mxu0 %v2220
  %v2255 = vpop.f32.mrb[0].mxu0
  %v2256 = vadd.f32 0.0, %v2255
  %v2257 = vpop.f32.mrb[0].mxu0
  %v2258 = vpop.f32.mrb[0].mxu0
  %v2259 = vpop.f32.mrb[0].mxu0
  %2260 = vdwg.mxu0
  %v2261 = vmul.f32 %v2174, %v2256
  %v2262 = vlaneseq
  %v2263 = vshrl.u32 %v2262, 7
  %v2264 = vsub.s32 0, %v2263
  %v2265 = vrot.slane %v2261, %v2264
  %v2266 = vmul.f32 %v2004, %v2265
  %v2267 = vmul.f32 %v2007, %v2265
  %v2268 = vlaneseq
  %v2269 = vshrl.u32 %v2268, 7
  %v2270 = vsub.s32 1, %v2269
  %v2271 = vrot.slane %v2261, %v2270
  %v2272 = vmul.f32 %v2012, %v2271
  %v2273 = vmul.f32 %v2015, %v2271
  %v2274 = vlaneseq
  %v2275 = vshrl.u32 %v2274, 7
  %v2276 = vsub.s32 2, %v2275
  %v2277 = vrot.slane %v2261, %v2276
  %v2278 = vmul.f32 %v2020, %v2277
  %v2279 = vmul.f32 %v2023, %v2277
  %v2280 = vlaneseq
  %v2281 = vshrl.u32 %v2280, 7
  %v2282 = vsub.s32 3, %v2281
  %v2283 = vrot.slane %v2261, %v2282
  %v2284 = vmul.f32 %v2028, %v2283
  %v2285 = vmul.f32 %v2031, %v2283
  %v2286 = vpack.c.bf16 %v2267, %v2266
  %v2287 = vpack.c.bf16 %v2273, %v2272
  %v2288 = vpack.c.bf16 %v2279, %v2278
  %v2289 = vpack.c.bf16 %v2285, %v2284
  %2291 = vset.pattern.permute.xlu0 0
  %2292 = vperm.xlu0 %2291, %v251
  %v2293 = vpop.permute.xlu0 %2292
  %2296 = vset.pattern.permute.xlu0 0
  %2297 = vperm.xlu0 %2296, %v252
  %v2298 = vpop.permute.xlu0 %2297
  %2301 = vset.pattern.permute.xlu0 0
  %2302 = vperm.xlu0 %2301, %v253
  %v2303 = vpop.permute.xlu0 %2302
  %2306 = vset.pattern.permute.xlu0 0
  %2307 = vperm.xlu0 %2306, %v254
  %v2308 = vpop.permute.xlu0 %2307
  %2311 = vset.pattern.permute.xlu0 0
  %2312 = vperm.xlu0 %2311, %v255
  %v2313 = vpop.permute.xlu0 %2312
  %2316 = vset.pattern.permute.xlu0 0
  %2317 = vperm.xlu0 %2316, %v256
  %v2318 = vpop.permute.xlu0 %2317
  %2321 = vset.pattern.permute.xlu0 0
  %2322 = vperm.xlu0 %2321, %v257
  %v2323 = vpop.permute.xlu0 %2322
  %2326 = vset.pattern.permute.xlu0 0
  %2327 = vperm.xlu0 %2326, %v258
  %v2328 = vpop.permute.xlu0 %2327
  %2330 = vmatprep.subr.bf16.mxu0 0
  %2331 = vmatpush1.bf16.msra.mxu0 %v528
  %2332 = vmatprep.subr.bf16.mxu0 0
  %2333 = vmatpush1.bf16.msra.mxu0 %v529
  %2334 = vmatprep.subr.bf16.mxu0 0
  %2335 = vmatpush1.bf16.msra.mxu0 %v530
  %2336 = vmatprep.subr.bf16.mxu0 0
  %2337 = vmatpush1.bf16.msra.mxu0 %v531
  %2338 = vmatprep.subr.bf16.mxu0 0
  %2339 = vmatpush1.bf16.msra.mxu0 %v532
  %2340 = vmatprep.subr.bf16.mxu0 0
  %2341 = vmatpush1.bf16.msra.mxu0 %v533
  %2342 = vmatprep.subr.bf16.mxu0 0
  %2343 = vmatpush1.bf16.msra.mxu0 %v534
  %2344 = vmatprep.subr.bf16.mxu0 0
  %2345 = vmatpush1.bf16.msra.mxu0 %v535
  %2346 = vmatprep.subr.bf16.mxu0 0
  %2347 = vmatpush1.bf16.msra.mxu0 0
  %2348 = vmatprep.subr.bf16.mxu0 0
  %2349 = vmatpush1.bf16.msra.mxu0 0
  %2350 = vmatprep.subr.bf16.mxu0 0
  %2351 = vmatpush1.bf16.msra.mxu0 0
  %2352 = vmatprep.subr.bf16.mxu0 0
  %2353 = vmatpush1.bf16.msra.mxu0 0
  %2354 = vmatprep.subr.bf16.mxu0 0
  %2355 = vmatpush1.bf16.msra.mxu0 0
  %2356 = vmatprep.subr.bf16.mxu0 0
  %2357 = vmatpush1.bf16.msra.mxu0 0
  %2358 = vmatprep.subr.bf16.mxu0 0
  %2359 = vmatpush1.bf16.msra.mxu0 0
  %2360 = vmatprep.subr.bf16.mxu0 0
  %2361 = vmatpush1.bf16.msra.mxu0 0
  %2362 = vmatprep.mubr.bf16.mxu0 0
  %2363 = vmatmul.mubr.bf16.gmra.mrb[0].mxu0 %v2286
  %v2364 = vpop.f32.mrb[0].mxu0
  %v2365 = vadd.f32 %v2293, %v2364
  %v2366 = vpop.f32.mrb[0].mxu0
  %v2367 = vpop.f32.mrb[0].mxu0
  %v2368 = vadd.f32 %v2298, %v2367
  %v2369 = vpop.f32.mrb[0].mxu0
  %2370 = vmatprep.mubr.bf16.mxu0 0
  %2371 = vmatmul.mubr.bf16.gmra.mrb[0].mxu0 %v2287
  %v2372 = vpop.f32.mrb[0].mxu0
  %v2373 = vadd.f32 %v2303, %v2372
  %v2374 = vpop.f32.mrb[0].mxu0
  %v2375 = vpop.f32.mrb[0].mxu0
  %v2376 = vadd.f32 %v2308, %v2375
  %v2377 = vpop.f32.mrb[0].mxu0
  %2378 = vmatprep.mubr.bf16.mxu0 0
  %2379 = vmatmul.mubr.bf16.gmra.mrb[0].mxu0 %v2288
  %v2380 = vpop.f32.mrb[0].mxu0
  %v2381 = vadd.f32 %v2313, %v2380
  %v2382 = vpop.f32.mrb[0].mxu0
  %v2383 = vpop.f32.mrb[0].mxu0
  %v2384 = vadd.f32 %v2318, %v2383
  %v2385 = vpop.f32.mrb[0].mxu0
  %2386 = vmatprep.mubr.bf16.mxu0 0
  %2387 = vmatmul.mubr.bf16.gmra.mrb[0].mxu0 %v2289
  %v2388 = vpop.f32.mrb[0].mxu0
  %v2389 = vadd.f32 %v2323, %v2388
  %v2390 = vpop.f32.mrb[0].mxu0
  %v2391 = vpop.f32.mrb[0].mxu0
  %v2392 = vadd.f32 %v2328, %v2391
  %v2393 = vpop.f32.mrb[0].mxu0
  %2394 = vdwg.mxu0
  %v2395 = vadd.f32 %v2365, %v1935
  %v2396 = vadd.f32 %v2368, %v1938
  %v2397 = vadd.f32 %v2373, %v1943
  %v2398 = vadd.f32 %v2376, %v1946
  %v2399 = vadd.f32 %v2381, %v1951
  %v2400 = vadd.f32 %v2384, %v1954
  %v2401 = vadd.f32 %v2389, %v1959
  %v2402 = vadd.f32 %v2392, %v1962
  %v2403 = vmax.f32 %v2395, 0.0
  %v2404 = vmax.f32 %v2396, 0.0
  %v2405 = vmax.f32 %v2397, 0.0
  %v2406 = vmax.f32 %v2398, 0.0
  %v2407 = vmax.f32 %v2399, 0.0
  %v2408 = vmax.f32 %v2400, 0.0
  %v2409 = vmax.f32 %v2401, 0.0
  %v2410 = vmax.f32 %v2402, 0.0
  %v2411 = vpack.c.bf16 %v2404, %v2403
  %v2412 = vpack.c.bf16 %v2406, %v2405
  %v2413 = vpack.c.bf16 %v2408, %v2407
  %v2414 = vpack.c.bf16 %v2410, %v2409
  %2416 = vset.pattern.permute.xlu0 0
  %2417 = vperm.xlu0 %2416, %v275
  %v2418 = vpop.permute.xlu0 %2417
  %2421 = vset.pattern.permute.xlu0 0
  %2422 = vperm.xlu0 %2421, %v276
  %v2423 = vpop.permute.xlu0 %2422
  %2426 = vset.pattern.permute.xlu0 0
  %2427 = vperm.xlu0 %2426, %v277
  %v2428 = vpop.permute.xlu0 %2427
  %2431 = vset.pattern.permute.xlu0 0
  %2432 = vperm.xlu0 %2431, %v278
  %v2433 = vpop.permute.xlu0 %2432
  %2436 = vset.pattern.permute.xlu0 0
  %2437 = vperm.xlu0 %2436, %v279
  %v2438 = vpop.permute.xlu0 %2437
  %2441 = vset.pattern.permute.xlu0 0
  %2442 = vperm.xlu0 %2441, %v280
  %v2443 = vpop.permute.xlu0 %2442
  %2446 = vset.pattern.permute.xlu0 0
  %2447 = vperm.xlu0 %2446, %v281
  %v2448 = vpop.permute.xlu0 %2447
  %2451 = vset.pattern.permute.xlu0 0
  %2452 = vperm.xlu0 %2451, %v282
  %v2453 = vpop.permute.xlu0 %2452
  %2456 = vset.pattern.permute.xlu0 0
  %2457 = vperm.xlu0 %2456, %v283
  %v2458 = vpop.permute.xlu0 %2457
  %2461 = vset.pattern.permute.xlu0 0
  %2462 = vperm.xlu0 %2461, %v284
  %v2463 = vpop.permute.xlu0 %2462
  %2466 = vset.pattern.permute.xlu0 0
  %2467 = vperm.xlu0 %2466, %v285
  %v2468 = vpop.permute.xlu0 %2467
  %2471 = vset.pattern.permute.xlu0 0
  %2472 = vperm.xlu0 %2471, %v286
  %v2473 = vpop.permute.xlu0 %2472
  %2476 = vset.pattern.permute.xlu0 0
  %2477 = vperm.xlu0 %2476, %v287
  %v2478 = vpop.permute.xlu0 %2477
  %2481 = vset.pattern.permute.xlu0 0
  %2482 = vperm.xlu0 %2481, %v288
  %v2483 = vpop.permute.xlu0 %2482
  %2486 = vset.pattern.permute.xlu0 0
  %2487 = vperm.xlu0 %2486, %v289
  %v2488 = vpop.permute.xlu0 %2487
  %2491 = vset.pattern.permute.xlu0 0
  %2492 = vperm.xlu0 %2491, %v290
  %v2493 = vpop.permute.xlu0 %2492
  %v2511 = vunpack.c.l.b16 %v259
  %v2512 = vunpack.c.l.b16 %v260
  %v2513 = vunpack.c.l.b16 %v261
  %v2514 = vunpack.c.l.b16 %v262
  %v2515 = vunpack.c.l.b16 %v263
  %v2516 = vunpack.c.l.b16 %v264
  %v2517 = vunpack.c.l.b16 %v265
  %v2518 = vunpack.c.l.b16 %v266
  %v2519 = vunpack.c.l.b16 %v267
  %v2520 = vunpack.c.l.b16 %v268
  %v2521 = vunpack.c.l.b16 %v269
  %v2522 = vunpack.c.l.b16 %v270
  %v2523 = vunpack.c.l.b16 %v271
  %v2524 = vunpack.c.l.b16 %v272
  %v2525 = vunpack.c.l.b16 %v273
  %v2526 = vunpack.c.l.b16 %v274
  %v2527 = vpack.c.b16 %v2512, %v2511
  %v2528 = vpack.c.b16 %v2514, %v2513
  %v2529 = vpack.c.b16 %v2516, %v2515
  %v2530 = vpack.c.b16 %v2518, %v2517
  %v2531 = vpack.c.b16 %v2520, %v2519
  %v2532 = vpack.c.b16 %v2522, %v2521
  %v2533 = vpack.c.b16 %v2524, %v2523
  %v2534 = vpack.c.b16 %v2526, %v2525
  %v2536 = vsel %vm1309, %v2527, 0
  %v2539 = vsel %vm1309, %v2528, 0
  %v2542 = vsel %vm1309, %v2529, 0
  %v2545 = vsel %vm1309, %v2530, 0
  %v2548 = vsel %vm1309, %v2531, 0
  %v2551 = vsel %vm1309, %v2532, 0
  %v2554 = vsel %vm1309, %v2533, 0
  %v2557 = vsel %vm1309, %v2534, 0
  %2559 = vmatprep.subr.bf16.mxu0 0
  %2560 = vmatpush1.bf16.msra.mxu0 %v2411
  %2561 = vmatprep.subr.bf16.mxu0 0
  %2562 = vmatpush1.bf16.msra.mxu0 %v2412
  %2563 = vmatprep.subr.bf16.mxu0 0
  %2564 = vmatpush1.bf16.msra.mxu0 %v2413
  %2565 = vmatprep.subr.bf16.mxu0 0
  %2566 = vmatpush1.bf16.msra.mxu0 %v2414
  %2567 = vmatprep.subr.bf16.mxu0 0
  %2568 = vmatpush1.bf16.msra.mxu0 0
  %2569 = vmatprep.subr.bf16.mxu0 0
  %2570 = vmatpush1.bf16.msra.mxu0 0
  %2571 = vmatprep.subr.bf16.mxu0 0
  %2572 = vmatpush1.bf16.msra.mxu0 0
  %2573 = vmatprep.subr.bf16.mxu0 0
  %2574 = vmatpush1.bf16.msra.mxu0 0
  %2575 = vmatprep.subr.bf16.mxu0 0
  %2576 = vmatpush1.bf16.msra.mxu0 0
  %2577 = vmatprep.subr.bf16.mxu0 0
  %2578 = vmatpush1.bf16.msra.mxu0 0
  %2579 = vmatprep.subr.bf16.mxu0 0
  %2580 = vmatpush1.bf16.msra.mxu0 0
  %2581 = vmatprep.subr.bf16.mxu0 0
  %2582 = vmatpush1.bf16.msra.mxu0 0
  %2583 = vmatprep.subr.bf16.mxu0 0
  %2584 = vmatpush1.bf16.msra.mxu0 0
  %2585 = vmatprep.subr.bf16.mxu0 0
  %2586 = vmatpush1.bf16.msra.mxu0 0
  %2587 = vmatprep.subr.bf16.mxu0 0
  %2588 = vmatpush1.bf16.msra.mxu0 0
  %2589 = vmatprep.subr.bf16.mxu0 0
  %2590 = vmatpush1.bf16.msra.mxu0 0
  %2591 = vmatprep.mubr.bf16.mxu0 0
  %2592 = vmatmul.mubr.bf16.gmra.mrb[0].mxu0 %v2536
  %v2593 = vpop.f32.mrb[0].mxu0
  %v2594 = vadd.f32 %v2418, %v2593
  %v2595 = vpop.f32.mrb[0].mxu0
  %v2596 = vpop.f32.mrb[0].mxu0
  %v2597 = vadd.f32 %v2423, %v2596
  %v2598 = vpop.f32.mrb[0].mxu0
  %2599 = vmatprep.mubr.bf16.mxu0 0
  %2600 = vmatmul.mubr.bf16.gmra.mrb[0].mxu0 %v2539
  %v2601 = vpop.f32.mrb[0].mxu0
  %v2602 = vadd.f32 %v2428, %v2601
  %v2603 = vpop.f32.mrb[0].mxu0
  %v2604 = vpop.f32.mrb[0].mxu0
  %v2605 = vadd.f32 %v2433, %v2604
  %v2606 = vpop.f32.mrb[0].mxu0
  %2607 = vmatprep.mubr.bf16.mxu0 0
  %2608 = vmatmul.mubr.bf16.gmra.mrb[0].mxu0 %v2542
  %v2609 = vpop.f32.mrb[0].mxu0
  %v2610 = vadd.f32 %v2438, %v2609
  %v2611 = vpop.f32.mrb[0].mxu0
  %v2612 = vpop.f32.mrb[0].mxu0
  %v2613 = vadd.f32 %v2443, %v2612
  %v2614 = vpop.f32.mrb[0].mxu0
  %2615 = vmatprep.mubr.bf16.mxu0 0
  %2616 = vmatmul.mubr.bf16.gmra.mrb[0].mxu0 %v2545
  %v2617 = vpop.f32.mrb[0].mxu0
  %v2618 = vadd.f32 %v2448, %v2617
  %v2619 = vpop.f32.mrb[0].mxu0
  %v2620 = vpop.f32.mrb[0].mxu0
  %v2621 = vadd.f32 %v2453, %v2620
  %v2622 = vpop.f32.mrb[0].mxu0
  %2623 = vmatprep.mubr.bf16.mxu0 0
  %2624 = vmatmul.mubr.bf16.gmra.mrb[0].mxu0 %v2548
  %v2625 = vpop.f32.mrb[0].mxu0
  %v2626 = vadd.f32 %v2458, %v2625
  %v2627 = vpop.f32.mrb[0].mxu0
  %v2628 = vpop.f32.mrb[0].mxu0
  %v2629 = vadd.f32 %v2463, %v2628
  %v2630 = vpop.f32.mrb[0].mxu0
  %2631 = vmatprep.mubr.bf16.mxu0 0
  %2632 = vmatmul.mubr.bf16.gmra.mrb[0].mxu0 %v2551
  %v2633 = vpop.f32.mrb[0].mxu0
  %v2634 = vadd.f32 %v2468, %v2633
  %v2635 = vpop.f32.mrb[0].mxu0
  %v2636 = vpop.f32.mrb[0].mxu0
  %v2637 = vadd.f32 %v2473, %v2636
  %v2638 = vpop.f32.mrb[0].mxu0
  %2639 = vmatprep.mubr.bf16.mxu0 0
  %2640 = vmatmul.mubr.bf16.gmra.mrb[0].mxu0 %v2554
  %v2641 = vpop.f32.mrb[0].mxu0
  %v2642 = vadd.f32 %v2478, %v2641
  %v2643 = vpop.f32.mrb[0].mxu0
  %v2644 = vpop.f32.mrb[0].mxu0
  %v2645 = vadd.f32 %v2483, %v2644
  %v2646 = vpop.f32.mrb[0].mxu0
  %2647 = vmatprep.mubr.bf16.mxu0 0
  %2648 = vmatmul.mubr.bf16.gmra.mrb[0].mxu0 %v2557
  %v2649 = vpop.f32.mrb[0].mxu0
  %v2650 = vadd.f32 %v2488, %v2649
  %v2651 = vpop.f32.mrb[0].mxu0
  %v2652 = vpop.f32.mrb[0].mxu0
  %v2653 = vadd.f32 %v2493, %v2652
  %v2654 = vpop.f32.mrb[0].mxu0
  %2655 = vdwg.mxu0
  %2657 = vset.pattern.permute.xlu0 0
  %2658 = vperm.xlu0 %2657, %v307
  %v2659 = vpop.permute.xlu0 %2658
  %2662 = vset.pattern.permute.xlu0 0
  %2663 = vperm.xlu0 %2662, %v308
  %v2664 = vpop.permute.xlu0 %2663
  %2667 = vset.pattern.permute.xlu0 0
  %2668 = vperm.xlu0 %2667, %v309
  %v2669 = vpop.permute.xlu0 %2668
  %2672 = vset.pattern.permute.xlu0 0
  %2673 = vperm.xlu0 %2672, %v310
  %v2674 = vpop.permute.xlu0 %2673
  %2677 = vset.pattern.permute.xlu0 0
  %2678 = vperm.xlu0 %2677, %v311
  %v2679 = vpop.permute.xlu0 %2678
  %2682 = vset.pattern.permute.xlu0 0
  %2683 = vperm.xlu0 %2682, %v312
  %v2684 = vpop.permute.xlu0 %2683
  %2687 = vset.pattern.permute.xlu0 0
  %2688 = vperm.xlu0 %2687, %v313
  %v2689 = vpop.permute.xlu0 %2688
  %2692 = vset.pattern.permute.xlu0 0
  %2693 = vperm.xlu0 %2692, %v314
  %v2694 = vpop.permute.xlu0 %2693
  %2697 = vset.pattern.permute.xlu0 0
  %2698 = vperm.xlu0 %2697, %v315
  %v2699 = vpop.permute.xlu0 %2698
  %2702 = vset.pattern.permute.xlu0 0
  %2703 = vperm.xlu0 %2702, %v316
  %v2704 = vpop.permute.xlu0 %2703
  %2707 = vset.pattern.permute.xlu0 0
  %2708 = vperm.xlu0 %2707, %v317
  %v2709 = vpop.permute.xlu0 %2708
  %2712 = vset.pattern.permute.xlu0 0
  %2713 = vperm.xlu0 %2712, %v318
  %v2714 = vpop.permute.xlu0 %2713
  %2717 = vset.pattern.permute.xlu0 0
  %2718 = vperm.xlu0 %2717, %v319
  %v2719 = vpop.permute.xlu0 %2718
  %2722 = vset.pattern.permute.xlu0 0
  %2723 = vperm.xlu0 %2722, %v320
  %v2724 = vpop.permute.xlu0 %2723
  %2727 = vset.pattern.permute.xlu0 0
  %2728 = vperm.xlu0 %2727, %v321
  %v2729 = vpop.permute.xlu0 %2728
  %2732 = vset.pattern.permute.xlu0 0
  %2733 = vperm.xlu0 %2732, %v322
  %v2734 = vpop.permute.xlu0 %2733
  %v2752 = vunpack.c.l.b16 %v291
  %v2753 = vunpack.c.l.b16 %v292
  %v2754 = vunpack.c.l.b16 %v293
  %v2755 = vunpack.c.l.b16 %v294
  %v2756 = vunpack.c.l.b16 %v295
  %v2757 = vunpack.c.l.b16 %v296
  %v2758 = vunpack.c.l.b16 %v297
  %v2759 = vunpack.c.l.b16 %v298
  %v2760 = vunpack.c.l.b16 %v299
  %v2761 = vunpack.c.l.b16 %v300
  %v2762 = vunpack.c.l.b16 %v301
  %v2763 = vunpack.c.l.b16 %v302
  %v2764 = vunpack.c.l.b16 %v303
  %v2765 = vunpack.c.l.b16 %v304
  %v2766 = vunpack.c.l.b16 %v305
  %v2767 = vunpack.c.l.b16 %v306
  %v2768 = vpack.c.b16 %v2753, %v2752
  %v2769 = vpack.c.b16 %v2755, %v2754
  %v2770 = vpack.c.b16 %v2757, %v2756
  %v2771 = vpack.c.b16 %v2759, %v2758
  %v2772 = vpack.c.b16 %v2761, %v2760
  %v2773 = vpack.c.b16 %v2763, %v2762
  %v2774 = vpack.c.b16 %v2765, %v2764
  %v2775 = vpack.c.b16 %v2767, %v2766
  %v2777 = vsel %vm1309, %v2768, 0
  %v2780 = vsel %vm1309, %v2769, 0
  %v2783 = vsel %vm1309, %v2770, 0
  %v2786 = vsel %vm1309, %v2771, 0
  %v2789 = vsel %vm1309, %v2772, 0
  %v2792 = vsel %vm1309, %v2773, 0
  %v2795 = vsel %vm1309, %v2774, 0
  %v2798 = vsel %vm1309, %v2775, 0
  %2800 = vmatprep.subr.bf16.mxu0 0
  %2801 = vmatpush1.bf16.msra.mxu0 %v2411
  %2802 = vmatprep.subr.bf16.mxu0 0
  %2803 = vmatpush1.bf16.msra.mxu0 %v2412
  %2804 = vmatprep.subr.bf16.mxu0 0
  %2805 = vmatpush1.bf16.msra.mxu0 %v2413
  %2806 = vmatprep.subr.bf16.mxu0 0
  %2807 = vmatpush1.bf16.msra.mxu0 %v2414
  %2808 = vmatprep.subr.bf16.mxu0 0
  %2809 = vmatpush1.bf16.msra.mxu0 0
  %2810 = vmatprep.subr.bf16.mxu0 0
  %2811 = vmatpush1.bf16.msra.mxu0 0
  %2812 = vmatprep.subr.bf16.mxu0 0
  %2813 = vmatpush1.bf16.msra.mxu0 0
  %2814 = vmatprep.subr.bf16.mxu0 0
  %2815 = vmatpush1.bf16.msra.mxu0 0
  %2816 = vmatprep.subr.bf16.mxu0 0
  %2817 = vmatpush1.bf16.msra.mxu0 0
  %2818 = vmatprep.subr.bf16.mxu0 0
  %2819 = vmatpush1.bf16.msra.mxu0 0
  %2820 = vmatprep.subr.bf16.mxu0 0
  %2821 = vmatpush1.bf16.msra.mxu0 0
  %2822 = vmatprep.subr.bf16.mxu0 0
  %2823 = vmatpush1.bf16.msra.mxu0 0
  %2824 = vmatprep.subr.bf16.mxu0 0
  %2825 = vmatpush1.bf16.msra.mxu0 0
  %2826 = vmatprep.subr.bf16.mxu0 0
  %2827 = vmatpush1.bf16.msra.mxu0 0
  %2828 = vmatprep.subr.bf16.mxu0 0
  %2829 = vmatpush1.bf16.msra.mxu0 0
  %2830 = vmatprep.subr.bf16.mxu0 0
  %2831 = vmatpush1.bf16.msra.mxu0 0
  %2832 = vmatprep.mubr.bf16.mxu0 0
  %2833 = vmatmul.mubr.bf16.gmra.mrb[0].mxu0 %v2777
  %v2834 = vpop.f32.mrb[0].mxu0
  %v2835 = vadd.f32 %v2659, %v2834
  %v2836 = vpop.f32.mrb[0].mxu0
  %v2837 = vpop.f32.mrb[0].mxu0
  %v2838 = vadd.f32 %v2664, %v2837
  %v2839 = vpop.f32.mrb[0].mxu0
  %2840 = vmatprep.mubr.bf16.mxu0 0
  %2841 = vmatmul.mubr.bf16.gmra.mrb[0].mxu0 %v2780
  %v2842 = vpop.f32.mrb[0].mxu0
  %v2843 = vadd.f32 %v2669, %v2842
  %v2844 = vpop.f32.mrb[0].mxu0
  %v2845 = vpop.f32.mrb[0].mxu0
  %v2846 = vadd.f32 %v2674, %v2845
  %v2847 = vpop.f32.mrb[0].mxu0
  %2848 = vmatprep.mubr.bf16.mxu0 0
  %2849 = vmatmul.mubr.bf16.gmra.mrb[0].mxu0 %v2783
  %v2850 = vpop.f32.mrb[0].mxu0
  %v2851 = vadd.f32 %v2679, %v2850
  %v2852 = vpop.f32.mrb[0].mxu0
  %v2853 = vpop.f32.mrb[0].mxu0
  %v2854 = vadd.f32 %v2684, %v2853
  %v2855 = vpop.f32.mrb[0].mxu0
  %2856 = vmatprep.mubr.bf16.mxu0 0
  %2857 = vmatmul.mubr.bf16.gmra.mrb[0].mxu0 %v2786
  %v2858 = vpop.f32.mrb[0].mxu0
  %v2859 = vadd.f32 %v2689, %v2858
  %v2860 = vpop.f32.mrb[0].mxu0
  %v2861 = vpop.f32.mrb[0].mxu0
  %v2862 = vadd.f32 %v2694, %v2861
  %v2863 = vpop.f32.mrb[0].mxu0
  %2864 = vmatprep.mubr.bf16.mxu0 0
  %2865 = vmatmul.mubr.bf16.gmra.mrb[0].mxu0 %v2789
  %v2866 = vpop.f32.mrb[0].mxu0
  %v2867 = vadd.f32 %v2699, %v2866
  %v2868 = vpop.f32.mrb[0].mxu0
  %v2869 = vpop.f32.mrb[0].mxu0
  %v2870 = vadd.f32 %v2704, %v2869
  %v2871 = vpop.f32.mrb[0].mxu0
  %2872 = vmatprep.mubr.bf16.mxu0 0
  %2873 = vmatmul.mubr.bf16.gmra.mrb[0].mxu0 %v2792
  %v2874 = vpop.f32.mrb[0].mxu0
  %v2875 = vadd.f32 %v2709, %v2874
  %v2876 = vpop.f32.mrb[0].mxu0
  %v2877 = vpop.f32.mrb[0].mxu0
  %v2878 = vadd.f32 %v2714, %v2877
  %v2879 = vpop.f32.mrb[0].mxu0
  %2880 = vmatprep.mubr.bf16.mxu0 0
  %2881 = vmatmul.mubr.bf16.gmra.mrb[0].mxu0 %v2795
  %v2882 = vpop.f32.mrb[0].mxu0
  %v2883 = vadd.f32 %v2719, %v2882
  %v2884 = vpop.f32.mrb[0].mxu0
  %v2885 = vpop.f32.mrb[0].mxu0
  %v2886 = vadd.f32 %v2724, %v2885
  %v2887 = vpop.f32.mrb[0].mxu0
  %2888 = vmatprep.mubr.bf16.mxu0 0
  %2889 = vmatmul.mubr.bf16.gmra.mrb[0].mxu0 %v2798
  %v2890 = vpop.f32.mrb[0].mxu0
  %v2891 = vadd.f32 %v2729, %v2890
  %v2892 = vpop.f32.mrb[0].mxu0
  %v2893 = vpop.f32.mrb[0].mxu0
  %v2894 = vadd.f32 %v2734, %v2893
  %v2895 = vpop.f32.mrb[0].mxu0
  %2896 = vdwg.mxu0
  %v2897 = vpack.c.bf16 %v2597, %v2594
  %v2898 = vpack.c.bf16 %v2605, %v2602
  %v2899 = vpack.c.bf16 %v2613, %v2610
  %v2900 = vpack.c.bf16 %v2621, %v2618
  %v2901 = vpack.c.bf16 %v2629, %v2626
  %v2902 = vpack.c.bf16 %v2637, %v2634
  %v2903 = vpack.c.bf16 %v2645, %v2642
  %v2904 = vpack.c.bf16 %v2653, %v2650
  %2905 = vmatprep.subr.bf16.mxu0 0
  %2906 = vmatpush1.bf16.msra.mxu0 %v396
  %2907 = vmatprep.subr.bf16.mxu0 0
  %2908 = vmatpush1.bf16.msra.mxu0 %v397
  %2909 = vmatprep.subr.bf16.mxu0 0
  %2910 = vmatpush1.bf16.msra.mxu0 %v398
  %2911 = vmatprep.subr.bf16.mxu0 0
  %2912 = vmatpush1.bf16.msra.mxu0 %v399
  %2913 = vmatprep.subr.bf16.mxu0 0
  %2914 = vmatpush1.bf16.msra.mxu0 %v400
  %2915 = vmatprep.subr.bf16.mxu0 0
  %2916 = vmatpush1.bf16.msra.mxu0 %v401
  %2917 = vmatprep.subr.bf16.mxu0 0
  %2918 = vmatpush1.bf16.msra.mxu0 %v402
  %2919 = vmatprep.subr.bf16.mxu0 0
  %2920 = vmatpush1.bf16.msra.mxu0 %v403
  %2921 = vmatprep.subr.bf16.mxu0 0
  %2922 = vmatpush1.bf16.msra.mxu0 0
  %2923 = vmatprep.subr.bf16.mxu0 0
  %2924 = vmatpush1.bf16.msra.mxu0 0
  %2925 = vmatprep.subr.bf16.mxu0 0
  %2926 = vmatpush1.bf16.msra.mxu0 0
  %2927 = vmatprep.subr.bf16.mxu0 0
  %2928 = vmatpush1.bf16.msra.mxu0 0
  %2929 = vmatprep.subr.bf16.mxu0 0
  %2930 = vmatpush1.bf16.msra.mxu0 0
  %2931 = vmatprep.subr.bf16.mxu0 0
  %2932 = vmatpush1.bf16.msra.mxu0 0
  %2933 = vmatprep.subr.bf16.mxu0 0
  %2934 = vmatpush1.bf16.msra.mxu0 0
  %2935 = vmatprep.subr.bf16.mxu0 0
  %2936 = vmatpush1.bf16.msra.mxu0 0
  %2937 = vmatprep.mubr.bf16.mxu0 0
  %2938 = vmatmul.mubr.bf16.gmra.mrb[0].mxu0 %v2897
  %v2939 = vpop.f32.mrb[0].mxu0
  %v2940 = vadd.f32 0.0, %v2939
  %v2941 = vpop.f32.mrb[0].mxu0
  %v2942 = vpop.f32.mrb[0].mxu0
  %v2943 = vadd.f32 0.0, %v2942
  %v2944 = vpop.f32.mrb[0].mxu0
  %2945 = vmatprep.mubr.bf16.mxu0 0
  %2946 = vmatmul.mubr.bf16.gmra.mrb[0].mxu0 %v2898
  %v2947 = vpop.f32.mrb[0].mxu0
  %v2948 = vadd.f32 0.0, %v2947
  %v2949 = vpop.f32.mrb[0].mxu0
  %v2950 = vpop.f32.mrb[0].mxu0
  %v2951 = vadd.f32 0.0, %v2950
  %v2952 = vpop.f32.mrb[0].mxu0
  %2953 = vmatprep.mubr.bf16.mxu0 0
  %2954 = vmatmul.mubr.bf16.gmra.mrb[0].mxu0 %v2899
  %v2955 = vpop.f32.mrb[0].mxu0
  %v2956 = vadd.f32 0.0, %v2955
  %v2957 = vpop.f32.mrb[0].mxu0
  %v2958 = vpop.f32.mrb[0].mxu0
  %v2959 = vadd.f32 0.0, %v2958
  %v2960 = vpop.f32.mrb[0].mxu0
  %2961 = vmatprep.mubr.bf16.mxu0 0
  %2962 = vmatmul.mubr.bf16.gmra.mrb[0].mxu0 %v2900
  %v2963 = vpop.f32.mrb[0].mxu0
  %v2964 = vadd.f32 0.0, %v2963
  %v2965 = vpop.f32.mrb[0].mxu0
  %v2966 = vpop.f32.mrb[0].mxu0
  %v2967 = vadd.f32 0.0, %v2966
  %v2968 = vpop.f32.mrb[0].mxu0
  %2969 = vmatprep.mubr.bf16.mxu0 0
  %2970 = vmatmul.mubr.bf16.gmra.mrb[0].mxu0 %v2901
  %v2971 = vpop.f32.mrb[0].mxu0
  %v2972 = vadd.f32 0.0, %v2971
  %v2973 = vpop.f32.mrb[0].mxu0
  %v2974 = vpop.f32.mrb[0].mxu0
  %v2975 = vadd.f32 0.0, %v2974
  %v2976 = vpop.f32.mrb[0].mxu0
  %2977 = vmatprep.mubr.bf16.mxu0 0
  %2978 = vmatmul.mubr.bf16.gmra.mrb[0].mxu0 %v2902
  %v2979 = vpop.f32.mrb[0].mxu0
  %v2980 = vadd.f32 0.0, %v2979
  %v2981 = vpop.f32.mrb[0].mxu0
  %v2982 = vpop.f32.mrb[0].mxu0
  %v2983 = vadd.f32 0.0, %v2982
  %v2984 = vpop.f32.mrb[0].mxu0
  %2985 = vmatprep.mubr.bf16.mxu0 0
  %2986 = vmatmul.mubr.bf16.gmra.mrb[0].mxu0 %v2903
  %v2987 = vpop.f32.mrb[0].mxu0
  %v2988 = vadd.f32 0.0, %v2987
  %v2989 = vpop.f32.mrb[0].mxu0
  %v2990 = vpop.f32.mrb[0].mxu0
  %v2991 = vadd.f32 0.0, %v2990
  %v2992 = vpop.f32.mrb[0].mxu0
  %2993 = vmatprep.mubr.bf16.mxu0 0
  %2994 = vmatmul.mubr.bf16.gmra.mrb[0].mxu0 %v2904
  %v2995 = vpop.f32.mrb[0].mxu0
  %v2996 = vadd.f32 0.0, %v2995
  %v2997 = vpop.f32.mrb[0].mxu0
  %v2998 = vpop.f32.mrb[0].mxu0
  %v2999 = vadd.f32 0.0, %v2998
  %v3000 = vpop.f32.mrb[0].mxu0
  %3001 = vdwg.mxu0
  %3002 = vmatprep.subr.bf16.mxu0 0
  %3003 = vmatpush1.bf16.msra.mxu0 %v2897
  %3004 = vmatprep.subr.bf16.mxu0 0
  %3005 = vmatpush1.bf16.msra.mxu0 %v2898
  %3006 = vmatprep.subr.bf16.mxu0 0
  %3007 = vmatpush1.bf16.msra.mxu0 %v2899
  %3008 = vmatprep.subr.bf16.mxu0 0
  %3009 = vmatpush1.bf16.msra.mxu0 %v2900
  %3010 = vmatprep.subr.bf16.mxu0 0
  %3011 = vmatpush1.bf16.msra.mxu0 %v2901
  %3012 = vmatprep.subr.bf16.mxu0 0
  %3013 = vmatpush1.bf16.msra.mxu0 %v2902
  %3014 = vmatprep.subr.bf16.mxu0 0
  %3015 = vmatpush1.bf16.msra.mxu0 %v2903
  %3016 = vmatprep.subr.bf16.mxu0 0
  %3017 = vmatpush1.bf16.msra.mxu0 %v2904
  %3018 = vmatprep.subr.bf16.mxu0 0
  %3019 = vmatpush1.bf16.msra.mxu0 0
  %3020 = vmatprep.subr.bf16.mxu0 0
  %3021 = vmatpush1.bf16.msra.mxu0 0
  %3022 = vmatprep.subr.bf16.mxu0 0
  %3023 = vmatpush1.bf16.msra.mxu0 0
  %3024 = vmatprep.subr.bf16.mxu0 0
  %3025 = vmatpush1.bf16.msra.mxu0 0
  %3026 = vmatprep.subr.bf16.mxu0 0
  %3027 = vmatpush1.bf16.msra.mxu0 0
  %3028 = vmatprep.subr.bf16.mxu0 0
  %3029 = vmatpush1.bf16.msra.mxu0 0
  %3030 = vmatprep.subr.bf16.mxu0 0
  %3031 = vmatpush1.bf16.msra.mxu0 0
  %3032 = vmatprep.subr.bf16.mxu0 0
  %3033 = vmatpush1.bf16.msra.mxu0 0
  %3034 = vmatprep.mubr.bf16.mxu0 0
  %3035 = vmatmul.mubr.bf16.gmra.mrb[0].mxu0 %v324
  %v3036 = vpop.f32.mrb[0].mxu0
  %v3037 = vadd.f32 0.0, %v3036
  %v3038 = vpop.f32.mrb[0].mxu0
  %v3039 = vpop.f32.mrb[0].mxu0
  %v3040 = vpop.f32.mrb[0].mxu0
  %3041 = vdwg.mxu0
  %v3042 = vpack.c.bf16 %v2943, %v2940
  %v3043 = vpack.c.bf16 %v2951, %v2948
  %v3044 = vpack.c.bf16 %v2959, %v2956
  %v3045 = vpack.c.bf16 %v2967, %v2964
  %v3046 = vpack.c.bf16 %v2975, %v2972
  %v3047 = vpack.c.bf16 %v2983, %v2980
  %v3048 = vpack.c.bf16 %v2991, %v2988
  %v3049 = vpack.c.bf16 %v2999, %v2996
  %v3050 = vpack.c.bf16 %v3037, %v3037
  %3051 = vmatprep.subr.bf16.mxu0 0
  %3052 = vmatpush1.bf16.msra.mxu0 %v440
  %3053 = vmatprep.subr.bf16.mxu0 0
  %3054 = vmatpush1.bf16.msra.mxu0 %v441
  %3055 = vmatprep.subr.bf16.mxu0 0
  %3056 = vmatpush1.bf16.msra.mxu0 %v442
  %3057 = vmatprep.subr.bf16.mxu0 0
  %3058 = vmatpush1.bf16.msra.mxu0 %v443
  %3059 = vmatprep.subr.bf16.mxu0 0
  %3060 = vmatpush1.bf16.msra.mxu0 %v444
  %3061 = vmatprep.subr.bf16.mxu0 0
  %3062 = vmatpush1.bf16.msra.mxu0 %v445
  %3063 = vmatprep.subr.bf16.mxu0 0
  %3064 = vmatpush1.bf16.msra.mxu0 %v446
  %3065 = vmatprep.subr.bf16.mxu0 0
  %3066 = vmatpush1.bf16.msra.mxu0 %v447
  %3067 = vmatprep.subr.bf16.mxu0 0
  %3068 = vmatpush1.bf16.msra.mxu0 0
  %3069 = vmatprep.subr.bf16.mxu0 0
  %3070 = vmatpush1.bf16.msra.mxu0 0
  %3071 = vmatprep.subr.bf16.mxu0 0
  %3072 = vmatpush1.bf16.msra.mxu0 0
  %3073 = vmatprep.subr.bf16.mxu0 0
  %3074 = vmatpush1.bf16.msra.mxu0 0
  %3075 = vmatprep.subr.bf16.mxu0 0
  %3076 = vmatpush1.bf16.msra.mxu0 0
  %3077 = vmatprep.subr.bf16.mxu0 0
  %3078 = vmatpush1.bf16.msra.mxu0 0
  %3079 = vmatprep.subr.bf16.mxu0 0
  %3080 = vmatpush1.bf16.msra.mxu0 0
  %3081 = vmatprep.subr.bf16.mxu0 0
  %3082 = vmatpush1.bf16.msra.mxu0 0
  %3083 = vmatprep.mubr.bf16.mxu0 0
  %3084 = vmatmul.mubr.bf16.gmra.mrb[0].mxu0 %v3050
  %v3085 = vpop.f32.mrb[0].mxu0
  %v3086 = vadd.f32 0.0, %v3085
  %v3087 = vpop.f32.mrb[0].mxu0
  %v3088 = vpop.f32.mrb[0].mxu0
  %v3089 = vpop.f32.mrb[0].mxu0
  %3090 = vdwg.mxu0
  %3091 = vmatprep.subr.bf16.mxu0 0
  %3092 = vmatpush1.bf16.msra.mxu0 %v3042
  %3093 = vmatprep.subr.bf16.mxu0 0
  %3094 = vmatpush1.bf16.msra.mxu0 %v3043
  %3095 = vmatprep.subr.bf16.mxu0 0
  %3096 = vmatpush1.bf16.msra.mxu0 %v3044
  %3097 = vmatprep.subr.bf16.mxu0 0
  %3098 = vmatpush1.bf16.msra.mxu0 %v3045
  %3099 = vmatprep.subr.bf16.mxu0 0
  %3100 = vmatpush1.bf16.msra.mxu0 %v3046
  %3101 = vmatprep.subr.bf16.mxu0 0
  %3102 = vmatpush1.bf16.msra.mxu0 %v3047
  %3103 = vmatprep.subr.bf16.mxu0 0
  %3104 = vmatpush1.bf16.msra.mxu0 %v3048
  %3105 = vmatprep.subr.bf16.mxu0 0
  %3106 = vmatpush1.bf16.msra.mxu0 %v3049
  %3107 = vmatprep.subr.bf16.mxu0 0
  %3108 = vmatpush1.bf16.msra.mxu0 0
  %3109 = vmatprep.subr.bf16.mxu0 0
  %3110 = vmatpush1.bf16.msra.mxu0 0
  %3111 = vmatprep.subr.bf16.mxu0 0
  %3112 = vmatpush1.bf16.msra.mxu0 0
  %3113 = vmatprep.subr.bf16.mxu0 0
  %3114 = vmatpush1.bf16.msra.mxu0 0
  %3115 = vmatprep.subr.bf16.mxu0 0
  %3116 = vmatpush1.bf16.msra.mxu0 0
  %3117 = vmatprep.subr.bf16.mxu0 0
  %3118 = vmatpush1.bf16.msra.mxu0 0
  %3119 = vmatprep.subr.bf16.mxu0 0
  %3120 = vmatpush1.bf16.msra.mxu0 0
  %3121 = vmatprep.subr.bf16.mxu0 0
  %3122 = vmatpush1.bf16.msra.mxu0 0
  %3123 = vmatprep.mubr.bf16.mxu0 0
  %3124 = vmatmul.mubr.bf16.gmra.mrb[0].mxu0 %v323
  %v3125 = vpop.f32.mrb[0].mxu0
  %v3126 = vadd.f32 %v3086, %v3125
  %v3127 = vpop.f32.mrb[0].mxu0
  %v3128 = vpop.f32.mrb[0].mxu0
  %v3129 = vpop.f32.mrb[0].mxu0
  %3130 = vdwg.mxu0
  %v3131 = vadd.f32 %v3126, %v947
  %vm3132 = vcmp.ge.f32.partialorder %v3131, 0.0
  %v3133 = vmul.f32 %v3131, 0.2
  %v3134 = vsel %vm3132, %v3131, %v3133
  %vm3135 = vcmask 1040384
  %v3136 = vsel %vm3135, %v3134, -inf
  %3137 = vmax.xlane.f32.xlu0 %v3136
  %v3138 = vpop.xlane.xlu0 %3137
  %v3139 = vsub.f32 %v3134, %v3138
  %v3140 = vmul.f32 %v3139, 1.442695
  %v3141 = vpow.pop %v3140
  %v3142 = vpack.c.bf16 %v3141, %v3141
  %3143 = vmatprep.subr.bf16.mxu0 0
  %3144 = vmatpush1.bf16.msra.mxu0 %v528
  %3145 = vmatprep.subr.bf16.mxu0 0
  %3146 = vmatpush1.bf16.msra.mxu0 %v529
  %3147 = vmatprep.subr.bf16.mxu0 0
  %3148 = vmatpush1.bf16.msra.mxu0 %v530
  %3149 = vmatprep.subr.bf16.mxu0 0
  %3150 = vmatpush1.bf16.msra.mxu0 %v531
  %3151 = vmatprep.subr.bf16.mxu0 0
  %3152 = vmatpush1.bf16.msra.mxu0 %v532
  %3153 = vmatprep.subr.bf16.mxu0 0
  %3154 = vmatpush1.bf16.msra.mxu0 %v533
  %3155 = vmatprep.subr.bf16.mxu0 0
  %3156 = vmatpush1.bf16.msra.mxu0 %v534
  %3157 = vmatprep.subr.bf16.mxu0 0
  %3158 = vmatpush1.bf16.msra.mxu0 %v535
  %3159 = vmatprep.subr.bf16.mxu0 0
  %3160 = vmatpush1.bf16.msra.mxu0 0
  %3161 = vmatprep.subr.bf16.mxu0 0
  %3162 = vmatpush1.bf16.msra.mxu0 0
  %3163 = vmatprep.subr.bf16.mxu0 0
  %3164 = vmatpush1.bf16.msra.mxu0 0
  %3165 = vmatprep.subr.bf16.mxu0 0
  %3166 = vmatpush1.bf16.msra.mxu0 0
  %3167 = vmatprep.subr.bf16.mxu0 0
  %3168 = vmatpush1.bf16.msra.mxu0 0
  %3169 = vmatprep.subr.bf16.mxu0 0
  %3170 = vmatpush1.bf16.msra.mxu0 0
  %3171 = vmatprep.subr.bf16.mxu0 0
  %3172 = vmatpush1.bf16.msra.mxu0 0
  %3173 = vmatprep.subr.bf16.mxu0 0
  %3174 = vmatpush1.bf16.msra.mxu0 0
  %3175 = vmatprep.mubr.bf16.mxu0 0
  %3176 = vmatmul.mubr.bf16.gmra.mrb[0].mxu0 %v3142
  %v3177 = vpop.f32.mrb[0].mxu0
  %v3178 = vadd.f32 0.0, %v3177
  %v3179 = vpop.f32.mrb[0].mxu0
  %v3180 = vpop.f32.mrb[0].mxu0
  %v3181 = vpop.f32.mrb[0].mxu0
  %3182 = vdwg.mxu0
  %vm3183 = vcmp.gt.f32.partialorder %v3178, 0.0
  %v3184 = vrcp.pop %v3178
  %v3185 = vmul.f32 1.0, %v3184
  %v3186 = vsel %vm3183, %v3185, 0.0
  %v3187 = vpack.c.bf16 %v3186, %v3186
  %3188 = vmatprep.subr.bf16.mxu0 0
  %3189 = vmatpush1.bf16.msra.mxu0 %v440
  %3190 = vmatprep.subr.bf16.mxu0 0
  %3191 = vmatpush1.bf16.msra.mxu0 %v441
  %3192 = vmatprep.subr.bf16.mxu0 0
  %3193 = vmatpush1.bf16.msra.mxu0 %v442
  %3194 = vmatprep.subr.bf16.mxu0 0
  %3195 = vmatpush1.bf16.msra.mxu0 %v443
  %3196 = vmatprep.subr.bf16.mxu0 0
  %3197 = vmatpush1.bf16.msra.mxu0 %v444
  %3198 = vmatprep.subr.bf16.mxu0 0
  %3199 = vmatpush1.bf16.msra.mxu0 %v445
  %3200 = vmatprep.subr.bf16.mxu0 0
  %3201 = vmatpush1.bf16.msra.mxu0 %v446
  %3202 = vmatprep.subr.bf16.mxu0 0
  %3203 = vmatpush1.bf16.msra.mxu0 %v447
  %3204 = vmatprep.subr.bf16.mxu0 0
  %3205 = vmatpush1.bf16.msra.mxu0 0
  %3206 = vmatprep.subr.bf16.mxu0 0
  %3207 = vmatpush1.bf16.msra.mxu0 0
  %3208 = vmatprep.subr.bf16.mxu0 0
  %3209 = vmatpush1.bf16.msra.mxu0 0
  %3210 = vmatprep.subr.bf16.mxu0 0
  %3211 = vmatpush1.bf16.msra.mxu0 0
  %3212 = vmatprep.subr.bf16.mxu0 0
  %3213 = vmatpush1.bf16.msra.mxu0 0
  %3214 = vmatprep.subr.bf16.mxu0 0
  %3215 = vmatpush1.bf16.msra.mxu0 0
  %3216 = vmatprep.subr.bf16.mxu0 0
  %3217 = vmatpush1.bf16.msra.mxu0 0
  %3218 = vmatprep.subr.bf16.mxu0 0
  %3219 = vmatpush1.bf16.msra.mxu0 0
  %3220 = vmatprep.mubr.bf16.mxu0 0
  %3221 = vmatmul.mubr.bf16.gmra.mrb[0].mxu0 %v3187
  %v3222 = vpop.f32.mrb[0].mxu0
  %v3223 = vadd.f32 0.0, %v3222
  %v3224 = vpop.f32.mrb[0].mxu0
  %v3225 = vpop.f32.mrb[0].mxu0
  %v3226 = vpop.f32.mrb[0].mxu0
  %3227 = vdwg.mxu0
  %v3228 = vmul.f32 %v3141, %v3223
  %v3229 = vlaneseq
  %v3230 = vshrl.u32 %v3229, 7
  %v3231 = vsub.s32 0, %v3230
  %v3232 = vrot.slane %v3228, %v3231
  %v3233 = vmul.f32 %v2940, %v3232
  %v3234 = vmul.f32 %v2943, %v3232
  %v3235 = vmul.f32 %v2948, %v3232
  %v3236 = vmul.f32 %v2951, %v3232
  %v3237 = vmul.f32 %v2956, %v3232
  %v3238 = vmul.f32 %v2959, %v3232
  %v3239 = vmul.f32 %v2964, %v3232
  %v3240 = vmul.f32 %v2967, %v3232
  %v3241 = vmul.f32 %v2972, %v3232
  %v3242 = vmul.f32 %v2975, %v3232
  %v3243 = vmul.f32 %v2980, %v3232
  %v3244 = vmul.f32 %v2983, %v3232
  %v3245 = vmul.f32 %v2988, %v3232
  %v3246 = vmul.f32 %v2991, %v3232
  %v3247 = vmul.f32 %v2996, %v3232
  %v3248 = vmul.f32 %v2999, %v3232
  %v3249 = vpack.c.bf16 %v3234, %v3233
  %v3250 = vpack.c.bf16 %v3236, %v3235
  %v3251 = vpack.c.bf16 %v3238, %v3237
  %v3252 = vpack.c.bf16 %v3240, %v3239
  %v3253 = vpack.c.bf16 %v3242, %v3241
  %v3254 = vpack.c.bf16 %v3244, %v3243
  %v3255 = vpack.c.bf16 %v3246, %v3245
  %v3256 = vpack.c.bf16 %v3248, %v3247
  %3258 = vset.pattern.permute.xlu0 0
  %3259 = vperm.xlu0 %3258, %v325
  %v3260 = vpop.permute.xlu0 %3259
  %3263 = vset.pattern.permute.xlu0 0
  %3264 = vperm.xlu0 %3263, %v326
  %v3265 = vpop.permute.xlu0 %3264
  %3268 = vset.pattern.permute.xlu0 0
  %3269 = vperm.xlu0 %3268, %v327
  %v3270 = vpop.permute.xlu0 %3269
  %3273 = vset.pattern.permute.xlu0 0
  %3274 = vperm.xlu0 %3273, %v328
  %v3275 = vpop.permute.xlu0 %3274
  %3278 = vset.pattern.permute.xlu0 0
  %3279 = vperm.xlu0 %3278, %v329
  %v3280 = vpop.permute.xlu0 %3279
  %3283 = vset.pattern.permute.xlu0 0
  %3284 = vperm.xlu0 %3283, %v330
  %v3285 = vpop.permute.xlu0 %3284
  %3288 = vset.pattern.permute.xlu0 0
  %3289 = vperm.xlu0 %3288, %v331
  %v3290 = vpop.permute.xlu0 %3289
  %3293 = vset.pattern.permute.xlu0 0
  %3294 = vperm.xlu0 %3293, %v332
  %v3295 = vpop.permute.xlu0 %3294
  %3298 = vset.pattern.permute.xlu0 0
  %3299 = vperm.xlu0 %3298, %v333
  %v3300 = vpop.permute.xlu0 %3299
  %3303 = vset.pattern.permute.xlu0 0
  %3304 = vperm.xlu0 %3303, %v334
  %v3305 = vpop.permute.xlu0 %3304
  %3308 = vset.pattern.permute.xlu0 0
  %3309 = vperm.xlu0 %3308, %v335
  %v3310 = vpop.permute.xlu0 %3309
  %3313 = vset.pattern.permute.xlu0 0
  %3314 = vperm.xlu0 %3313, %v336
  %v3315 = vpop.permute.xlu0 %3314
  %3318 = vset.pattern.permute.xlu0 0
  %3319 = vperm.xlu0 %3318, %v337
  %v3320 = vpop.permute.xlu0 %3319
  %3323 = vset.pattern.permute.xlu0 0
  %3324 = vperm.xlu0 %3323, %v338
  %v3325 = vpop.permute.xlu0 %3324
  %3328 = vset.pattern.permute.xlu0 0
  %3329 = vperm.xlu0 %3328, %v339
  %v3330 = vpop.permute.xlu0 %3329
  %3333 = vset.pattern.permute.xlu0 0
  %3334 = vperm.xlu0 %3333, %v340
  %v3335 = vpop.permute.xlu0 %3334
  %3337 = vmatprep.subr.bf16.mxu0 0
  %3338 = vmatpush1.bf16.msra.mxu0 %v528
  %3339 = vmatprep.subr.bf16.mxu0 0
  %3340 = vmatpush1.bf16.msra.mxu0 %v529
  %3341 = vmatprep.subr.bf16.mxu0 0
  %3342 = vmatpush1.bf16.msra.mxu0 %v530
  %3343 = vmatprep.subr.bf16.mxu0 0
  %3344 = vmatpush1.bf16.msra.mxu0 %v531
  %3345 = vmatprep.subr.bf16.mxu0 0
  %3346 = vmatpush1.bf16.msra.mxu0 %v532
  %3347 = vmatprep.subr.bf16.mxu0 0
  %3348 = vmatpush1.bf16.msra.mxu0 %v533
  %3349 = vmatprep.subr.bf16.mxu0 0
  %3350 = vmatpush1.bf16.msra.mxu0 %v534
  %3351 = vmatprep.subr.bf16.mxu0 0
  %3352 = vmatpush1.bf16.msra.mxu0 %v535
  %3353 = vmatprep.subr.bf16.mxu0 0
  %3354 = vmatpush1.bf16.msra.mxu0 0
  %3355 = vmatprep.subr.bf16.mxu0 0
  %3356 = vmatpush1.bf16.msra.mxu0 0
  %3357 = vmatprep.subr.bf16.mxu0 0
  %3358 = vmatpush1.bf16.msra.mxu0 0
  %3359 = vmatprep.subr.bf16.mxu0 0
  %3360 = vmatpush1.bf16.msra.mxu0 0
  %3361 = vmatprep.subr.bf16.mxu0 0
  %3362 = vmatpush1.bf16.msra.mxu0 0
  %3363 = vmatprep.subr.bf16.mxu0 0
  %3364 = vmatpush1.bf16.msra.mxu0 0
  %3365 = vmatprep.subr.bf16.mxu0 0
  %3366 = vmatpush1.bf16.msra.mxu0 0
  %3367 = vmatprep.subr.bf16.mxu0 0
  %3368 = vmatpush1.bf16.msra.mxu0 0
  %3369 = vmatprep.mubr.bf16.mxu0 0
  %3370 = vmatmul.mubr.bf16.gmra.mrb[0].mxu0 %v3249
  %v3371 = vpop.f32.mrb[0].mxu0
  %v3372 = vadd.f32 %v3260, %v3371
  %v3373 = vpop.f32.mrb[0].mxu0
  %v3374 = vpop.f32.mrb[0].mxu0
  %v3375 = vadd.f32 %v3265, %v3374
  %v3376 = vpop.f32.mrb[0].mxu0
  %3377 = vmatprep.mubr.bf16.mxu0 0
  %3378 = vmatmul.mubr.bf16.gmra.mrb[0].mxu0 %v3250
  %v3379 = vpop.f32.mrb[0].mxu0
  %v3380 = vadd.f32 %v3270, %v3379
  %v3381 = vpop.f32.mrb[0].mxu0
  %v3382 = vpop.f32.mrb[0].mxu0
  %v3383 = vadd.f32 %v3275, %v3382
  %v3384 = vpop.f32.mrb[0].mxu0
  %3385 = vmatprep.mubr.bf16.mxu0 0
  %3386 = vmatmul.mubr.bf16.gmra.mrb[0].mxu0 %v3251
  %v3387 = vpop.f32.mrb[0].mxu0
  %v3388 = vadd.f32 %v3280, %v3387
  %v3389 = vpop.f32.mrb[0].mxu0
  %v3390 = vpop.f32.mrb[0].mxu0
  %v3391 = vadd.f32 %v3285, %v3390
  %v3392 = vpop.f32.mrb[0].mxu0
  %3393 = vmatprep.mubr.bf16.mxu0 0
  %3394 = vmatmul.mubr.bf16.gmra.mrb[0].mxu0 %v3252
  %v3395 = vpop.f32.mrb[0].mxu0
  %v3396 = vadd.f32 %v3290, %v3395
  %v3397 = vpop.f32.mrb[0].mxu0
  %v3398 = vpop.f32.mrb[0].mxu0
  %v3399 = vadd.f32 %v3295, %v3398
  %v3400 = vpop.f32.mrb[0].mxu0
  %3401 = vmatprep.mubr.bf16.mxu0 0
  %3402 = vmatmul.mubr.bf16.gmra.mrb[0].mxu0 %v3253
  %v3403 = vpop.f32.mrb[0].mxu0
  %v3404 = vadd.f32 %v3300, %v3403
  %v3405 = vpop.f32.mrb[0].mxu0
  %v3406 = vpop.f32.mrb[0].mxu0
  %v3407 = vadd.f32 %v3305, %v3406
  %v3408 = vpop.f32.mrb[0].mxu0
  %3409 = vmatprep.mubr.bf16.mxu0 0
  %3410 = vmatmul.mubr.bf16.gmra.mrb[0].mxu0 %v3254
  %v3411 = vpop.f32.mrb[0].mxu0
  %v3412 = vadd.f32 %v3310, %v3411
  %v3413 = vpop.f32.mrb[0].mxu0
  %v3414 = vpop.f32.mrb[0].mxu0
  %v3415 = vadd.f32 %v3315, %v3414
  %v3416 = vpop.f32.mrb[0].mxu0
  %3417 = vmatprep.mubr.bf16.mxu0 0
  %3418 = vmatmul.mubr.bf16.gmra.mrb[0].mxu0 %v3255
  %v3419 = vpop.f32.mrb[0].mxu0
  %v3420 = vadd.f32 %v3320, %v3419
  %v3421 = vpop.f32.mrb[0].mxu0
  %v3422 = vpop.f32.mrb[0].mxu0
  %v3423 = vadd.f32 %v3325, %v3422
  %v3424 = vpop.f32.mrb[0].mxu0
  %3425 = vmatprep.mubr.bf16.mxu0 0
  %3426 = vmatmul.mubr.bf16.gmra.mrb[0].mxu0 %v3256
  %v3427 = vpop.f32.mrb[0].mxu0
  %v3428 = vadd.f32 %v3330, %v3427
  %v3429 = vpop.f32.mrb[0].mxu0
  %v3430 = vpop.f32.mrb[0].mxu0
  %v3431 = vadd.f32 %v3335, %v3430
  %v3432 = vpop.f32.mrb[0].mxu0
  %3433 = vdwg.mxu0
  %v3434 = vadd.f32 %v3372, %v2835
  %v3435 = vadd.f32 %v3375, %v2838
  %v3436 = vadd.f32 %v3380, %v2843
  %v3437 = vadd.f32 %v3383, %v2846
  %v3438 = vadd.f32 %v3388, %v2851
  %v3439 = vadd.f32 %v3391, %v2854
  %v3440 = vadd.f32 %v3396, %v2859
  %v3441 = vadd.f32 %v3399, %v2862
  %v3442 = vadd.f32 %v3404, %v2867
  %v3443 = vadd.f32 %v3407, %v2870
  %v3444 = vadd.f32 %v3412, %v2875
  %v3445 = vadd.f32 %v3415, %v2878
  %v3446 = vadd.f32 %v3420, %v2883
  %v3447 = vadd.f32 %v3423, %v2886
  %v3448 = vadd.f32 %v3428, %v2891
  %v3449 = vadd.f32 %v3431, %v2894
  %v3450 = vmax.f32 %v3434, 0.0
  %v3451 = vmax.f32 %v3435, 0.0
  %v3452 = vmax.f32 %v3436, 0.0
  %v3453 = vmax.f32 %v3437, 0.0
  %v3454 = vmax.f32 %v3438, 0.0
  %v3455 = vmax.f32 %v3439, 0.0
  %v3456 = vmax.f32 %v3440, 0.0
  %v3457 = vmax.f32 %v3441, 0.0
  %v3458 = vmax.f32 %v3442, 0.0
  %v3459 = vmax.f32 %v3443, 0.0
  %v3460 = vmax.f32 %v3444, 0.0
  %v3461 = vmax.f32 %v3445, 0.0
  %v3462 = vmax.f32 %v3446, 0.0
  %v3463 = vmax.f32 %v3447, 0.0
  %v3464 = vmax.f32 %v3448, 0.0
  %v3465 = vmax.f32 %v3449, 0.0
  %3466 = vst [vmem:[%s67] sm:$0xff] %v3450
  %3467 = vst [vmem:[%s67 + $0x8] sm:$0xff] %v3451
  %3468 = vst [vmem:[%s67 + $0x10] sm:$0xff] %v3452
  %3469 = vst [vmem:[%s67 + $0x18] sm:$0xff] %v3453
  %3470 = vst [vmem:[%s67 + $0x20] sm:$0xff] %v3454
  %3471 = vst [vmem:[%s67 + $0x28] sm:$0xff] %v3455
  %3472 = vst [vmem:[%s67 + $0x30] sm:$0xff] %v3456
  %3473 = vst [vmem:[%s67 + $0x38] sm:$0xff] %v3457
  %3474 = vst [vmem:[%s67 + $0x40] sm:$0xff] %v3458
  %3475 = vst [vmem:[%s67 + $0x48] sm:$0xff] %v3459
  %3476 = vst [vmem:[%s67 + $0x50] sm:$0xff] %v3460
  %3477 = vst [vmem:[%s67 + $0x58] sm:$0xff] %v3461
  %3478 = vst [vmem:[%s67 + $0x60] sm:$0xff] %v3462
  %3479 = vst [vmem:[%s67 + $0x68] sm:$0xff] %v3463
  %3480 = vst [vmem:[%s67 + $0x70] sm:$0xff] %v3464
  %3481 = vst [vmem:[%s67 + $0x78] sm:$0xff] %v3465
  // Predicated region
  $region134: #{net_forward.1} parent=0 // pred_check
    _
  $region135: #{net_forward.1} parent=0 // pred_check_branch
    %3483 = sbr.rel (0) target = $region137
  $region136: #{net_forward.1} parent=0 // pred_region
    _
  $region137: #{net_forward.1} parent=0 // pred_fallthru
    _
  // Predicated region
  $region138: #{net_forward.1} parent=0 // pred_check
    _
  $region139: #{net_forward.1} parent=0 // pred_check_branch
    %3485 = sbr.rel (0) target = $region141
  $region140: #{net_forward.1} parent=0 // pred_region
    _
  $region141: #{net_forward.1} parent=0 // pred_fallthru
    _

</llo_original>
